<compile_context>
chip_gen: v7x
topology: tpu7x:2x2x1
jax: 0.10.0
libtpu: 0.0.40
codegen_flags: <defaults>
</compile_context>

<pallas_src>
import functools

import jax
import jax.numpy as jnp
import numpy as np
from jax.experimental import pallas as pl
from jax.experimental.pallas import tpu as pltpu


# ---------------------------------------------------------------------------
# Helpers
# ---------------------------------------------------------------------------
def _round_up(x, m):
    return (x + m - 1) // m * m


def _pad2(x, rows, cols):
    r, c = x.shape
    return jnp.pad(x, ((0, rows - r), (0, cols - c)))


def _vmem_budget_bytes():
    """Per-core VMEM budget with headroom for compiler-internal scratch."""
    try:
        cap = int(pltpu.get_tpu_info().vmem_capacity_bytes)
    except Exception:
        cap = 64 << 20          # conservative (v7x per-TC) fallback
    return int(min(cap - (8 << 20), 100 << 20))


def _choose_tiles(n, fout_pad, out_itemsize, budget):
    """Pick (tm, tk, n_pad): row tile, contraction tile, padded node count."""
    n128 = _round_up(max(n, 1), 128)
    tm = min(512, n128)
    if tm >= 256:
        tm = (tm // 256) * 256          # full 256-row MXU occupancy on v6e/v7x

    def footprint(tk):
        a = 2 * tm * tk * 2             # double-buffered bf16 A tile
        xw = 2 * tk * fout_pad * 2      # double-buffered bf16 XW tile
        acc = tm * fout_pad * 4         # f32 accumulator scratch
        o = 2 * tm * fout_pad * out_itemsize
        return a + xw + acc + o + (2 << 20)

    # Contraction tile: as large as the budget allows (caps padding waste
    # and keeps the per-step A DMA well above the ~0.35us step overhead).
    tk = min(_round_up(n128, tm), 8 * tm)
    while tk > tm and footprint(tk) > budget:
        tk = max(tm, ((tk // 2) // tm) * tm)
    while tk > 128 and footprint(tk) > budget:
        tk = max(128, ((tk // 2) // 128) * 128)

    n_pad = _round_up(n, max(tm, tk))   # multiple of tm, tk and 128
    return tm, tk, n_pad


# ---------------------------------------------------------------------------
# Pallas kernels
# ---------------------------------------------------------------------------
def _xw_kernel(x_ref, w_ref, o_ref):
    # XW_rows = X_rows @ W   (bf16 in, f32 MXU accumulate, bf16 out)
    o_ref[...] = jnp.dot(x_ref[...], w_ref[...],
                         preferred_element_type=jnp.float32).astype(o_ref.dtype)


def _aggregate_kernel(a_ref, xw_ref, b_ref, o_ref, acc_ref, *, apply_relu):
    # a_ref:  [TM, TK]   bf16  (row/col tile of A_hat)
    # xw_ref: [TK, Fout] bf16  (row tile of X @ W)
    # b_ref:  [1, Fout]  f32
    k = pl.program_id(1)

    @pl.when(k == 0)
    def _():
        acc_ref[...] = jnp.zeros_like(acc_ref)

    acc_ref[...] += jnp.dot(a_ref[...], xw_ref[...],
                            preferred_element_type=jnp.float32)

    @pl.when(k == pl.num_programs(1) - 1)
    def _():
        out = acc_ref[...] + b_ref[...]
        if apply_relu:
            out = jnp.maximum(out, 0.0)
        o_ref[...] = out.astype(o_ref.dtype)


# ---------------------------------------------------------------------------
# pallas_call wrappers
# ---------------------------------------------------------------------------
def _xw_matmul(x_p, w_p, tm, budget):
    n_pad, fin_pad = x_p.shape
    fout_pad = w_p.shape[1]
    foot = (2 * tm * fin_pad * 2 + 2 * fin_pad * fout_pad * 2
            + 2 * tm * fout_pad * 2 + (2 << 20))
    vmem = int(min(max(foot + (4 << 20), 16 << 20), budget))
    return pl.pallas_call(
        _xw_kernel,
        out_shape=jax.ShapeDtypeStruct((n_pad, fout_pad), jnp.bfloat16),
        grid=(n_pad // tm,),
        in_specs=[
            pl.BlockSpec((tm, fin_pad), lambda i: (i, 0)),      # X row tile
            pl.BlockSpec((fin_pad, fout_pad), lambda i: (0, 0)),  # W (resident)
        ],
        out_specs=pl.BlockSpec((tm, fout_pad), lambda i: (i, 0)),
        compiler_params=pltpu.CompilerParams(
            dimension_semantics=("parallel",),
            vmem_limit_bytes=vmem),
    )(x_p, w_p)


def _aggregate(a_p, xw_p, b_p, tm, tk, budget, *, apply_relu, out_dtype):
    n_pad = a_p.shape[0]
    fout_pad = xw_p.shape[1]
    itemsize = jnp.dtype(out_dtype).itemsize
    foot = (2 * tm * tk * 2 + 2 * tk * fout_pad * 2 + tm * fout_pad * 4
            + 2 * tm * fout_pad * itemsize + 2 * 8 * fout_pad * 4 + (2 << 20))
    vmem = int(min(max(foot + (4 << 20), 16 << 20), budget))
    kernel = functools.partial(_aggregate_kernel, apply_relu=apply_relu)
    return pl.pallas_call(
        kernel,
        out_shape=jax.ShapeDtypeStruct((n_pad, fout_pad), out_dtype),
        grid=(n_pad // tm, n_pad // tk),
        in_specs=[
            pl.BlockSpec((tm, tk), lambda i, k: (i, k)),          # A tile
            pl.BlockSpec((tk, fout_pad), lambda i, k: (k, 0)),    # XW tile
            pl.BlockSpec((1, fout_pad), lambda i, k: (0, 0)),     # bias
        ],
        out_specs=pl.BlockSpec((tm, fout_pad), lambda i, k: (i, 0)),
        scratch_shapes=[pltpu.VMEM((tm, fout_pad), jnp.float32)],
        compiler_params=pltpu.CompilerParams(
            dimension_semantics=("parallel", "arbitrary"),
            vmem_limit_bytes=vmem),
    )(a_p, xw_p, b_p)


# ---------------------------------------------------------------------------
# Encoder forward (GCNConv -> ReLU -> GCNConv[s])
# ---------------------------------------------------------------------------
@functools.partial(jax.jit, static_argnames=("model_type",))
def encoder_forward(params, a_hat, x, model_type="VGAE"):
    n, in_dim = x.shape
    hidden = params["w1"].shape[1]

    if model_type == "VGAE":
        out_dim = params["w_mu"].shape[1]
        w2 = jnp.concatenate([params["w_mu"], params["w_logvar"]], axis=1)
        b2 = jnp.concatenate([params["b_mu"], params["b_logvar"]], axis=1)
    else:  # GAE
        out_dim = params["w2"].shape[1]
        w2 = params["w2"]
        b2 = params["b2"]

    fin_pad = _round_up(in_dim, 128)
    hid_pad = _round_up(hidden, 128)
    out_pad = _round_up(w2.shape[1], 128)

    budget = _vmem_budget_bytes()
    tm, tk, n_pad = _choose_tiles(n, max(hid_pad, out_pad), 4, budget)

    a_p = _pad2(a_hat, n_pad, n_pad).astype(jnp.bfloat16)
    x_p = _pad2(x, n_pad, fin_pad).astype(jnp.bfloat16)
    w1_p = _pad2(params["w1"], fin_pad, hid_pad).astype(jnp.bfloat16)
    b1_p = _pad2(params["b1"], 1, hid_pad)                 # f32, added post-acc
    w2_p = _pad2(w2, hid_pad, out_pad).astype(jnp.bfloat16)
    b2_p = _pad2(b2, 1, out_pad)

    # Layer 1: H = relu(A @ (X @ W1) + b1)   (PyG GCNConv: linear, then propagate)
    xw1 = _xw_matmul(x_p, w1_p, tm, budget)                       # [n_pad, hid] bf16
    h = _aggregate(a_p, xw1, b1_p, tm, tk, budget,
                   apply_relu=True, out_dtype=jnp.bfloat16)       # [n_pad, hid] bf16
    # NOTE: padded rows of H equal relu(b1) (nonzero).  They never contaminate
    # real outputs because A's padded columns are zero, and padded output rows
    # are sliced off below.

    # Layer 2 (mu|logvar fused for VGAE): Z = A @ (H @ W2) + b2
    xw2 = _xw_matmul(h, w2_p, tm, budget)                         # [n_pad, out] bf16
    z = _aggregate(a_p, xw2, b2_p, tm, tk, budget,
                   apply_relu=False, out_dtype=jnp.float32)

    z = z[:n]
    if model_type == "VGAE":
        return z[:, :out_dim], z[:, out_dim:2 * out_dim]
    return z[:, :out_dim]


# ---------------------------------------------------------------------------
# Glue: dense normalized adjacency + deterministic parameter init
# ---------------------------------------------------------------------------
def build_normalized_adjacency(edge_index, num_nodes):
    """A_hat = D^-1/2 (A + I) D^-1/2 (GCNConv's gcn_norm with self-loops)."""
    # TODO(synk): PyG sums duplicate edges / handles pre-existing self-loops in
    # add_remaining_self_loops; this dedups edges and always adds I.
    src, dst = edge_index
    adj = jnp.zeros((num_nodes, num_nodes), jnp.float32)
    adj = adj.at[src, dst].set(1.0)
    adj = adj + jnp.eye(num_nodes, dtype=jnp.float32)
    deg = jnp.sum(adj, axis=1)
    d_inv_sqrt = jnp.where(deg > 0, 1.0 / jnp.sqrt(deg), 0.0)
    return adj * d_inv_sqrt[:, None] * d_inv_sqrt[None, :]


def init_params(key, input_dim, output_dim, model_type):
    hidden = 2 * output_dim
    k1, k2, k3 = jax.random.split(key, 3)

    def glorot(k, fan_in, fan_out):
        lim = jnp.sqrt(6.0 / (fan_in + fan_out))
        return jax.random.uniform(k, (fan_in, fan_out), jnp.float32, -lim, lim)

    params = {
        "w1": glorot(k1, input_dim, hidden),
        "b1": jnp.zeros((1, hidden), jnp.float32),
    }
    if model_type == "GAE":
        params["w2"] = glorot(k2, hidden, output_dim)
        params["b2"] = jnp.zeros((1, output_dim), jnp.float32)
    else:  # VGAE
        params["w_mu"] = glorot(k2, hidden, output_dim)
        params["b_mu"] = jnp.zeros((1, output_dim), jnp.float32)
        params["w_logvar"] = glorot(k3, hidden, output_dim)
        params["b_logvar"] = jnp.zeros((1, output_dim), jnp.float32)
    return params


# Pure-JAX reference mirroring the kernel's A@(X@W) ordering and bf16 carries.
def _reference(params, a_hat, x, model_type):
    f32, bf = jnp.float32, jnp.bfloat16
    ab = a_hat.astype(bf).astype(f32)

    def gcn(h, w, b, relu):
        xw = (h.astype(bf).astype(f32) @ w.astype(bf).astype(f32)).astype(bf).astype(f32)
        out = ab @ xw + b
        return jnp.maximum(out, 0.0) if relu else out

    h = gcn(x, params["w1"], params["b1"], True)
    if model_type == "GAE":
        return gcn(h, params["w2"], params["b2"], False)
    mu = gcn(h, params["w_mu"], params["b_mu"], False)
    lv = gcn(h, params["w_logvar"], params["b_logvar"], False)
    return mu, lv


# ---------------------------------------------------------------------------
# Main
# ---------------------------------------------------------------------------
if __name__ == "__main__":
    key = jax.random.PRNGKey(0)
    k_x, k_e, k_p = jax.random.split(key, 3)

    num_nodes = 512
    input_dim = 32
    output_dim = 16           # hidden = 2 * output_dim = 32
    num_edges = 2048

    x = jax.random.normal(k_x, (num_nodes, input_dim), jnp.float32)
    edge_index = jax.random.randint(k_e, (2, num_edges), 0, num_nodes)
    a_hat = build_normalized_adjacency(edge_index, num_nodes)

    # --- VGAE encoder ---
    params_vgae = init_params(k_p, input_dim, output_dim, "VGAE")
    mu, logvar = encoder_forward(params_vgae, a_hat, x, model_type="VGAE")
    jax.block_until_ready((mu, logvar))
    mu_ref, lv_ref = _reference(params_vgae, a_hat, x, "VGAE")
    np.testing.assert_allclose(np.asarray(mu), np.asarray(mu_ref),
                               rtol=2e-3, atol=2e-3)
    np.testing.assert_allclose(np.asarray(logvar), np.asarray(lv_ref),
                               rtol=2e-3, atol=2e-3)

    # --- GAE encoder ---
    params_gae = init_params(k_p, input_dim, output_dim, "GAE")
    z = encoder_forward(params_gae, a_hat, x, model_type="GAE")
    jax.block_until_ready(z)
    z_ref = _reference(params_gae, a_hat, x, "GAE")
    np.testing.assert_allclose(np.asarray(z), np.asarray(z_ref),
                               rtol=2e-3, atol=2e-3)

    print("KERNEL_OK")
</pallas_src>

<mosaic_0001>
module attributes {stable_mosaic.version = 11 : i64} {
  func.func @_xw_kernel(%arg0: i32, %arg1: memref<512x128xbf16, #tpu.memory_space<vmem>>, %arg2: memref<128x128xbf16, #tpu.memory_space<vmem>>, %arg3: memref<512x128xbf16, #tpu.memory_space<vmem>>) attributes {dimension_semantics = [#tpu.dimension_semantics<parallel>], iteration_bounds = array<i64: 1>, scalar_prefetch = 0 : i64, scratch_operands = 0 : i64, tpu.core_type = #tpu.core_type<tc>, window_params = [{transform_indices = @transform_0, window_bounds = array<i64: 512, 128>}, {pipeline_mode = #tpu.pipeline_mode<synchronous>, transform_indices = @transform_1, window_bounds = array<i64: 128, 128>}, {transform_indices = @transform_2, window_bounds = array<i64: 512, 128>}]} {
    %c0 = arith.constant 0 : index
    %c0_0 = arith.constant 0 : index
    %0 = vector.load %arg1[%c0, %c0_0] : memref<512x128xbf16, #tpu.memory_space<vmem>>, vector<512x128xbf16>
    %c0_1 = arith.constant 0 : index
    %c0_2 = arith.constant 0 : index
    %1 = vector.load %arg2[%c0_1, %c0_2] : memref<128x128xbf16, #tpu.memory_space<vmem>>, vector<128x128xbf16>
    %cst = arith.constant dense<0.000000e+00> : vector<512x128xf32>
    %2 = tpu.matmul %0, %1, %cst {dimension_numbers = #tpu.dot_dimension_numbers<[1], [0], [0], [1], [0, 0, 1, 1], [], []>} : vector<512x128xbf16>, vector<128x128xbf16>, vector<512x128xf32> -> vector<512x128xf32>
    %3 = arith.truncf %2 : vector<512x128xf32> to vector<512x128xbf16>
    %c0_3 = arith.constant 0 : index
    %c0_4 = arith.constant 0 : index
    %4 = vector.load %arg3[%c0_3, %c0_4] : memref<512x128xbf16, #tpu.memory_space<vmem>>, vector<512x128xbf16>
    tpu.vector_store %arg3[%c0_3, %c0_4], %3 {strides = array<i32>} : memref<512x128xbf16, #tpu.memory_space<vmem>>, vector<512x128xbf16>,
    return
  }
  func.func @transform_0(%arg0: i32) -> (i32, i32) {
    %c0_i32 = arith.constant 0 : i32
    %c0_i32_0 = arith.constant 0 : i32
    return %arg0, %c0_i32 : i32, i32
  }
  func.func @transform_1(%arg0: i32) -> (i32, i32) {
    %c0_i32 = arith.constant 0 : i32
    %c0_i32_0 = arith.constant 0 : i32
    %c0_i32_1 = arith.constant 0 : i32
    return %c0_i32, %c0_i32_0 : i32, i32
  }
  func.func @transform_2(%arg0: i32) -> (i32, i32) {
    %c0_i32 = arith.constant 0 : i32
    %c0_i32_0 = arith.constant 0 : i32
    return %arg0, %c0_i32 : i32, i32
  }
}

module attributes {stable_mosaic.version = 11 : i64} {
  func.func @_aggregate_kernel(%arg0: i32, %arg1: i32, %arg2: memref<512x512xbf16, #tpu.memory_space<vmem>>, %arg3: memref<512x128xbf16, #tpu.memory_space<vmem>>, %arg4: memref<1x128xf32, #tpu.memory_space<vmem>>, %arg5: memref<512x128xbf16, #tpu.memory_space<vmem>>, %arg6: memref<512x128xf32, #tpu.memory_space<vmem>>) attributes {dimension_semantics = [#tpu.dimension_semantics<parallel>, #tpu.dimension_semantics<arbitrary>], iteration_bounds = array<i64: 1, 1>, scalar_prefetch = 0 : i64, scratch_operands = 1 : i64, tpu.core_type = #tpu.core_type<tc>, window_params = [{transform_indices = @transform_0, window_bounds = array<i64: 512, 512>}, {transform_indices = @transform_1, window_bounds = array<i64: 512, 128>}, {pipeline_mode = #tpu.pipeline_mode<synchronous>, transform_indices = @transform_2, window_bounds = array<i64: 1, 128>}, {transform_indices = @transform_3, window_bounds = array<i64: 512, 128>}]} {
    %c0_i32 = arith.constant 0 : i32
    %0 = arith.cmpi eq, %arg1, %c0_i32 : i32
    %1 = arith.extui %0 : i1 to i32
    %c0_i32_0 = arith.constant 0 : i32
    %2 = arith.cmpi ne, %1, %c0_i32_0 : i32
    scf.if %2 {
      %cst_10 = arith.constant 0.000000e+00 : f32
      %12 = vector.broadcast %cst_10 : f32 to vector<512x128xf32>
      %c0_11 = arith.constant 0 : index
      %c0_12 = arith.constant 0 : index
      %13 = vector.load %arg6[%c0_11, %c0_12] : memref<512x128xf32, #tpu.memory_space<vmem>>, vector<512x128xf32>
      tpu.vector_store %arg6[%c0_11, %c0_12], %12 {strides = array<i32>} : memref<512x128xf32, #tpu.memory_space<vmem>>, vector<512x128xf32>,
    } else {
    }
    %c0 = arith.constant 0 : index
    %c0_1 = arith.constant 0 : index
    %3 = vector.load %arg6[%c0, %c0_1] : memref<512x128xf32, #tpu.memory_space<vmem>>, vector<512x128xf32>
    %c0_2 = arith.constant 0 : index
    %c0_3 = arith.constant 0 : index
    %4 = vector.load %arg2[%c0_2, %c0_3] : memref<512x512xbf16, #tpu.memory_space<vmem>>, vector<512x512xbf16>
    %c0_4 = arith.constant 0 : index
    %c0_5 = arith.constant 0 : index
    %5 = vector.load %arg3[%c0_4, %c0_5] : memref<512x128xbf16, #tpu.memory_space<vmem>>, vector<512x128xbf16>
    %cst = arith.constant dense<0.000000e+00> : vector<512x128xf32>
    %6 = tpu.matmul %4, %5, %cst {dimension_numbers = #tpu.dot_dimension_numbers<[1], [0], [0], [1], [0, 0, 1, 1], [], []>} : vector<512x512xbf16>, vector<512x128xbf16>, vector<512x128xf32> -> vector<512x128xf32>
    %7 = arith.addf %3, %6 : vector<512x128xf32>
    %c0_6 = arith.constant 0 : index
    %c0_7 = arith.constant 0 : index
    %8 = vector.load %arg6[%c0_6, %c0_7] : memref<512x128xf32, #tpu.memory_space<vmem>>, vector<512x128xf32>
    tpu.vector_store %arg6[%c0_6, %c0_7], %7 {strides = array<i32>} : memref<512x128xf32, #tpu.memory_space<vmem>>, vector<512x128xf32>,
    %c0_i32_8 = arith.constant 0 : i32
    %9 = arith.cmpi eq, %arg1, %c0_i32_8 : i32
    %10 = arith.extui %9 : i1 to i32
    %c0_i32_9 = arith.constant 0 : i32
    %11 = arith.cmpi ne, %10, %c0_i32_9 : i32
    scf.if %11 {
      %c0_10 = arith.constant 0 : index
      %c0_11 = arith.constant 0 : index
      %12 = vector.load %arg6[%c0_10, %c0_11] : memref<512x128xf32, #tpu.memory_space<vmem>>, vector<512x128xf32>
      %c0_12 = arith.constant 0 : index
      %c0_13 = arith.constant 0 : index
      %13 = vector.load %arg4[%c0_12, %c0_13] : memref<1x128xf32, #tpu.memory_space<vmem>>, vector<1x128xf32>
      %14 = vector.broadcast %13 : vector<1x128xf32> to vector<512x128xf32>
      %15 = arith.addf %12, %14 : vector<512x128xf32>
      %cst_14 = arith.constant 0.000000e+00 : f32
      %16 = vector.broadcast %cst_14 : f32 to vector<512x128xf32>
      %17 = arith.maximumf %15, %16 : vector<512x128xf32>
      %18 = arith.truncf %17 : vector<512x128xf32> to vector<512x128xbf16>
      %c0_15 = arith.constant 0 : index
      %c0_16 = arith.constant 0 : index
      %19 = vector.load %arg5[%c0_15, %c0_16] : memref<512x128xbf16, #tpu.memory_space<vmem>>, vector<512x128xbf16>
      tpu.vector_store %arg5[%c0_15, %c0_16], %18 {strides = array<i32>} : memref<512x128xbf16, #tpu.memory_space<vmem>>, vector<512x128xbf16>,
    } else {
    }
    return
  }
  func.func @transform_0(%arg0: i32, %arg1: i32) -> (i32, i32) {
    %c0_i32 = arith.constant 0 : i32
    return %arg0, %arg1 : i32, i32
  }
  func.func @transform_1(%arg0: i32, %arg1: i32) -> (i32, i32) {
    %c0_i32 = arith.constant 0 : i32
    %c0_i32_0 = arith.constant 0 : i32
    return %arg1, %c0_i32 : i32, i32
  }
  func.func @transform_2(%arg0: i32, %arg1: i32) -> (i32, i32) {
    %c0_i32 = arith.constant 0 : i32
    %c0_i32_0 = arith.constant 0 : i32
    %c0_i32_1 = arith.constant 0 : i32
    return %c0_i32, %c0_i32_0 : i32, i32
  }
  func.func @transform_3(%arg0: i32, %arg1: i32) -> (i32, i32) {
    %c0_i32 = arith.constant 0 : i32
    %c0_i32_0 = arith.constant 0 : i32
    return %arg0, %c0_i32 : i32, i32
  }
}

module attributes {stable_mosaic.version = 11 : i64} {
  func.func @_aggregate_kernel(%arg0: i32, %arg1: i32, %arg2: memref<512x512xbf16, #tpu.memory_space<vmem>>, %arg3: memref<512x128xbf16, #tpu.memory_space<vmem>>, %arg4: memref<1x128xf32, #tpu.memory_space<vmem>>, %arg5: memref<512x128xf32, #tpu.memory_space<vmem>>, %arg6: memref<512x128xf32, #tpu.memory_space<vmem>>) attributes {dimension_semantics = [#tpu.dimension_semantics<parallel>, #tpu.dimension_semantics<arbitrary>], iteration_bounds = array<i64: 1, 1>, scalar_prefetch = 0 : i64, scratch_operands = 1 : i64, tpu.core_type = #tpu.core_type<tc>, window_params = [{transform_indices = @transform_0, window_bounds = array<i64: 512, 512>}, {transform_indices = @transform_1, window_bounds = array<i64: 512, 128>}, {pipeline_mode = #tpu.pipeline_mode<synchronous>, transform_indices = @transform_2, window_bounds = array<i64: 1, 128>}, {transform_indices = @transform_3, window_bounds = array<i64: 512, 128>}]} {
    %c0_i32 = arith.constant 0 : i32
    %0 = arith.cmpi eq, %arg1, %c0_i32 : i32
    %1 = arith.extui %0 : i1 to i32
    %c0_i32_0 = arith.constant 0 : i32
    %2 = arith.cmpi ne, %1, %c0_i32_0 : i32
    scf.if %2 {
      %cst_10 = arith.constant 0.000000e+00 : f32
      %12 = vector.broadcast %cst_10 : f32 to vector<512x128xf32>
      %c0_11 = arith.constant 0 : index
      %c0_12 = arith.constant 0 : index
      %13 = vector.load %arg6[%c0_11, %c0_12] : memref<512x128xf32, #tpu.memory_space<vmem>>, vector<512x128xf32>
      tpu.vector_store %arg6[%c0_11, %c0_12], %12 {strides = array<i32>} : memref<512x128xf32, #tpu.memory_space<vmem>>, vector<512x128xf32>,
    } else {
    }
    %c0 = arith.constant 0 : index
    %c0_1 = arith.constant 0 : index
    %3 = vector.load %arg6[%c0, %c0_1] : memref<512x128xf32, #tpu.memory_space<vmem>>, vector<512x128xf32>
    %c0_2 = arith.constant 0 : index
    %c0_3 = arith.constant 0 : index
    %4 = vector.load %arg2[%c0_2, %c0_3] : memref<512x512xbf16, #tpu.memory_space<vmem>>, vector<512x512xbf16>
    %c0_4 = arith.constant 0 : index
    %c0_5 = arith.constant 0 : index
    %5 = vector.load %arg3[%c0_4, %c0_5] : memref<512x128xbf16, #tpu.memory_space<vmem>>, vector<512x128xbf16>
    %cst = arith.constant dense<0.000000e+00> : vector<512x128xf32>
    %6 = tpu.matmul %4, %5, %cst {dimension_numbers = #tpu.dot_dimension_numbers<[1], [0], [0], [1], [0, 0, 1, 1], [], []>} : vector<512x512xbf16>, vector<512x128xbf16>, vector<512x128xf32> -> vector<512x128xf32>
    %7 = arith.addf %3, %6 : vector<512x128xf32>
    %c0_6 = arith.constant 0 : index
    %c0_7 = arith.constant 0 : index
    %8 = vector.load %arg6[%c0_6, %c0_7] : memref<512x128xf32, #tpu.memory_space<vmem>>, vector<512x128xf32>
    tpu.vector_store %arg6[%c0_6, %c0_7], %7 {strides = array<i32>} : memref<512x128xf32, #tpu.memory_space<vmem>>, vector<512x128xf32>,
    %c0_i32_8 = arith.constant 0 : i32
    %9 = arith.cmpi eq, %arg1, %c0_i32_8 : i32
    %10 = arith.extui %9 : i1 to i32
    %c0_i32_9 = arith.constant 0 : i32
    %11 = arith.cmpi ne, %10, %c0_i32_9 : i32
    scf.if %11 {
      %c0_10 = arith.constant 0 : index
      %c0_11 = arith.constant 0 : index
      %12 = vector.load %arg6[%c0_10, %c0_11] : memref<512x128xf32, #tpu.memory_space<vmem>>, vector<512x128xf32>
      %c0_12 = arith.constant 0 : index
      %c0_13 = arith.constant 0 : index
      %13 = vector.load %arg4[%c0_12, %c0_13] : memref<1x128xf32, #tpu.memory_space<vmem>>, vector<1x128xf32>
      %14 = vector.broadcast %13 : vector<1x128xf32> to vector<512x128xf32>
      %15 = arith.addf %12, %14 : vector<512x128xf32>
      %c0_14 = arith.constant 0 : index
      %c0_15 = arith.constant 0 : index
      %16 = vector.load %arg5[%c0_14, %c0_15] : memref<512x128xf32, #tpu.memory_space<vmem>>, vector<512x128xf32>
      tpu.vector_store %arg5[%c0_14, %c0_15], %15 {strides = array<i32>} : memref<512x128xf32, #tpu.memory_space<vmem>>, vector<512x128xf32>,
    } else {
    }
    return
  }
  func.func @transform_0(%arg0: i32, %arg1: i32) -> (i32, i32) {
    %c0_i32 = arith.constant 0 : i32
    return %arg0, %arg1 : i32, i32
  }
  func.func @transform_1(%arg0: i32, %arg1: i32) -> (i32, i32) {
    %c0_i32 = arith.constant 0 : i32
    %c0_i32_0 = arith.constant 0 : i32
    return %arg1, %c0_i32 : i32, i32
  }
  func.func @transform_2(%arg0: i32, %arg1: i32) -> (i32, i32) {
    %c0_i32 = arith.constant 0 : i32
    %c0_i32_0 = arith.constant 0 : i32
    %c0_i32_1 = arith.constant 0 : i32
    return %c0_i32, %c0_i32_0 : i32, i32
  }
  func.func @transform_3(%arg0: i32, %arg1: i32) -> (i32, i32) {
    %c0_i32 = arith.constant 0 : i32
    %c0_i32_0 = arith.constant 0 : i32
    return %arg0, %c0_i32 : i32, i32
  }
}

</mosaic_0001>

<llo_original>
// kernel: encoder_forward.4
$region0: #{encoder_forward.4}
  #allocation0 [shape = 'u32[]', space=smem, size = 0x4, offset = 0x4, fixed_abs, tag = 'smem constant byte address 0x4 - core index']
  #allocation1 [shape = 'u32[144,128]{1,0:T(1,128)}', space=vmem, size = 0x12000, scoped, tag = 'internal scratch']
  %s0 = inlined_call_operand.vmem [shape: bf16[512,128], index: 0, kind: input, shape index: {}]
  %s1 = inlined_call_operand.vmem [shape: bf16[128,128], index: 1, kind: input, shape index: {}]
  %s2 = inlined_call_operand.vmem [shape: bf16[512,128], index: 2, kind: output, shape index: {}]
  %s3 = sld [smem:[#allocation0]]
  $region18: #{encoder_forward.4} parent=0
    _
  %s5 = ssub.s32 1, %s3
  %s6 = scalar_select 0, %s5, %s3
  // Predicated region
  $region2: #{encoder_forward.4} parent=0 // pred_check
    _
  $region3: #{encoder_forward.4} parent=0 // pred_check_branch
    %8 = sbr.rel (0) target = $region5
  $region4: #{encoder_forward.4} parent=0 // pred_region
    _
  $region5: #{encoder_forward.4} parent=0 // pred_fallthru
    _
  // Predicated region
  $region6: #{encoder_forward.4} parent=0 // pred_check
    _
  $region7: #{encoder_forward.4} parent=0 // pred_check_branch
    %10 = sbr.rel (0) target = $region9
  $region8: #{encoder_forward.4} parent=0 // pred_region
    _
  $region9: #{encoder_forward.4} parent=0 // pred_fallthru
    _
  %v12 = vld [vmem:[%s0] sm:$0xf]
  %v13 = vld [vmem:[%s0 + $0x4] sm:$0xf]
  %v14 = vld [vmem:[%s0 + $0x8] sm:$0xf]
  %v15 = vld [vmem:[%s0 + $0xc] sm:$0xf]
  %v16 = vld [vmem:[%s0 + $0x10] sm:$0xf]
  %v17 = vld [vmem:[%s0 + $0x14] sm:$0xf]
  %v18 = vld [vmem:[%s0 + $0x18] sm:$0xf]
  %v19 = vld [vmem:[%s0 + $0x1c] sm:$0xf]
  %v20 = vld [vmem:[%s0 + $0x20] sm:$0xf]
  %v21 = vld [vmem:[%s0 + $0x24] sm:$0xf]
  %v22 = vld [vmem:[%s0 + $0x28] sm:$0xf]
  %v23 = vld [vmem:[%s0 + $0x2c] sm:$0xf]
  %v24 = vld [vmem:[%s0 + $0x30] sm:$0xf]
  %v25 = vld [vmem:[%s0 + $0x34] sm:$0xf]
  %v26 = vld [vmem:[%s0 + $0x38] sm:$0xf]
  %v27 = vld [vmem:[%s0 + $0x3c] sm:$0xf]
  %v28 = vld [vmem:[%s0 + $0x40] sm:$0xf]
  %v29 = vld [vmem:[%s0 + $0x44] sm:$0xf]
  %v30 = vld [vmem:[%s0 + $0x48] sm:$0xf]
  %v31 = vld [vmem:[%s0 + $0x4c] sm:$0xf]
  %v32 = vld [vmem:[%s0 + $0x50] sm:$0xf]
  %v33 = vld [vmem:[%s0 + $0x54] sm:$0xf]
  %v34 = vld [vmem:[%s0 + $0x58] sm:$0xf]
  %v35 = vld [vmem:[%s0 + $0x5c] sm:$0xf]
  %v36 = vld [vmem:[%s0 + $0x60] sm:$0xf]
  %v37 = vld [vmem:[%s0 + $0x64] sm:$0xf]
  %v38 = vld [vmem:[%s0 + $0x68] sm:$0xf]
  %v39 = vld [vmem:[%s0 + $0x6c] sm:$0xf]
  %v40 = vld [vmem:[%s0 + $0x70] sm:$0xf]
  %v41 = vld [vmem:[%s0 + $0x74] sm:$0xf]
  %v42 = vld [vmem:[%s0 + $0x78] sm:$0xf]
  %v43 = vld [vmem:[%s0 + $0x7c] sm:$0xf]
  %v44 = vld [vmem:[%s0 + $0x80] sm:$0xf]
  %v45 = vld [vmem:[%s0 + $0x84] sm:$0xf]
  %v46 = vld [vmem:[%s0 + $0x88] sm:$0xf]
  %v47 = vld [vmem:[%s0 + $0x8c] sm:$0xf]
  %v48 = vld [vmem:[%s0 + $0x90] sm:$0xf]
  %v49 = vld [vmem:[%s0 + $0x94] sm:$0xf]
  %v50 = vld [vmem:[%s0 + $0x98] sm:$0xf]
  %v51 = vld [vmem:[%s0 + $0x9c] sm:$0xf]
  %v52 = vld [vmem:[%s0 + $0xa0] sm:$0xf]
  %v53 = vld [vmem:[%s0 + $0xa4] sm:$0xf]
  %v54 = vld [vmem:[%s0 + $0xa8] sm:$0xf]
  %v55 = vld [vmem:[%s0 + $0xac] sm:$0xf]
  %v56 = vld [vmem:[%s0 + $0xb0] sm:$0xf]
  %v57 = vld [vmem:[%s0 + $0xb4] sm:$0xf]
  %v58 = vld [vmem:[%s0 + $0xb8] sm:$0xf]
  %v59 = vld [vmem:[%s0 + $0xbc] sm:$0xf]
  %v60 = vld [vmem:[%s0 + $0xc0] sm:$0xf]
  %v61 = vld [vmem:[%s0 + $0xc4] sm:$0xf]
  %v62 = vld [vmem:[%s0 + $0xc8] sm:$0xf]
  %v63 = vld [vmem:[%s0 + $0xcc] sm:$0xf]
  %v64 = vld [vmem:[%s0 + $0xd0] sm:$0xf]
  %v65 = vld [vmem:[%s0 + $0xd4] sm:$0xf]
  %v66 = vld [vmem:[%s0 + $0xd8] sm:$0xf]
  %v67 = vld [vmem:[%s0 + $0xdc] sm:$0xf]
  %v68 = vld [vmem:[%s0 + $0xe0] sm:$0xf]
  %v69 = vld [vmem:[%s0 + $0xe4] sm:$0xf]
  %v70 = vld [vmem:[%s0 + $0xe8] sm:$0xf]
  %v71 = vld [vmem:[%s0 + $0xec] sm:$0xf]
  %v72 = vld [vmem:[%s0 + $0xf0] sm:$0xf]
  %v73 = vld [vmem:[%s0 + $0xf4] sm:$0xf]
  %v74 = vld [vmem:[%s0 + $0xf8] sm:$0xf]
  %v75 = vld [vmem:[%s0 + $0xfc] sm:$0xf]
  %v76 = vld [vmem:[%s1] sm:$0xf]
  %v77 = vld [vmem:[%s1 + $0x4] sm:$0xf]
  %v78 = vld [vmem:[%s1 + $0x8] sm:$0xf]
  %v79 = vld [vmem:[%s1 + $0xc] sm:$0xf]
  %v80 = vld [vmem:[%s1 + $0x10] sm:$0xf]
  %v81 = vld [vmem:[%s1 + $0x14] sm:$0xf]
  %v82 = vld [vmem:[%s1 + $0x18] sm:$0xf]
  %v83 = vld [vmem:[%s1 + $0x1c] sm:$0xf]
  %v84 = vld [vmem:[%s1 + $0x20] sm:$0xf]
  %v85 = vld [vmem:[%s1 + $0x24] sm:$0xf]
  %v86 = vld [vmem:[%s1 + $0x28] sm:$0xf]
  %v87 = vld [vmem:[%s1 + $0x2c] sm:$0xf]
  %v88 = vld [vmem:[%s1 + $0x30] sm:$0xf]
  %v89 = vld [vmem:[%s1 + $0x34] sm:$0xf]
  %v90 = vld [vmem:[%s1 + $0x38] sm:$0xf]
  %v91 = vld [vmem:[%s1 + $0x3c] sm:$0xf]
  %v156 = vunpack.c.l.b16 %v12
  %v157 = vunpack.c.l.b16 %v13
  %v158 = vunpack.c.l.b16 %v14
  %v159 = vunpack.c.l.b16 %v15
  %v160 = vunpack.c.l.b16 %v16
  %v161 = vunpack.c.l.b16 %v17
  %v162 = vunpack.c.l.b16 %v18
  %v163 = vunpack.c.l.b16 %v19
  %v164 = vunpack.c.l.b16 %v20
  %v165 = vunpack.c.l.b16 %v21
  %v166 = vunpack.c.l.b16 %v22
  %v167 = vunpack.c.l.b16 %v23
  %v168 = vunpack.c.l.b16 %v24
  %v169 = vunpack.c.l.b16 %v25
  %v170 = vunpack.c.l.b16 %v26
  %v171 = vunpack.c.l.b16 %v27
  %v172 = vunpack.c.l.b16 %v28
  %v173 = vunpack.c.l.b16 %v29
  %v174 = vunpack.c.l.b16 %v30
  %v175 = vunpack.c.l.b16 %v31
  %v176 = vunpack.c.l.b16 %v32
  %v177 = vunpack.c.l.b16 %v33
  %v178 = vunpack.c.l.b16 %v34
  %v179 = vunpack.c.l.b16 %v35
  %v180 = vunpack.c.l.b16 %v36
  %v181 = vunpack.c.l.b16 %v37
  %v182 = vunpack.c.l.b16 %v38
  %v183 = vunpack.c.l.b16 %v39
  %v184 = vunpack.c.l.b16 %v40
  %v185 = vunpack.c.l.b16 %v41
  %v186 = vunpack.c.l.b16 %v42
  %v187 = vunpack.c.l.b16 %v43
  %v188 = vunpack.c.l.b16 %v44
  %v189 = vunpack.c.l.b16 %v45
  %v190 = vunpack.c.l.b16 %v46
  %v191 = vunpack.c.l.b16 %v47
  %v192 = vunpack.c.l.b16 %v48
  %v193 = vunpack.c.l.b16 %v49
  %v194 = vunpack.c.l.b16 %v50
  %v195 = vunpack.c.l.b16 %v51
  %v196 = vunpack.c.l.b16 %v52
  %v197 = vunpack.c.l.b16 %v53
  %v198 = vunpack.c.l.b16 %v54
  %v199 = vunpack.c.l.b16 %v55
  %v200 = vunpack.c.l.b16 %v56
  %v201 = vunpack.c.l.b16 %v57
  %v202 = vunpack.c.l.b16 %v58
  %v203 = vunpack.c.l.b16 %v59
  %v204 = vunpack.c.l.b16 %v60
  %v205 = vunpack.c.l.b16 %v61
  %v206 = vunpack.c.l.b16 %v62
  %v207 = vunpack.c.l.b16 %v63
  %v208 = vunpack.c.l.b16 %v64
  %v209 = vunpack.c.l.b16 %v65
  %v210 = vunpack.c.l.b16 %v66
  %v211 = vunpack.c.l.b16 %v67
  %v212 = vunpack.c.l.b16 %v68
  %v213 = vunpack.c.l.b16 %v69
  %v214 = vunpack.c.l.b16 %v70
  %v215 = vunpack.c.l.b16 %v71
  %v216 = vunpack.c.l.b16 %v72
  %v217 = vunpack.c.l.b16 %v73
  %v218 = vunpack.c.l.b16 %v74
  %v219 = vunpack.c.l.b16 %v75
  %v220 = vpack.c.b16 %v157, %v156
  %v221 = vpack.c.b16 %v159, %v158
  %v222 = vpack.c.b16 %v161, %v160
  %v223 = vpack.c.b16 %v163, %v162
  %v224 = vpack.c.b16 %v165, %v164
  %v225 = vpack.c.b16 %v167, %v166
  %v226 = vpack.c.b16 %v169, %v168
  %v227 = vpack.c.b16 %v171, %v170
  %v228 = vpack.c.b16 %v173, %v172
  %v229 = vpack.c.b16 %v175, %v174
  %v230 = vpack.c.b16 %v177, %v176
  %v231 = vpack.c.b16 %v179, %v178
  %v232 = vpack.c.b16 %v181, %v180
  %v233 = vpack.c.b16 %v183, %v182
  %v234 = vpack.c.b16 %v185, %v184
  %v235 = vpack.c.b16 %v187, %v186
  %v236 = vpack.c.b16 %v189, %v188
  %v237 = vpack.c.b16 %v191, %v190
  %v238 = vpack.c.b16 %v193, %v192
  %v239 = vpack.c.b16 %v195, %v194
  %v240 = vpack.c.b16 %v197, %v196
  %v241 = vpack.c.b16 %v199, %v198
  %v242 = vpack.c.b16 %v201, %v200
  %v243 = vpack.c.b16 %v203, %v202
  %v244 = vpack.c.b16 %v205, %v204
  %v245 = vpack.c.b16 %v207, %v206
  %v246 = vpack.c.b16 %v209, %v208
  %v247 = vpack.c.b16 %v211, %v210
  %v248 = vpack.c.b16 %v213, %v212
  %v249 = vpack.c.b16 %v215, %v214
  %v250 = vpack.c.b16 %v217, %v216
  %v251 = vpack.c.b16 %v219, %v218
  %v300 = vunpack.c.l.b16 %v76
  %v301 = vunpack.c.l.b16 %v77
  %v302 = vunpack.c.l.b16 %v78
  %v303 = vunpack.c.l.b16 %v79
  %v304 = vunpack.c.l.b16 %v80
  %v305 = vunpack.c.l.b16 %v81
  %v306 = vunpack.c.l.b16 %v82
  %v307 = vunpack.c.l.b16 %v83
  %v308 = vunpack.c.l.b16 %v84
  %v309 = vunpack.c.l.b16 %v85
  %v310 = vunpack.c.l.b16 %v86
  %v311 = vunpack.c.l.b16 %v87
  %v312 = vunpack.c.l.b16 %v88
  %v313 = vunpack.c.l.b16 %v89
  %v314 = vunpack.c.l.b16 %v90
  %v315 = vunpack.c.l.b16 %v91
  %v316 = vpack.c.b16 %v301, %v300
  %v317 = vpack.c.b16 %v303, %v302
  %v318 = vpack.c.b16 %v305, %v304
  %v319 = vpack.c.b16 %v307, %v306
  %v320 = vpack.c.b16 %v309, %v308
  %v321 = vpack.c.b16 %v311, %v310
  %v322 = vpack.c.b16 %v313, %v312
  %v323 = vpack.c.b16 %v315, %v314
  %332 = vmatprep.subr.bf16.mxu0 0
  %333 = vmatpush1.bf16.msra.mxu0 %v316
  %334 = vmatprep.subr.bf16.mxu0 0
  %335 = vmatpush1.bf16.msra.mxu0 %v317
  %336 = vmatprep.subr.bf16.mxu0 0
  %337 = vmatpush1.bf16.msra.mxu0 %v318
  %338 = vmatprep.subr.bf16.mxu0 0
  %339 = vmatpush1.bf16.msra.mxu0 %v319
  %340 = vmatprep.subr.bf16.mxu0 0
  %341 = vmatpush1.bf16.msra.mxu0 %v320
  %342 = vmatprep.subr.bf16.mxu0 0
  %343 = vmatpush1.bf16.msra.mxu0 %v321
  %344 = vmatprep.subr.bf16.mxu0 0
  %345 = vmatpush1.bf16.msra.mxu0 %v322
  %346 = vmatprep.subr.bf16.mxu0 0
  %347 = vmatpush1.bf16.msra.mxu0 %v323
  %348 = vmatprep.subr.bf16.mxu0 0
  %349 = vmatpush1.bf16.msra.mxu0 0
  %350 = vmatprep.subr.bf16.mxu0 0
  %351 = vmatpush1.bf16.msra.mxu0 0
  %352 = vmatprep.subr.bf16.mxu0 0
  %353 = vmatpush1.bf16.msra.mxu0 0
  %354 = vmatprep.subr.bf16.mxu0 0
  %355 = vmatpush1.bf16.msra.mxu0 0
  %356 = vmatprep.subr.bf16.mxu0 0
  %357 = vmatpush1.bf16.msra.mxu0 0
  %358 = vmatprep.subr.bf16.mxu0 0
  %359 = vmatpush1.bf16.msra.mxu0 0
  %360 = vmatprep.subr.bf16.mxu0 0
  %361 = vmatpush1.bf16.msra.mxu0 0
  %362 = vmatprep.subr.bf16.mxu0 0
  %363 = vmatpush1.bf16.msra.mxu0 0
  %364 = vmatprep.mubr.bf16.mxu0 0
  %365 = vmatmul.mubr.bf16.gmra.mrb[0].mxu0 %v220
  %v366 = vpop.f32.mrb[0].mxu0
  %v367 = vadd.f32 0.0, %v366
  %v368 = vpop.f32.mrb[0].mxu0
  %v369 = vpop.f32.mrb[0].mxu0
  %v370 = vadd.f32 0.0, %v369
  %v371 = vpop.f32.mrb[0].mxu0
  %372 = vmatprep.mubr.bf16.mxu0 0
  %373 = vmatmul.mubr.bf16.gmra.mrb[0].mxu0 %v221
  %v374 = vpop.f32.mrb[0].mxu0
  %v375 = vadd.f32 0.0, %v374
  %v376 = vpop.f32.mrb[0].mxu0
  %v377 = vpop.f32.mrb[0].mxu0
  %v378 = vadd.f32 0.0, %v377
  %v379 = vpop.f32.mrb[0].mxu0
  %380 = vmatprep.mubr.bf16.mxu0 0
  %381 = vmatmul.mubr.bf16.gmra.mrb[0].mxu0 %v222
  %v382 = vpop.f32.mrb[0].mxu0
  %v383 = vadd.f32 0.0, %v382
  %v384 = vpop.f32.mrb[0].mxu0
  %v385 = vpop.f32.mrb[0].mxu0
  %v386 = vadd.f32 0.0, %v385
  %v387 = vpop.f32.mrb[0].mxu0
  %388 = vmatprep.mubr.bf16.mxu0 0
  %389 = vmatmul.mubr.bf16.gmra.mrb[0].mxu0 %v223
  %v390 = vpop.f32.mrb[0].mxu0
  %v391 = vadd.f32 0.0, %v390
  %v392 = vpop.f32.mrb[0].mxu0
  %v393 = vpop.f32.mrb[0].mxu0
  %v394 = vadd.f32 0.0, %v393
  %v395 = vpop.f32.mrb[0].mxu0
  %396 = vmatprep.mubr.bf16.mxu0 0
  %397 = vmatmul.mubr.bf16.gmra.mrb[0].mxu0 %v224
  %v398 = vpop.f32.mrb[0].mxu0
  %v399 = vadd.f32 0.0, %v398
  %v400 = vpop.f32.mrb[0].mxu0
  %v401 = vpop.f32.mrb[0].mxu0
  %v402 = vadd.f32 0.0, %v401
  %v403 = vpop.f32.mrb[0].mxu0
  %404 = vmatprep.mubr.bf16.mxu0 0
  %405 = vmatmul.mubr.bf16.gmra.mrb[0].mxu0 %v225
  %v406 = vpop.f32.mrb[0].mxu0
  %v407 = vadd.f32 0.0, %v406
  %v408 = vpop.f32.mrb[0].mxu0
  %v409 = vpop.f32.mrb[0].mxu0
  %v410 = vadd.f32 0.0, %v409
  %v411 = vpop.f32.mrb[0].mxu0
  %412 = vmatprep.mubr.bf16.mxu0 0
  %413 = vmatmul.mubr.bf16.gmra.mrb[0].mxu0 %v226
  %v414 = vpop.f32.mrb[0].mxu0
  %v415 = vadd.f32 0.0, %v414
  %v416 = vpop.f32.mrb[0].mxu0
  %v417 = vpop.f32.mrb[0].mxu0
  %v418 = vadd.f32 0.0, %v417
  %v419 = vpop.f32.mrb[0].mxu0
  %420 = vmatprep.mubr.bf16.mxu0 0
  %421 = vmatmul.mubr.bf16.gmra.mrb[0].mxu0 %v227
  %v422 = vpop.f32.mrb[0].mxu0
  %v423 = vadd.f32 0.0, %v422
  %v424 = vpop.f32.mrb[0].mxu0
  %v425 = vpop.f32.mrb[0].mxu0
  %v426 = vadd.f32 0.0, %v425
  %v427 = vpop.f32.mrb[0].mxu0
  %428 = vmatprep.mubr.bf16.mxu0 0
  %429 = vmatmul.mubr.bf16.gmra.mrb[0].mxu0 %v228
  %v430 = vpop.f32.mrb[0].mxu0
  %v431 = vadd.f32 0.0, %v430
  %v432 = vpop.f32.mrb[0].mxu0
  %v433 = vpop.f32.mrb[0].mxu0
  %v434 = vadd.f32 0.0, %v433
  %v435 = vpop.f32.mrb[0].mxu0
  %436 = vmatprep.mubr.bf16.mxu0 0
  %437 = vmatmul.mubr.bf16.gmra.mrb[0].mxu0 %v229
  %v438 = vpop.f32.mrb[0].mxu0
  %v439 = vadd.f32 0.0, %v438
  %v440 = vpop.f32.mrb[0].mxu0
  %v441 = vpop.f32.mrb[0].mxu0
  %v442 = vadd.f32 0.0, %v441
  %v443 = vpop.f32.mrb[0].mxu0
  %444 = vmatprep.mubr.bf16.mxu0 0
  %445 = vmatmul.mubr.bf16.gmra.mrb[0].mxu0 %v230
  %v446 = vpop.f32.mrb[0].mxu0
  %v447 = vadd.f32 0.0, %v446
  %v448 = vpop.f32.mrb[0].mxu0
  %v449 = vpop.f32.mrb[0].mxu0
  %v450 = vadd.f32 0.0, %v449
  %v451 = vpop.f32.mrb[0].mxu0
  %452 = vmatprep.mubr.bf16.mxu0 0
  %453 = vmatmul.mubr.bf16.gmra.mrb[0].mxu0 %v231
  %v454 = vpop.f32.mrb[0].mxu0
  %v455 = vadd.f32 0.0, %v454
  %v456 = vpop.f32.mrb[0].mxu0
  %v457 = vpop.f32.mrb[0].mxu0
  %v458 = vadd.f32 0.0, %v457
  %v459 = vpop.f32.mrb[0].mxu0
  %460 = vmatprep.mubr.bf16.mxu0 0
  %461 = vmatmul.mubr.bf16.gmra.mrb[0].mxu0 %v232
  %v462 = vpop.f32.mrb[0].mxu0
  %v463 = vadd.f32 0.0, %v462
  %v464 = vpop.f32.mrb[0].mxu0
  %v465 = vpop.f32.mrb[0].mxu0
  %v466 = vadd.f32 0.0, %v465
  %v467 = vpop.f32.mrb[0].mxu0
  %468 = vmatprep.mubr.bf16.mxu0 0
  %469 = vmatmul.mubr.bf16.gmra.mrb[0].mxu0 %v233
  %v470 = vpop.f32.mrb[0].mxu0
  %v471 = vadd.f32 0.0, %v470
  %v472 = vpop.f32.mrb[0].mxu0
  %v473 = vpop.f32.mrb[0].mxu0
  %v474 = vadd.f32 0.0, %v473
  %v475 = vpop.f32.mrb[0].mxu0
  %476 = vmatprep.mubr.bf16.mxu0 0
  %477 = vmatmul.mubr.bf16.gmra.mrb[0].mxu0 %v234
  %v478 = vpop.f32.mrb[0].mxu0
  %v479 = vadd.f32 0.0, %v478
  %v480 = vpop.f32.mrb[0].mxu0
  %v481 = vpop.f32.mrb[0].mxu0
  %v482 = vadd.f32 0.0, %v481
  %v483 = vpop.f32.mrb[0].mxu0
  %484 = vmatprep.mubr.bf16.mxu0 0
  %485 = vmatmul.mubr.bf16.gmra.mrb[0].mxu0 %v235
  %v486 = vpop.f32.mrb[0].mxu0
  %v487 = vadd.f32 0.0, %v486
  %v488 = vpop.f32.mrb[0].mxu0
  %v489 = vpop.f32.mrb[0].mxu0
  %v490 = vadd.f32 0.0, %v489
  %v491 = vpop.f32.mrb[0].mxu0
  %492 = vmatprep.mubr.bf16.mxu0 0
  %493 = vmatmul.mubr.bf16.gmra.mrb[0].mxu0 %v236
  %v494 = vpop.f32.mrb[0].mxu0
  %v495 = vadd.f32 0.0, %v494
  %v496 = vpop.f32.mrb[0].mxu0
  %v497 = vpop.f32.mrb[0].mxu0
  %v498 = vadd.f32 0.0, %v497
  %v499 = vpop.f32.mrb[0].mxu0
  %500 = vmatprep.mubr.bf16.mxu0 0
  %501 = vmatmul.mubr.bf16.gmra.mrb[0].mxu0 %v237
  %v502 = vpop.f32.mrb[0].mxu0
  %v503 = vadd.f32 0.0, %v502
  %v504 = vpop.f32.mrb[0].mxu0
  %v505 = vpop.f32.mrb[0].mxu0
  %v506 = vadd.f32 0.0, %v505
  %v507 = vpop.f32.mrb[0].mxu0
  %508 = vmatprep.mubr.bf16.mxu0 0
  %509 = vmatmul.mubr.bf16.gmra.mrb[0].mxu0 %v238
  %v510 = vpop.f32.mrb[0].mxu0
  %v511 = vadd.f32 0.0, %v510
  %v512 = vpop.f32.mrb[0].mxu0
  %v513 = vpop.f32.mrb[0].mxu0
  %v514 = vadd.f32 0.0, %v513
  %v515 = vpop.f32.mrb[0].mxu0
  %516 = vmatprep.mubr.bf16.mxu0 0
  %517 = vmatmul.mubr.bf16.gmra.mrb[0].mxu0 %v239
  %v518 = vpop.f32.mrb[0].mxu0
  %v519 = vadd.f32 0.0, %v518
  %v520 = vpop.f32.mrb[0].mxu0
  %v521 = vpop.f32.mrb[0].mxu0
  %v522 = vadd.f32 0.0, %v521
  %v523 = vpop.f32.mrb[0].mxu0
  %524 = vmatprep.mubr.bf16.mxu0 0
  %525 = vmatmul.mubr.bf16.gmra.mrb[0].mxu0 %v240
  %v526 = vpop.f32.mrb[0].mxu0
  %v527 = vadd.f32 0.0, %v526
  %v528 = vpop.f32.mrb[0].mxu0
  %v529 = vpop.f32.mrb[0].mxu0
  %v530 = vadd.f32 0.0, %v529
  %v531 = vpop.f32.mrb[0].mxu0
  %532 = vmatprep.mubr.bf16.mxu0 0
  %533 = vmatmul.mubr.bf16.gmra.mrb[0].mxu0 %v241
  %v534 = vpop.f32.mrb[0].mxu0
  %v535 = vadd.f32 0.0, %v534
  %v536 = vpop.f32.mrb[0].mxu0
  %v537 = vpop.f32.mrb[0].mxu0
  %v538 = vadd.f32 0.0, %v537
  %v539 = vpop.f32.mrb[0].mxu0
  %540 = vmatprep.mubr.bf16.mxu0 0
  %541 = vmatmul.mubr.bf16.gmra.mrb[0].mxu0 %v242
  %v542 = vpop.f32.mrb[0].mxu0
  %v543 = vadd.f32 0.0, %v542
  %v544 = vpop.f32.mrb[0].mxu0
  %v545 = vpop.f32.mrb[0].mxu0
  %v546 = vadd.f32 0.0, %v545
  %v547 = vpop.f32.mrb[0].mxu0
  %548 = vmatprep.mubr.bf16.mxu0 0
  %549 = vmatmul.mubr.bf16.gmra.mrb[0].mxu0 %v243
  %v550 = vpop.f32.mrb[0].mxu0
  %v551 = vadd.f32 0.0, %v550
  %v552 = vpop.f32.mrb[0].mxu0
  %v553 = vpop.f32.mrb[0].mxu0
  %v554 = vadd.f32 0.0, %v553
  %v555 = vpop.f32.mrb[0].mxu0
  %556 = vmatprep.mubr.bf16.mxu0 0
  %557 = vmatmul.mubr.bf16.gmra.mrb[0].mxu0 %v244
  %v558 = vpop.f32.mrb[0].mxu0
  %v559 = vadd.f32 0.0, %v558
  %v560 = vpop.f32.mrb[0].mxu0
  %v561 = vpop.f32.mrb[0].mxu0
  %v562 = vadd.f32 0.0, %v561
  %v563 = vpop.f32.mrb[0].mxu0
  %564 = vmatprep.mubr.bf16.mxu0 0
  %565 = vmatmul.mubr.bf16.gmra.mrb[0].mxu0 %v245
  %v566 = vpop.f32.mrb[0].mxu0
  %v567 = vadd.f32 0.0, %v566
  %v568 = vpop.f32.mrb[0].mxu0
  %v569 = vpop.f32.mrb[0].mxu0
  %v570 = vadd.f32 0.0, %v569
  %v571 = vpop.f32.mrb[0].mxu0
  %572 = vmatprep.mubr.bf16.mxu0 0
  %573 = vmatmul.mubr.bf16.gmra.mrb[0].mxu0 %v246
  %v574 = vpop.f32.mrb[0].mxu0
  %v575 = vadd.f32 0.0, %v574
  %v576 = vpop.f32.mrb[0].mxu0
  %v577 = vpop.f32.mrb[0].mxu0
  %v578 = vadd.f32 0.0, %v577
  %v579 = vpop.f32.mrb[0].mxu0
  %580 = vmatprep.mubr.bf16.mxu0 0
  %581 = vmatmul.mubr.bf16.gmra.mrb[0].mxu0 %v247
  %v582 = vpop.f32.mrb[0].mxu0
  %v583 = vadd.f32 0.0, %v582
  %v584 = vpop.f32.mrb[0].mxu0
  %v585 = vpop.f32.mrb[0].mxu0
  %v586 = vadd.f32 0.0, %v585
  %v587 = vpop.f32.mrb[0].mxu0
  %588 = vmatprep.mubr.bf16.mxu0 0
  %589 = vmatmul.mubr.bf16.gmra.mrb[0].mxu0 %v248
  %v590 = vpop.f32.mrb[0].mxu0
  %v591 = vadd.f32 0.0, %v590
  %v592 = vpop.f32.mrb[0].mxu0
  %v593 = vpop.f32.mrb[0].mxu0
  %v594 = vadd.f32 0.0, %v593
  %v595 = vpop.f32.mrb[0].mxu0
  %596 = vmatprep.mubr.bf16.mxu0 0
  %597 = vmatmul.mubr.bf16.gmra.mrb[0].mxu0 %v249
  %v598 = vpop.f32.mrb[0].mxu0
  %v599 = vadd.f32 0.0, %v598
  %v600 = vpop.f32.mrb[0].mxu0
  %v601 = vpop.f32.mrb[0].mxu0
  %v602 = vadd.f32 0.0, %v601
  %v603 = vpop.f32.mrb[0].mxu0
  %604 = vmatprep.mubr.bf16.mxu0 0
  %605 = vmatmul.mubr.bf16.gmra.mrb[0].mxu0 %v250
  %v606 = vpop.f32.mrb[0].mxu0
  %v607 = vadd.f32 0.0, %v606
  %v608 = vpop.f32.mrb[0].mxu0
  %v609 = vpop.f32.mrb[0].mxu0
  %v610 = vadd.f32 0.0, %v609
  %v611 = vpop.f32.mrb[0].mxu0
  %612 = vmatprep.mubr.bf16.mxu0 0
  %613 = vmatmul.mubr.bf16.gmra.mrb[0].mxu0 %v251
  %v614 = vpop.f32.mrb[0].mxu0
  %v615 = vadd.f32 0.0, %v614
  %v616 = vpop.f32.mrb[0].mxu0
  %v617 = vpop.f32.mrb[0].mxu0
  %v618 = vadd.f32 0.0, %v617
  %v619 = vpop.f32.mrb[0].mxu0
  %620 = vdwg.mxu0
  %v621 = vpack.c.bf16 %v370, %v367
  %v622 = vpack.c.bf16 %v378, %v375
  %v623 = vpack.c.bf16 %v386, %v383
  %v624 = vpack.c.bf16 %v394, %v391
  %v625 = vpack.c.bf16 %v402, %v399
  %v626 = vpack.c.bf16 %v410, %v407
  %v627 = vpack.c.bf16 %v418, %v415
  %v628 = vpack.c.bf16 %v426, %v423
  %v629 = vpack.c.bf16 %v434, %v431
  %v630 = vpack.c.bf16 %v442, %v439
  %v631 = vpack.c.bf16 %v450, %v447
  %v632 = vpack.c.bf16 %v458, %v455
  %v633 = vpack.c.bf16 %v466, %v463
  %v634 = vpack.c.bf16 %v474, %v471
  %v635 = vpack.c.bf16 %v482, %v479
  %v636 = vpack.c.bf16 %v490, %v487
  %v637 = vpack.c.bf16 %v498, %v495
  %v638 = vpack.c.bf16 %v506, %v503
  %v639 = vpack.c.bf16 %v514, %v511
  %v640 = vpack.c.bf16 %v522, %v519
  %v641 = vpack.c.bf16 %v530, %v527
  %v642 = vpack.c.bf16 %v538, %v535
  %v643 = vpack.c.bf16 %v546, %v543
  %v644 = vpack.c.bf16 %v554, %v551
  %v645 = vpack.c.bf16 %v562, %v559
  %v646 = vpack.c.bf16 %v570, %v567
  %v647 = vpack.c.bf16 %v578, %v575
  %v648 = vpack.c.bf16 %v586, %v583
  %v649 = vpack.c.bf16 %v594, %v591
  %v650 = vpack.c.bf16 %v602, %v599
  %v651 = vpack.c.bf16 %v610, %v607
  %v652 = vpack.c.bf16 %v618, %v615
  %v685 = vunpack.c.l.b16 %v621
  %v686 = vunpack.c.h.b16 %v621
  %v687 = vunpack.c.l.b16 %v622
  %v688 = vunpack.c.h.b16 %v622
  %v689 = vunpack.c.l.b16 %v623
  %v690 = vunpack.c.h.b16 %v623
  %v691 = vunpack.c.l.b16 %v624
  %v692 = vunpack.c.h.b16 %v624
  %v693 = vunpack.c.l.b16 %v625
  %v694 = vunpack.c.h.b16 %v625
  %v695 = vunpack.c.l.b16 %v626
  %v696 = vunpack.c.h.b16 %v626
  %v697 = vunpack.c.l.b16 %v627
  %v698 = vunpack.c.h.b16 %v627
  %v699 = vunpack.c.l.b16 %v628
  %v700 = vunpack.c.h.b16 %v628
  %v701 = vunpack.c.l.b16 %v629
  %v702 = vunpack.c.h.b16 %v629
  %v703 = vunpack.c.l.b16 %v630
  %v704 = vunpack.c.h.b16 %v630
  %v705 = vunpack.c.l.b16 %v631
  %v706 = vunpack.c.h.b16 %v631
  %v707 = vunpack.c.l.b16 %v632
  %v708 = vunpack.c.h.b16 %v632
  %v709 = vunpack.c.l.b16 %v633
  %v710 = vunpack.c.h.b16 %v633
  %v711 = vunpack.c.l.b16 %v634
  %v712 = vunpack.c.h.b16 %v634
  %v713 = vunpack.c.l.b16 %v635
  %v714 = vunpack.c.h.b16 %v635
  %v715 = vunpack.c.l.b16 %v636
  %v716 = vunpack.c.h.b16 %v636
  %v717 = vunpack.c.l.b16 %v637
  %v718 = vunpack.c.h.b16 %v637
  %v719 = vunpack.c.l.b16 %v638
  %v720 = vunpack.c.h.b16 %v638
  %v721 = vunpack.c.l.b16 %v639
  %v722 = vunpack.c.h.b16 %v639
  %v723 = vunpack.c.l.b16 %v640
  %v724 = vunpack.c.h.b16 %v640
  %v725 = vunpack.c.l.b16 %v641
  %v726 = vunpack.c.h.b16 %v641
  %v727 = vunpack.c.l.b16 %v642
  %v728 = vunpack.c.h.b16 %v642
  %v729 = vunpack.c.l.b16 %v643
  %v730 = vunpack.c.h.b16 %v643
  %v731 = vunpack.c.l.b16 %v644
  %v732 = vunpack.c.h.b16 %v644
  %v733 = vunpack.c.l.b16 %v645
  %v734 = vunpack.c.h.b16 %v645
  %v735 = vunpack.c.l.b16 %v646
  %v736 = vunpack.c.h.b16 %v646
  %v737 = vunpack.c.l.b16 %v647
  %v738 = vunpack.c.h.b16 %v647
  %v739 = vunpack.c.l.b16 %v648
  %v740 = vunpack.c.h.b16 %v648
  %v741 = vunpack.c.l.b16 %v649
  %v742 = vunpack.c.h.b16 %v649
  %v743 = vunpack.c.l.b16 %v650
  %v744 = vunpack.c.h.b16 %v650
  %v745 = vunpack.c.l.b16 %v651
  %v746 = vunpack.c.h.b16 %v651
  %v747 = vunpack.c.l.b16 %v652
  %v748 = vunpack.c.h.b16 %v652
  %v749 = vpack.c.b16 %v685, %v685
  %v750 = vpack.c.b16 %v686, %v686
  %v751 = vpack.c.b16 %v687, %v687
  %v752 = vpack.c.b16 %v688, %v688
  %v753 = vpack.c.b16 %v689, %v689
  %v754 = vpack.c.b16 %v690, %v690
  %v755 = vpack.c.b16 %v691, %v691
  %v756 = vpack.c.b16 %v692, %v692
  %v757 = vpack.c.b16 %v693, %v693
  %v758 = vpack.c.b16 %v694, %v694
  %v759 = vpack.c.b16 %v695, %v695
  %v760 = vpack.c.b16 %v696, %v696
  %v761 = vpack.c.b16 %v697, %v697
  %v762 = vpack.c.b16 %v698, %v698
  %v763 = vpack.c.b16 %v699, %v699
  %v764 = vpack.c.b16 %v700, %v700
  %v765 = vpack.c.b16 %v701, %v701
  %v766 = vpack.c.b16 %v702, %v702
  %v767 = vpack.c.b16 %v703, %v703
  %v768 = vpack.c.b16 %v704, %v704
  %v769 = vpack.c.b16 %v705, %v705
  %v770 = vpack.c.b16 %v706, %v706
  %v771 = vpack.c.b16 %v707, %v707
  %v772 = vpack.c.b16 %v708, %v708
  %v773 = vpack.c.b16 %v709, %v709
  %v774 = vpack.c.b16 %v710, %v710
  %v775 = vpack.c.b16 %v711, %v711
  %v776 = vpack.c.b16 %v712, %v712
  %v777 = vpack.c.b16 %v713, %v713
  %v778 = vpack.c.b16 %v714, %v714
  %v779 = vpack.c.b16 %v715, %v715
  %v780 = vpack.c.b16 %v716, %v716
  %v781 = vpack.c.b16 %v717, %v717
  %v782 = vpack.c.b16 %v718, %v718
  %v783 = vpack.c.b16 %v719, %v719
  %v784 = vpack.c.b16 %v720, %v720
  %v785 = vpack.c.b16 %v721, %v721
  %v786 = vpack.c.b16 %v722, %v722
  %v787 = vpack.c.b16 %v723, %v723
  %v788 = vpack.c.b16 %v724, %v724
  %v789 = vpack.c.b16 %v725, %v725
  %v790 = vpack.c.b16 %v726, %v726
  %v791 = vpack.c.b16 %v727, %v727
  %v792 = vpack.c.b16 %v728, %v728
  %v793 = vpack.c.b16 %v729, %v729
  %v794 = vpack.c.b16 %v730, %v730
  %v795 = vpack.c.b16 %v731, %v731
  %v796 = vpack.c.b16 %v732, %v732
  %v797 = vpack.c.b16 %v733, %v733
  %v798 = vpack.c.b16 %v734, %v734
  %v799 = vpack.c.b16 %v735, %v735
  %v800 = vpack.c.b16 %v736, %v736
  %v801 = vpack.c.b16 %v737, %v737
  %v802 = vpack.c.b16 %v738, %v738
  %v803 = vpack.c.b16 %v739, %v739
  %v804 = vpack.c.b16 %v740, %v740
  %v805 = vpack.c.b16 %v741, %v741
  %v806 = vpack.c.b16 %v742, %v742
  %v807 = vpack.c.b16 %v743, %v743
  %v808 = vpack.c.b16 %v744, %v744
  %v809 = vpack.c.b16 %v745, %v745
  %v810 = vpack.c.b16 %v746, %v746
  %v811 = vpack.c.b16 %v747, %v747
  %v812 = vpack.c.b16 %v748, %v748
  %877 = vst [vmem:[%s2] sm:$0xf] %v749
  %878 = vst [vmem:[%s2 + $0x4] sm:$0xf] %v750
  %879 = vst [vmem:[%s2 + $0x8] sm:$0xf] %v751
  %880 = vst [vmem:[%s2 + $0xc] sm:$0xf] %v752
  %881 = vst [vmem:[%s2 + $0x10] sm:$0xf] %v753
  %882 = vst [vmem:[%s2 + $0x14] sm:$0xf] %v754
  %883 = vst [vmem:[%s2 + $0x18] sm:$0xf] %v755
  %884 = vst [vmem:[%s2 + $0x1c] sm:$0xf] %v756
  %885 = vst [vmem:[%s2 + $0x20] sm:$0xf] %v757
  %886 = vst [vmem:[%s2 + $0x24] sm:$0xf] %v758
  %887 = vst [vmem:[%s2 + $0x28] sm:$0xf] %v759
  %888 = vst [vmem:[%s2 + $0x2c] sm:$0xf] %v760
  %889 = vst [vmem:[%s2 + $0x30] sm:$0xf] %v761
  %890 = vst [vmem:[%s2 + $0x34] sm:$0xf] %v762
  %891 = vst [vmem:[%s2 + $0x38] sm:$0xf] %v763
  %892 = vst [vmem:[%s2 + $0x3c] sm:$0xf] %v764
  %893 = vst [vmem:[%s2 + $0x40] sm:$0xf] %v765
  %894 = vst [vmem:[%s2 + $0x44] sm:$0xf] %v766
  %895 = vst [vmem:[%s2 + $0x48] sm:$0xf] %v767
  %896 = vst [vmem:[%s2 + $0x4c] sm:$0xf] %v768
  %897 = vst [vmem:[%s2 + $0x50] sm:$0xf] %v769
  %898 = vst [vmem:[%s2 + $0x54] sm:$0xf] %v770
  %899 = vst [vmem:[%s2 + $0x58] sm:$0xf] %v771
  %900 = vst [vmem:[%s2 + $0x5c] sm:$0xf] %v772
  %901 = vst [vmem:[%s2 + $0x60] sm:$0xf] %v773
  %902 = vst [vmem:[%s2 + $0x64] sm:$0xf] %v774
  %903 = vst [vmem:[%s2 + $0x68] sm:$0xf] %v775
  %904 = vst [vmem:[%s2 + $0x6c] sm:$0xf] %v776
  %905 = vst [vmem:[%s2 + $0x70] sm:$0xf] %v777
  %906 = vst [vmem:[%s2 + $0x74] sm:$0xf] %v778
  %907 = vst [vmem:[%s2 + $0x78] sm:$0xf] %v779
  %908 = vst [vmem:[%s2 + $0x7c] sm:$0xf] %v780
  %909 = vst [vmem:[%s2 + $0x80] sm:$0xf] %v781
  %910 = vst [vmem:[%s2 + $0x84] sm:$0xf] %v782
  %911 = vst [vmem:[%s2 + $0x88] sm:$0xf] %v783
  %912 = vst [vmem:[%s2 + $0x8c] sm:$0xf] %v784
  %913 = vst [vmem:[%s2 + $0x90] sm:$0xf] %v785
  %914 = vst [vmem:[%s2 + $0x94] sm:$0xf] %v786
  %915 = vst [vmem:[%s2 + $0x98] sm:$0xf] %v787
  %916 = vst [vmem:[%s2 + $0x9c] sm:$0xf] %v788
  %917 = vst [vmem:[%s2 + $0xa0] sm:$0xf] %v789
  %918 = vst [vmem:[%s2 + $0xa4] sm:$0xf] %v790
  %919 = vst [vmem:[%s2 + $0xa8] sm:$0xf] %v791
  %920 = vst [vmem:[%s2 + $0xac] sm:$0xf] %v792
  %921 = vst [vmem:[%s2 + $0xb0] sm:$0xf] %v793
  %922 = vst [vmem:[%s2 + $0xb4] sm:$0xf] %v794
  %923 = vst [vmem:[%s2 + $0xb8] sm:$0xf] %v795
  %924 = vst [vmem:[%s2 + $0xbc] sm:$0xf] %v796
  %925 = vst [vmem:[%s2 + $0xc0] sm:$0xf] %v797
  %926 = vst [vmem:[%s2 + $0xc4] sm:$0xf] %v798
  %927 = vst [vmem:[%s2 + $0xc8] sm:$0xf] %v799
  %928 = vst [vmem:[%s2 + $0xcc] sm:$0xf] %v800
  %929 = vst [vmem:[%s2 + $0xd0] sm:$0xf] %v801
  %930 = vst [vmem:[%s2 + $0xd4] sm:$0xf] %v802
  %931 = vst [vmem:[%s2 + $0xd8] sm:$0xf] %v803
  %932 = vst [vmem:[%s2 + $0xdc] sm:$0xf] %v804
  %933 = vst [vmem:[%s2 + $0xe0] sm:$0xf] %v805
  %934 = vst [vmem:[%s2 + $0xe4] sm:$0xf] %v806
  %935 = vst [vmem:[%s2 + $0xe8] sm:$0xf] %v807
  %936 = vst [vmem:[%s2 + $0xec] sm:$0xf] %v808
  %937 = vst [vmem:[%s2 + $0xf0] sm:$0xf] %v809
  %938 = vst [vmem:[%s2 + $0xf4] sm:$0xf] %v810
  %939 = vst [vmem:[%s2 + $0xf8] sm:$0xf] %v811
  %940 = vst [vmem:[%s2 + $0xfc] sm:$0xf] %v812
  // Predicated region
  $region10: #{encoder_forward.4} parent=0 // pred_check
    _
  $region11: #{encoder_forward.4} parent=0 // pred_check_branch
    %942 = sbr.rel (0) target = $region13
  $region12: #{encoder_forward.4} parent=0 // pred_region
    _
  $region13: #{encoder_forward.4} parent=0 // pred_fallthru
    _
  // Predicated region
  $region14: #{encoder_forward.4} parent=0 // pred_check
    _
  $region15: #{encoder_forward.4} parent=0 // pred_check_branch
    %944 = sbr.rel (0) target = $region17
  $region16: #{encoder_forward.4} parent=0 // pred_region
    _
  $region17: #{encoder_forward.4} parent=0 // pred_fallthru
    _

// kernel: encoder_forward.7
$region0: #{encoder_forward.7}
  #allocation0 [shape = 'u32[]', space=smem, size = 0x4, offset = 0x4, fixed_abs, tag = 'smem constant byte address 0x4 - core index']
  #allocation1 [shape = 'u32[144,128]{1,0:T(1,128)}', space=vmem, size = 0x12000, scoped, tag = 'internal scratch']
  #allocation2 [shape = 'f32[512,128]{1,0:T(8,128)}', space=vmem, size = 0x40000, scoped, tag = 'scratch operand']
  %s0 = inlined_call_operand.vmem [shape: bf16[512,512], index: 0, kind: input, shape index: {}]
  %s1 = inlined_call_operand.vmem [shape: bf16[512,128], index: 1, kind: input, shape index: {}]
  %s2 = inlined_call_operand.vmem [shape: f32[1,128], index: 2, kind: input, shape index: {}]
  %s3 = inlined_call_operand.vmem [shape: f32[512,128], index: 3, kind: output, shape index: {}]
  %s4 = sld [smem:[#allocation0]]
  $region30: #{encoder_forward.7} parent=0
    _
  %s6 = ssub.s32 1, %s4
  %s7 = scalar_select 0, %s6, %s4
  // Predicated region
  $region2: #{encoder_forward.7} parent=0 // pred_check
    _
  $region3: #{encoder_forward.7} parent=0 // pred_check_branch
    %9 = sbr.rel (0) target = $region5
  $region4: #{encoder_forward.7} parent=0 // pred_region
    _
  $region5: #{encoder_forward.7} parent=0 // pred_fallthru
    _
  // Predicated region
  $region6: #{encoder_forward.7} parent=0 // pred_check
    _
  $region7: #{encoder_forward.7} parent=0 // pred_check_branch
    %11 = sbr.rel (0) target = $region9
  $region8: #{encoder_forward.7} parent=0 // pred_region
    _
  $region9: #{encoder_forward.7} parent=0 // pred_fallthru
    _
  // Predicated region
  $region10: #{encoder_forward.7} parent=0 // pred_check
    _
  $region11: #{encoder_forward.7} parent=0 // pred_check_branch
    %13 = sbr.rel (0) target = $region13
  $region12: #{encoder_forward.7} parent=0 // pred_region
    _
  $region13: #{encoder_forward.7} parent=0 // pred_fallthru
    _
  %p15 = scmp.eq.s32.totalorder 0, 0
  // Predicated region
  $region14: #{encoder_forward.7} parent=0 // pred_check
    %p16 = pneg %p15
  $region15: #{encoder_forward.7} parent=0 // pred_check_branch
    %18 = sbr.rel (%p16) target = $region17
  $region16: #{encoder_forward.7} parent=0 // pred_region
    %19 = vst [vmem:[#allocation2] sm:$0xff] 0.0
    %20 = vst [vmem:[#allocation2 + $0x8] sm:$0xff] 0.0
    %21 = vst [vmem:[#allocation2 + $0x10] sm:$0xff] 0.0
    %22 = vst [vmem:[#allocation2 + $0x18] sm:$0xff] 0.0
    %23 = vst [vmem:[#allocation2 + $0x20] sm:$0xff] 0.0
    %24 = vst [vmem:[#allocation2 + $0x28] sm:$0xff] 0.0
    %25 = vst [vmem:[#allocation2 + $0x30] sm:$0xff] 0.0
    %26 = vst [vmem:[#allocation2 + $0x38] sm:$0xff] 0.0
    %27 = vst [vmem:[#allocation2 + $0x40] sm:$0xff] 0.0
    %28 = vst [vmem:[#allocation2 + $0x48] sm:$0xff] 0.0
    %29 = vst [vmem:[#allocation2 + $0x50] sm:$0xff] 0.0
    %30 = vst [vmem:[#allocation2 + $0x58] sm:$0xff] 0.0
    %31 = vst [vmem:[#allocation2 + $0x60] sm:$0xff] 0.0
    %32 = vst [vmem:[#allocation2 + $0x68] sm:$0xff] 0.0
    %33 = vst [vmem:[#allocation2 + $0x70] sm:$0xff] 0.0
    %34 = vst [vmem:[#allocation2 + $0x78] sm:$0xff] 0.0
    %35 = vst [vmem:[#allocation2 + $0x80] sm:$0xff] 0.0
    %36 = vst [vmem:[#allocation2 + $0x88] sm:$0xff] 0.0
    %37 = vst [vmem:[#allocation2 + $0x90] sm:$0xff] 0.0
    %38 = vst [vmem:[#allocation2 + $0x98] sm:$0xff] 0.0
    %39 = vst [vmem:[#allocation2 + $0xa0] sm:$0xff] 0.0
    %40 = vst [vmem:[#allocation2 + $0xa8] sm:$0xff] 0.0
    %41 = vst [vmem:[#allocation2 + $0xb0] sm:$0xff] 0.0
    %42 = vst [vmem:[#allocation2 + $0xb8] sm:$0xff] 0.0
    %43 = vst [vmem:[#allocation2 + $0xc0] sm:$0xff] 0.0
    %44 = vst [vmem:[#allocation2 + $0xc8] sm:$0xff] 0.0
    %45 = vst [vmem:[#allocation2 + $0xd0] sm:$0xff] 0.0
    %46 = vst [vmem:[#allocation2 + $0xd8] sm:$0xff] 0.0
    %47 = vst [vmem:[#allocation2 + $0xe0] sm:$0xff] 0.0
    %48 = vst [vmem:[#allocation2 + $0xe8] sm:$0xff] 0.0
    %49 = vst [vmem:[#allocation2 + $0xf0] sm:$0xff] 0.0
    %50 = vst [vmem:[#allocation2 + $0xf8] sm:$0xff] 0.0
    %51 = vst [vmem:[#allocation2 + $0x100] sm:$0xff] 0.0
    %52 = vst [vmem:[#allocation2 + $0x108] sm:$0xff] 0.0
    %53 = vst [vmem:[#allocation2 + $0x110] sm:$0xff] 0.0
    %54 = vst [vmem:[#allocation2 + $0x118] sm:$0xff] 0.0
    %55 = vst [vmem:[#allocation2 + $0x120] sm:$0xff] 0.0
    %56 = vst [vmem:[#allocation2 + $0x128] sm:$0xff] 0.0
    %57 = vst [vmem:[#allocation2 + $0x130] sm:$0xff] 0.0
    %58 = vst [vmem:[#allocation2 + $0x138] sm:$0xff] 0.0
    %59 = vst [vmem:[#allocation2 + $0x140] sm:$0xff] 0.0
    %60 = vst [vmem:[#allocation2 + $0x148] sm:$0xff] 0.0
    %61 = vst [vmem:[#allocation2 + $0x150] sm:$0xff] 0.0
    %62 = vst [vmem:[#allocation2 + $0x158] sm:$0xff] 0.0
    %63 = vst [vmem:[#allocation2 + $0x160] sm:$0xff] 0.0
    %64 = vst [vmem:[#allocation2 + $0x168] sm:$0xff] 0.0
    %65 = vst [vmem:[#allocation2 + $0x170] sm:$0xff] 0.0
    %66 = vst [vmem:[#allocation2 + $0x178] sm:$0xff] 0.0
    %67 = vst [vmem:[#allocation2 + $0x180] sm:$0xff] 0.0
    %68 = vst [vmem:[#allocation2 + $0x188] sm:$0xff] 0.0
    %69 = vst [vmem:[#allocation2 + $0x190] sm:$0xff] 0.0
    %70 = vst [vmem:[#allocation2 + $0x198] sm:$0xff] 0.0
    %71 = vst [vmem:[#allocation2 + $0x1a0] sm:$0xff] 0.0
    %72 = vst [vmem:[#allocation2 + $0x1a8] sm:$0xff] 0.0
    %73 = vst [vmem:[#allocation2 + $0x1b0] sm:$0xff] 0.0
    %74 = vst [vmem:[#allocation2 + $0x1b8] sm:$0xff] 0.0
    %75 = vst [vmem:[#allocation2 + $0x1c0] sm:$0xff] 0.0
    %76 = vst [vmem:[#allocation2 + $0x1c8] sm:$0xff] 0.0
    %77 = vst [vmem:[#allocation2 + $0x1d0] sm:$0xff] 0.0
    %78 = vst [vmem:[#allocation2 + $0x1d8] sm:$0xff] 0.0
    %79 = vst [vmem:[#allocation2 + $0x1e0] sm:$0xff] 0.0
    %80 = vst [vmem:[#allocation2 + $0x1e8] sm:$0xff] 0.0
    %81 = vst [vmem:[#allocation2 + $0x1f0] sm:$0xff] 0.0
    %82 = vst [vmem:[#allocation2 + $0x1f8] sm:$0xff] 0.0
  $region17: #{encoder_forward.7} parent=0 // pred_fallthru
    _
  %v83 = vld [vmem:[#allocation2] sm:$0xff]
  %v84 = vld [vmem:[#allocation2 + $0x8] sm:$0xff]
  %v85 = vld [vmem:[#allocation2 + $0x10] sm:$0xff]
  %v86 = vld [vmem:[#allocation2 + $0x18] sm:$0xff]
  %v87 = vld [vmem:[#allocation2 + $0x20] sm:$0xff]
  %v88 = vld [vmem:[#allocation2 + $0x28] sm:$0xff]
  %v89 = vld [vmem:[#allocation2 + $0x30] sm:$0xff]
  %v90 = vld [vmem:[#allocation2 + $0x38] sm:$0xff]
  %v91 = vld [vmem:[#allocation2 + $0x40] sm:$0xff]
  %v92 = vld [vmem:[#allocation2 + $0x48] sm:$0xff]
  %v93 = vld [vmem:[#allocation2 + $0x50] sm:$0xff]
  %v94 = vld [vmem:[#allocation2 + $0x58] sm:$0xff]
  %v95 = vld [vmem:[#allocation2 + $0x60] sm:$0xff]
  %v96 = vld [vmem:[#allocation2 + $0x68] sm:$0xff]
  %v97 = vld [vmem:[#allocation2 + $0x70] sm:$0xff]
  %v98 = vld [vmem:[#allocation2 + $0x78] sm:$0xff]
  %v99 = vld [vmem:[#allocation2 + $0x80] sm:$0xff]
  %v100 = vld [vmem:[#allocation2 + $0x88] sm:$0xff]
  %v101 = vld [vmem:[#allocation2 + $0x90] sm:$0xff]
  %v102 = vld [vmem:[#allocation2 + $0x98] sm:$0xff]
  %v103 = vld [vmem:[#allocation2 + $0xa0] sm:$0xff]
  %v104 = vld [vmem:[#allocation2 + $0xa8] sm:$0xff]
  %v105 = vld [vmem:[#allocation2 + $0xb0] sm:$0xff]
  %v106 = vld [vmem:[#allocation2 + $0xb8] sm:$0xff]
  %v107 = vld [vmem:[#allocation2 + $0xc0] sm:$0xff]
  %v108 = vld [vmem:[#allocation2 + $0xc8] sm:$0xff]
  %v109 = vld [vmem:[#allocation2 + $0xd0] sm:$0xff]
  %v110 = vld [vmem:[#allocation2 + $0xd8] sm:$0xff]
  %v111 = vld [vmem:[#allocation2 + $0xe0] sm:$0xff]
  %v112 = vld [vmem:[#allocation2 + $0xe8] sm:$0xff]
  %v113 = vld [vmem:[#allocation2 + $0xf0] sm:$0xff]
  %v114 = vld [vmem:[#allocation2 + $0xf8] sm:$0xff]
  %v115 = vld [vmem:[#allocation2 + $0x100] sm:$0xff]
  %v116 = vld [vmem:[#allocation2 + $0x108] sm:$0xff]
  %v117 = vld [vmem:[#allocation2 + $0x110] sm:$0xff]
  %v118 = vld [vmem:[#allocation2 + $0x118] sm:$0xff]
  %v119 = vld [vmem:[#allocation2 + $0x120] sm:$0xff]
  %v120 = vld [vmem:[#allocation2 + $0x128] sm:$0xff]
  %v121 = vld [vmem:[#allocation2 + $0x130] sm:$0xff]
  %v122 = vld [vmem:[#allocation2 + $0x138] sm:$0xff]
  %v123 = vld [vmem:[#allocation2 + $0x140] sm:$0xff]
  %v124 = vld [vmem:[#allocation2 + $0x148] sm:$0xff]
  %v125 = vld [vmem:[#allocation2 + $0x150] sm:$0xff]
  %v126 = vld [vmem:[#allocation2 + $0x158] sm:$0xff]
  %v127 = vld [vmem:[#allocation2 + $0x160] sm:$0xff]
  %v128 = vld [vmem:[#allocation2 + $0x168] sm:$0xff]
  %v129 = vld [vmem:[#allocation2 + $0x170] sm:$0xff]
  %v130 = vld [vmem:[#allocation2 + $0x178] sm:$0xff]
  %v131 = vld [vmem:[#allocation2 + $0x180] sm:$0xff]
  %v132 = vld [vmem:[#allocation2 + $0x188] sm:$0xff]
  %v133 = vld [vmem:[#allocation2 + $0x190] sm:$0xff]
  %v134 = vld [vmem:[#allocation2 + $0x198] sm:$0xff]
  %v135 = vld [vmem:[#allocation2 + $0x1a0] sm:$0xff]
  %v136 = vld [vmem:[#allocation2 + $0x1a8] sm:$0xff]
  %v137 = vld [vmem:[#allocation2 + $0x1b0] sm:$0xff]
  %v138 = vld [vmem:[#allocation2 + $0x1b8] sm:$0xff]
  %v139 = vld [vmem:[#allocation2 + $0x1c0] sm:$0xff]
  %v140 = vld [vmem:[#allocation2 + $0x1c8] sm:$0xff]
  %v141 = vld [vmem:[#allocation2 + $0x1d0] sm:$0xff]
  %v142 = vld [vmem:[#allocation2 + $0x1d8] sm:$0xff]
  %v143 = vld [vmem:[#allocation2 + $0x1e0] sm:$0xff]
  %v144 = vld [vmem:[#allocation2 + $0x1e8] sm:$0xff]
  %v145 = vld [vmem:[#allocation2 + $0x1f0] sm:$0xff]
  %v146 = vld [vmem:[#allocation2 + $0x1f8] sm:$0xff]
  %v147 = vld [vmem:[%s0] sm:$0xff]
  %v148 = vld [vmem:[%s0 + $0x8] sm:$0xff]
  %v149 = vld [vmem:[%s0 + $0x10] sm:$0xff]
  %v150 = vld [vmem:[%s0 + $0x18] sm:$0xff]
  %v151 = vld [vmem:[%s0 + $0x20] sm:$0xff]
  %v152 = vld [vmem:[%s0 + $0x28] sm:$0xff]
  %v153 = vld [vmem:[%s0 + $0x30] sm:$0xff]
  %v154 = vld [vmem:[%s0 + $0x38] sm:$0xff]
  %v155 = vld [vmem:[%s0 + $0x40] sm:$0xff]
  %v156 = vld [vmem:[%s0 + $0x48] sm:$0xff]
  %v157 = vld [vmem:[%s0 + $0x50] sm:$0xff]
  %v158 = vld [vmem:[%s0 + $0x58] sm:$0xff]
  %v159 = vld [vmem:[%s0 + $0x60] sm:$0xff]
  %v160 = vld [vmem:[%s0 + $0x68] sm:$0xff]
  %v161 = vld [vmem:[%s0 + $0x70] sm:$0xff]
  %v162 = vld [vmem:[%s0 + $0x78] sm:$0xff]
  %v163 = vld [vmem:[%s0 + $0x80] sm:$0xff]
  %v164 = vld [vmem:[%s0 + $0x88] sm:$0xff]
  %v165 = vld [vmem:[%s0 + $0x90] sm:$0xff]
  %v166 = vld [vmem:[%s0 + $0x98] sm:$0xff]
  %v167 = vld [vmem:[%s0 + $0xa0] sm:$0xff]
  %v168 = vld [vmem:[%s0 + $0xa8] sm:$0xff]
  %v169 = vld [vmem:[%s0 + $0xb0] sm:$0xff]
  %v170 = vld [vmem:[%s0 + $0xb8] sm:$0xff]
  %v171 = vld [vmem:[%s0 + $0xc0] sm:$0xff]
  %v172 = vld [vmem:[%s0 + $0xc8] sm:$0xff]
  %v173 = vld [vmem:[%s0 + $0xd0] sm:$0xff]
  %v174 = vld [vmem:[%s0 + $0xd8] sm:$0xff]
  %v175 = vld [vmem:[%s0 + $0xe0] sm:$0xff]
  %v176 = vld [vmem:[%s0 + $0xe8] sm:$0xff]
  %v177 = vld [vmem:[%s0 + $0xf0] sm:$0xff]
  %v178 = vld [vmem:[%s0 + $0xf8] sm:$0xff]
  %v179 = vld [vmem:[%s0 + $0x100] sm:$0xff]
  %v180 = vld [vmem:[%s0 + $0x108] sm:$0xff]
  %v181 = vld [vmem:[%s0 + $0x110] sm:$0xff]
  %v182 = vld [vmem:[%s0 + $0x118] sm:$0xff]
  %v183 = vld [vmem:[%s0 + $0x120] sm:$0xff]
  %v184 = vld [vmem:[%s0 + $0x128] sm:$0xff]
  %v185 = vld [vmem:[%s0 + $0x130] sm:$0xff]
  %v186 = vld [vmem:[%s0 + $0x138] sm:$0xff]
  %v187 = vld [vmem:[%s0 + $0x140] sm:$0xff]
  %v188 = vld [vmem:[%s0 + $0x148] sm:$0xff]
  %v189 = vld [vmem:[%s0 + $0x150] sm:$0xff]
  %v190 = vld [vmem:[%s0 + $0x158] sm:$0xff]
  %v191 = vld [vmem:[%s0 + $0x160] sm:$0xff]
  %v192 = vld [vmem:[%s0 + $0x168] sm:$0xff]
  %v193 = vld [vmem:[%s0 + $0x170] sm:$0xff]
  %v194 = vld [vmem:[%s0 + $0x178] sm:$0xff]
  %v195 = vld [vmem:[%s0 + $0x180] sm:$0xff]
  %v196 = vld [vmem:[%s0 + $0x188] sm:$0xff]
  %v197 = vld [vmem:[%s0 + $0x190] sm:$0xff]
  %v198 = vld [vmem:[%s0 + $0x198] sm:$0xff]
  %v199 = vld [vmem:[%s0 + $0x1a0] sm:$0xff]
  %v200 = vld [vmem:[%s0 + $0x1a8] sm:$0xff]
  %v201 = vld [vmem:[%s0 + $0x1b0] sm:$0xff]
  %v202 = vld [vmem:[%s0 + $0x1b8] sm:$0xff]
  %v203 = vld [vmem:[%s0 + $0x1c0] sm:$0xff]
  %v204 = vld [vmem:[%s0 + $0x1c8] sm:$0xff]
  %v205 = vld [vmem:[%s0 + $0x1d0] sm:$0xff]
  %v206 = vld [vmem:[%s0 + $0x1d8] sm:$0xff]
  %v207 = vld [vmem:[%s0 + $0x1e0] sm:$0xff]
  %v208 = vld [vmem:[%s0 + $0x1e8] sm:$0xff]
  %v209 = vld [vmem:[%s0 + $0x1f0] sm:$0xff]
  %v210 = vld [vmem:[%s0 + $0x1f8] sm:$0xff]
  %v211 = vld [vmem:[%s0 + $0x200] sm:$0xff]
  %v212 = vld [vmem:[%s0 + $0x208] sm:$0xff]
  %v213 = vld [vmem:[%s0 + $0x210] sm:$0xff]
  %v214 = vld [vmem:[%s0 + $0x218] sm:$0xff]
  %v215 = vld [vmem:[%s0 + $0x220] sm:$0xff]
  %v216 = vld [vmem:[%s0 + $0x228] sm:$0xff]
  %v217 = vld [vmem:[%s0 + $0x230] sm:$0xff]
  %v218 = vld [vmem:[%s0 + $0x238] sm:$0xff]
  %v219 = vld [vmem:[%s0 + $0x240] sm:$0xff]
  %v220 = vld [vmem:[%s0 + $0x248] sm:$0xff]
  %v221 = vld [vmem:[%s0 + $0x250] sm:$0xff]
  %v222 = vld [vmem:[%s0 + $0x258] sm:$0xff]
  %v223 = vld [vmem:[%s0 + $0x260] sm:$0xff]
  %v224 = vld [vmem:[%s0 + $0x268] sm:$0xff]
  %v225 = vld [vmem:[%s0 + $0x270] sm:$0xff]
  %v226 = vld [vmem:[%s0 + $0x278] sm:$0xff]
  %v227 = vld [vmem:[%s0 + $0x280] sm:$0xff]
  %v228 = vld [vmem:[%s0 + $0x288] sm:$0xff]
  %v229 = vld [vmem:[%s0 + $0x290] sm:$0xff]
  %v230 = vld [vmem:[%s0 + $0x298] sm:$0xff]
  %v231 = vld [vmem:[%s0 + $0x2a0] sm:$0xff]
  %v232 = vld [vmem:[%s0 + $0x2a8] sm:$0xff]
  %v233 = vld [vmem:[%s0 + $0x2b0] sm:$0xff]
  %v234 = vld [vmem:[%s0 + $0x2b8] sm:$0xff]
  %v235 = vld [vmem:[%s0 + $0x2c0] sm:$0xff]
  %v236 = vld [vmem:[%s0 + $0x2c8] sm:$0xff]
  %v237 = vld [vmem:[%s0 + $0x2d0] sm:$0xff]
  %v238 = vld [vmem:[%s0 + $0x2d8] sm:$0xff]
  %v239 = vld [vmem:[%s0 + $0x2e0] sm:$0xff]
  %v240 = vld [vmem:[%s0 + $0x2e8] sm:$0xff]
  %v241 = vld [vmem:[%s0 + $0x2f0] sm:$0xff]
  %v242 = vld [vmem:[%s0 + $0x2f8] sm:$0xff]
  %v243 = vld [vmem:[%s0 + $0x300] sm:$0xff]
  %v244 = vld [vmem:[%s0 + $0x308] sm:$0xff]
  %v245 = vld [vmem:[%s0 + $0x310] sm:$0xff]
  %v246 = vld [vmem:[%s0 + $0x318] sm:$0xff]
  %v247 = vld [vmem:[%s0 + $0x320] sm:$0xff]
  %v248 = vld [vmem:[%s0 + $0x328] sm:$0xff]
  %v249 = vld [vmem:[%s0 + $0x330] sm:$0xff]
  %v250 = vld [vmem:[%s0 + $0x338] sm:$0xff]
  %v251 = vld [vmem:[%s0 + $0x340] sm:$0xff]
  %v252 = vld [vmem:[%s0 + $0x348] sm:$0xff]
  %v253 = vld [vmem:[%s0 + $0x350] sm:$0xff]
  %v254 = vld [vmem:[%s0 + $0x358] sm:$0xff]
  %v255 = vld [vmem:[%s0 + $0x360] sm:$0xff]
  %v256 = vld [vmem:[%s0 + $0x368] sm:$0xff]
  %v257 = vld [vmem:[%s0 + $0x370] sm:$0xff]
  %v258 = vld [vmem:[%s0 + $0x378] sm:$0xff]
  %v259 = vld [vmem:[%s0 + $0x380] sm:$0xff]
  %v260 = vld [vmem:[%s0 + $0x388] sm:$0xff]
  %v261 = vld [vmem:[%s0 + $0x390] sm:$0xff]
  %v262 = vld [vmem:[%s0 + $0x398] sm:$0xff]
  %v263 = vld [vmem:[%s0 + $0x3a0] sm:$0xff]
  %v264 = vld [vmem:[%s0 + $0x3a8] sm:$0xff]
  %v265 = vld [vmem:[%s0 + $0x3b0] sm:$0xff]
  %v266 = vld [vmem:[%s0 + $0x3b8] sm:$0xff]
  %v267 = vld [vmem:[%s0 + $0x3c0] sm:$0xff]
  %v268 = vld [vmem:[%s0 + $0x3c8] sm:$0xff]
  %v269 = vld [vmem:[%s0 + $0x3d0] sm:$0xff]
  %v270 = vld [vmem:[%s0 + $0x3d8] sm:$0xff]
  %v271 = vld [vmem:[%s0 + $0x3e0] sm:$0xff]
  %v272 = vld [vmem:[%s0 + $0x3e8] sm:$0xff]
  %v273 = vld [vmem:[%s0 + $0x3f0] sm:$0xff]
  %v274 = vld [vmem:[%s0 + $0x3f8] sm:$0xff]
  %v275 = vld [vmem:[%s1] sm:$0xf]
  %v276 = vld [vmem:[%s1 + $0x4] sm:$0xf]
  %v277 = vld [vmem:[%s1 + $0x8] sm:$0xf]
  %v278 = vld [vmem:[%s1 + $0xc] sm:$0xf]
  %v279 = vld [vmem:[%s1 + $0x10] sm:$0xf]
  %v280 = vld [vmem:[%s1 + $0x14] sm:$0xf]
  %v281 = vld [vmem:[%s1 + $0x18] sm:$0xf]
  %v282 = vld [vmem:[%s1 + $0x1c] sm:$0xf]
  %v283 = vld [vmem:[%s1 + $0x20] sm:$0xf]
  %v284 = vld [vmem:[%s1 + $0x24] sm:$0xf]
  %v285 = vld [vmem:[%s1 + $0x28] sm:$0xf]
  %v286 = vld [vmem:[%s1 + $0x2c] sm:$0xf]
  %v287 = vld [vmem:[%s1 + $0x30] sm:$0xf]
  %v288 = vld [vmem:[%s1 + $0x34] sm:$0xf]
  %v289 = vld [vmem:[%s1 + $0x38] sm:$0xf]
  %v290 = vld [vmem:[%s1 + $0x3c] sm:$0xf]
  %v291 = vld [vmem:[%s1 + $0x40] sm:$0xf]
  %v292 = vld [vmem:[%s1 + $0x44] sm:$0xf]
  %v293 = vld [vmem:[%s1 + $0x48] sm:$0xf]
  %v294 = vld [vmem:[%s1 + $0x4c] sm:$0xf]
  %v295 = vld [vmem:[%s1 + $0x50] sm:$0xf]
  %v296 = vld [vmem:[%s1 + $0x54] sm:$0xf]
  %v297 = vld [vmem:[%s1 + $0x58] sm:$0xf]
  %v298 = vld [vmem:[%s1 + $0x5c] sm:$0xf]
  %v299 = vld [vmem:[%s1 + $0x60] sm:$0xf]
  %v300 = vld [vmem:[%s1 + $0x64] sm:$0xf]
  %v301 = vld [vmem:[%s1 + $0x68] sm:$0xf]
  %v302 = vld [vmem:[%s1 + $0x6c] sm:$0xf]
  %v303 = vld [vmem:[%s1 + $0x70] sm:$0xf]
  %v304 = vld [vmem:[%s1 + $0x74] sm:$0xf]
  %v305 = vld [vmem:[%s1 + $0x78] sm:$0xf]
  %v306 = vld [vmem:[%s1 + $0x7c] sm:$0xf]
  %v307 = vld [vmem:[%s1 + $0x80] sm:$0xf]
  %v308 = vld [vmem:[%s1 + $0x84] sm:$0xf]
  %v309 = vld [vmem:[%s1 + $0x88] sm:$0xf]
  %v310 = vld [vmem:[%s1 + $0x8c] sm:$0xf]
  %v311 = vld [vmem:[%s1 + $0x90] sm:$0xf]
  %v312 = vld [vmem:[%s1 + $0x94] sm:$0xf]
  %v313 = vld [vmem:[%s1 + $0x98] sm:$0xf]
  %v314 = vld [vmem:[%s1 + $0x9c] sm:$0xf]
  %v315 = vld [vmem:[%s1 + $0xa0] sm:$0xf]
  %v316 = vld [vmem:[%s1 + $0xa4] sm:$0xf]
  %v317 = vld [vmem:[%s1 + $0xa8] sm:$0xf]
  %v318 = vld [vmem:[%s1 + $0xac] sm:$0xf]
  %v319 = vld [vmem:[%s1 + $0xb0] sm:$0xf]
  %v320 = vld [vmem:[%s1 + $0xb4] sm:$0xf]
  %v321 = vld [vmem:[%s1 + $0xb8] sm:$0xf]
  %v322 = vld [vmem:[%s1 + $0xbc] sm:$0xf]
  %v323 = vld [vmem:[%s1 + $0xc0] sm:$0xf]
  %v324 = vld [vmem:[%s1 + $0xc4] sm:$0xf]
  %v325 = vld [vmem:[%s1 + $0xc8] sm:$0xf]
  %v326 = vld [vmem:[%s1 + $0xcc] sm:$0xf]
  %v327 = vld [vmem:[%s1 + $0xd0] sm:$0xf]
  %v328 = vld [vmem:[%s1 + $0xd4] sm:$0xf]
  %v329 = vld [vmem:[%s1 + $0xd8] sm:$0xf]
  %v330 = vld [vmem:[%s1 + $0xdc] sm:$0xf]
  %v331 = vld [vmem:[%s1 + $0xe0] sm:$0xf]
  %v332 = vld [vmem:[%s1 + $0xe4] sm:$0xf]
  %v333 = vld [vmem:[%s1 + $0xe8] sm:$0xf]
  %v334 = vld [vmem:[%s1 + $0xec] sm:$0xf]
  %v335 = vld [vmem:[%s1 + $0xf0] sm:$0xf]
  %v336 = vld [vmem:[%s1 + $0xf4] sm:$0xf]
  %v337 = vld [vmem:[%s1 + $0xf8] sm:$0xf]
  %v338 = vld [vmem:[%s1 + $0xfc] sm:$0xf]
  %v467 = vunpack.c.l.b16 %v147
  %v468 = vunpack.c.h.b16 %v147
  %v469 = vunpack.c.l.b16 %v148
  %v470 = vunpack.c.h.b16 %v148
  %v471 = vunpack.c.l.b16 %v149
  %v472 = vunpack.c.h.b16 %v149
  %v473 = vunpack.c.l.b16 %v150
  %v474 = vunpack.c.h.b16 %v150
  %v475 = vunpack.c.l.b16 %v151
  %v476 = vunpack.c.h.b16 %v151
  %v477 = vunpack.c.l.b16 %v152
  %v478 = vunpack.c.h.b16 %v152
  %v479 = vunpack.c.l.b16 %v153
  %v480 = vunpack.c.h.b16 %v153
  %v481 = vunpack.c.l.b16 %v154
  %v482 = vunpack.c.h.b16 %v154
  %v483 = vunpack.c.l.b16 %v155
  %v484 = vunpack.c.h.b16 %v155
  %v485 = vunpack.c.l.b16 %v156
  %v486 = vunpack.c.h.b16 %v156
  %v487 = vunpack.c.l.b16 %v157
  %v488 = vunpack.c.h.b16 %v157
  %v489 = vunpack.c.l.b16 %v158
  %v490 = vunpack.c.h.b16 %v158
  %v491 = vunpack.c.l.b16 %v159
  %v492 = vunpack.c.h.b16 %v159
  %v493 = vunpack.c.l.b16 %v160
  %v494 = vunpack.c.h.b16 %v160
  %v495 = vunpack.c.l.b16 %v161
  %v496 = vunpack.c.h.b16 %v161
  %v497 = vunpack.c.l.b16 %v162
  %v498 = vunpack.c.h.b16 %v162
  %v499 = vunpack.c.l.b16 %v163
  %v500 = vunpack.c.h.b16 %v163
  %v501 = vunpack.c.l.b16 %v164
  %v502 = vunpack.c.h.b16 %v164
  %v503 = vunpack.c.l.b16 %v165
  %v504 = vunpack.c.h.b16 %v165
  %v505 = vunpack.c.l.b16 %v166
  %v506 = vunpack.c.h.b16 %v166
  %v507 = vunpack.c.l.b16 %v167
  %v508 = vunpack.c.h.b16 %v167
  %v509 = vunpack.c.l.b16 %v168
  %v510 = vunpack.c.h.b16 %v168
  %v511 = vunpack.c.l.b16 %v169
  %v512 = vunpack.c.h.b16 %v169
  %v513 = vunpack.c.l.b16 %v170
  %v514 = vunpack.c.h.b16 %v170
  %v515 = vunpack.c.l.b16 %v171
  %v516 = vunpack.c.h.b16 %v171
  %v517 = vunpack.c.l.b16 %v172
  %v518 = vunpack.c.h.b16 %v172
  %v519 = vunpack.c.l.b16 %v173
  %v520 = vunpack.c.h.b16 %v173
  %v521 = vunpack.c.l.b16 %v174
  %v522 = vunpack.c.h.b16 %v174
  %v523 = vunpack.c.l.b16 %v175
  %v524 = vunpack.c.h.b16 %v175
  %v525 = vunpack.c.l.b16 %v176
  %v526 = vunpack.c.h.b16 %v176
  %v527 = vunpack.c.l.b16 %v177
  %v528 = vunpack.c.h.b16 %v177
  %v529 = vunpack.c.l.b16 %v178
  %v530 = vunpack.c.h.b16 %v178
  %v531 = vunpack.c.l.b16 %v179
  %v532 = vunpack.c.h.b16 %v179
  %v533 = vunpack.c.l.b16 %v180
  %v534 = vunpack.c.h.b16 %v180
  %v535 = vunpack.c.l.b16 %v181
  %v536 = vunpack.c.h.b16 %v181
  %v537 = vunpack.c.l.b16 %v182
  %v538 = vunpack.c.h.b16 %v182
  %v539 = vunpack.c.l.b16 %v183
  %v540 = vunpack.c.h.b16 %v183
  %v541 = vunpack.c.l.b16 %v184
  %v542 = vunpack.c.h.b16 %v184
  %v543 = vunpack.c.l.b16 %v185
  %v544 = vunpack.c.h.b16 %v185
  %v545 = vunpack.c.l.b16 %v186
  %v546 = vunpack.c.h.b16 %v186
  %v547 = vunpack.c.l.b16 %v187
  %v548 = vunpack.c.h.b16 %v187
  %v549 = vunpack.c.l.b16 %v188
  %v550 = vunpack.c.h.b16 %v188
  %v551 = vunpack.c.l.b16 %v189
  %v552 = vunpack.c.h.b16 %v189
  %v553 = vunpack.c.l.b16 %v190
  %v554 = vunpack.c.h.b16 %v190
  %v555 = vunpack.c.l.b16 %v191
  %v556 = vunpack.c.h.b16 %v191
  %v557 = vunpack.c.l.b16 %v192
  %v558 = vunpack.c.h.b16 %v192
  %v559 = vunpack.c.l.b16 %v193
  %v560 = vunpack.c.h.b16 %v193
  %v561 = vunpack.c.l.b16 %v194
  %v562 = vunpack.c.h.b16 %v194
  %v563 = vunpack.c.l.b16 %v195
  %v564 = vunpack.c.h.b16 %v195
  %v565 = vunpack.c.l.b16 %v196
  %v566 = vunpack.c.h.b16 %v196
  %v567 = vunpack.c.l.b16 %v197
  %v568 = vunpack.c.h.b16 %v197
  %v569 = vunpack.c.l.b16 %v198
  %v570 = vunpack.c.h.b16 %v198
  %v571 = vunpack.c.l.b16 %v199
  %v572 = vunpack.c.h.b16 %v199
  %v573 = vunpack.c.l.b16 %v200
  %v574 = vunpack.c.h.b16 %v200
  %v575 = vunpack.c.l.b16 %v201
  %v576 = vunpack.c.h.b16 %v201
  %v577 = vunpack.c.l.b16 %v202
  %v578 = vunpack.c.h.b16 %v202
  %v579 = vunpack.c.l.b16 %v203
  %v580 = vunpack.c.h.b16 %v203
  %v581 = vunpack.c.l.b16 %v204
  %v582 = vunpack.c.h.b16 %v204
  %v583 = vunpack.c.l.b16 %v205
  %v584 = vunpack.c.h.b16 %v205
  %v585 = vunpack.c.l.b16 %v206
  %v586 = vunpack.c.h.b16 %v206
  %v587 = vunpack.c.l.b16 %v207
  %v588 = vunpack.c.h.b16 %v207
  %v589 = vunpack.c.l.b16 %v208
  %v590 = vunpack.c.h.b16 %v208
  %v591 = vunpack.c.l.b16 %v209
  %v592 = vunpack.c.h.b16 %v209
  %v593 = vunpack.c.l.b16 %v210
  %v594 = vunpack.c.h.b16 %v210
  %v595 = vunpack.c.l.b16 %v211
  %v596 = vunpack.c.h.b16 %v211
  %v597 = vunpack.c.l.b16 %v212
  %v598 = vunpack.c.h.b16 %v212
  %v599 = vunpack.c.l.b16 %v213
  %v600 = vunpack.c.h.b16 %v213
  %v601 = vunpack.c.l.b16 %v214
  %v602 = vunpack.c.h.b16 %v214
  %v603 = vunpack.c.l.b16 %v215
  %v604 = vunpack.c.h.b16 %v215
  %v605 = vunpack.c.l.b16 %v216
  %v606 = vunpack.c.h.b16 %v216
  %v607 = vunpack.c.l.b16 %v217
  %v608 = vunpack.c.h.b16 %v217
  %v609 = vunpack.c.l.b16 %v218
  %v610 = vunpack.c.h.b16 %v218
  %v611 = vunpack.c.l.b16 %v219
  %v612 = vunpack.c.h.b16 %v219
  %v613 = vunpack.c.l.b16 %v220
  %v614 = vunpack.c.h.b16 %v220
  %v615 = vunpack.c.l.b16 %v221
  %v616 = vunpack.c.h.b16 %v221
  %v617 = vunpack.c.l.b16 %v222
  %v618 = vunpack.c.h.b16 %v222
  %v619 = vunpack.c.l.b16 %v223
  %v620 = vunpack.c.h.b16 %v223
  %v621 = vunpack.c.l.b16 %v224
  %v622 = vunpack.c.h.b16 %v224
  %v623 = vunpack.c.l.b16 %v225
  %v624 = vunpack.c.h.b16 %v225
  %v625 = vunpack.c.l.b16 %v226
  %v626 = vunpack.c.h.b16 %v226
  %v627 = vunpack.c.l.b16 %v227
  %v628 = vunpack.c.h.b16 %v227
  %v629 = vunpack.c.l.b16 %v228
  %v630 = vunpack.c.h.b16 %v228
  %v631 = vunpack.c.l.b16 %v229
  %v632 = vunpack.c.h.b16 %v229
  %v633 = vunpack.c.l.b16 %v230
  %v634 = vunpack.c.h.b16 %v230
  %v635 = vunpack.c.l.b16 %v231
  %v636 = vunpack.c.h.b16 %v231
  %v637 = vunpack.c.l.b16 %v232
  %v638 = vunpack.c.h.b16 %v232
  %v639 = vunpack.c.l.b16 %v233
  %v640 = vunpack.c.h.b16 %v233
  %v641 = vunpack.c.l.b16 %v234
  %v642 = vunpack.c.h.b16 %v234
  %v643 = vunpack.c.l.b16 %v235
  %v644 = vunpack.c.h.b16 %v235
  %v645 = vunpack.c.l.b16 %v236
  %v646 = vunpack.c.h.b16 %v236
  %v647 = vunpack.c.l.b16 %v237
  %v648 = vunpack.c.h.b16 %v237
  %v649 = vunpack.c.l.b16 %v238
  %v650 = vunpack.c.h.b16 %v238
  %v651 = vunpack.c.l.b16 %v239
  %v652 = vunpack.c.h.b16 %v239
  %v653 = vunpack.c.l.b16 %v240
  %v654 = vunpack.c.h.b16 %v240
  %v655 = vunpack.c.l.b16 %v241
  %v656 = vunpack.c.h.b16 %v241
  %v657 = vunpack.c.l.b16 %v242
  %v658 = vunpack.c.h.b16 %v242
  %v659 = vunpack.c.l.b16 %v243
  %v660 = vunpack.c.h.b16 %v243
  %v661 = vunpack.c.l.b16 %v244
  %v662 = vunpack.c.h.b16 %v244
  %v663 = vunpack.c.l.b16 %v245
  %v664 = vunpack.c.h.b16 %v245
  %v665 = vunpack.c.l.b16 %v246
  %v666 = vunpack.c.h.b16 %v246
  %v667 = vunpack.c.l.b16 %v247
  %v668 = vunpack.c.h.b16 %v247
  %v669 = vunpack.c.l.b16 %v248
  %v670 = vunpack.c.h.b16 %v248
  %v671 = vunpack.c.l.b16 %v249
  %v672 = vunpack.c.h.b16 %v249
  %v673 = vunpack.c.l.b16 %v250
  %v674 = vunpack.c.h.b16 %v250
  %v675 = vunpack.c.l.b16 %v251
  %v676 = vunpack.c.h.b16 %v251
  %v677 = vunpack.c.l.b16 %v252
  %v678 = vunpack.c.h.b16 %v252
  %v679 = vunpack.c.l.b16 %v253
  %v680 = vunpack.c.h.b16 %v253
  %v681 = vunpack.c.l.b16 %v254
  %v682 = vunpack.c.h.b16 %v254
  %v683 = vunpack.c.l.b16 %v255
  %v684 = vunpack.c.h.b16 %v255
  %v685 = vunpack.c.l.b16 %v256
  %v686 = vunpack.c.h.b16 %v256
  %v687 = vunpack.c.l.b16 %v257
  %v688 = vunpack.c.h.b16 %v257
  %v689 = vunpack.c.l.b16 %v258
  %v690 = vunpack.c.h.b16 %v258
  %v691 = vunpack.c.l.b16 %v259
  %v692 = vunpack.c.h.b16 %v259
  %v693 = vunpack.c.l.b16 %v260
  %v694 = vunpack.c.h.b16 %v260
  %v695 = vunpack.c.l.b16 %v261
  %v696 = vunpack.c.h.b16 %v261
  %v697 = vunpack.c.l.b16 %v262
  %v698 = vunpack.c.h.b16 %v262
  %v699 = vunpack.c.l.b16 %v263
  %v700 = vunpack.c.h.b16 %v263
  %v701 = vunpack.c.l.b16 %v264
  %v702 = vunpack.c.h.b16 %v264
  %v703 = vunpack.c.l.b16 %v265
  %v704 = vunpack.c.h.b16 %v265
  %v705 = vunpack.c.l.b16 %v266
  %v706 = vunpack.c.h.b16 %v266
  %v707 = vunpack.c.l.b16 %v267
  %v708 = vunpack.c.h.b16 %v267
  %v709 = vunpack.c.l.b16 %v268
  %v710 = vunpack.c.h.b16 %v268
  %v711 = vunpack.c.l.b16 %v269
  %v712 = vunpack.c.h.b16 %v269
  %v713 = vunpack.c.l.b16 %v270
  %v714 = vunpack.c.h.b16 %v270
  %v715 = vunpack.c.l.b16 %v271
  %v716 = vunpack.c.h.b16 %v271
  %v717 = vunpack.c.l.b16 %v272
  %v718 = vunpack.c.h.b16 %v272
  %v719 = vunpack.c.l.b16 %v273
  %v720 = vunpack.c.h.b16 %v273
  %v721 = vunpack.c.l.b16 %v274
  %v722 = vunpack.c.h.b16 %v274
  %v723 = vpack.c.b16 %v471, %v467
  %v724 = vpack.c.b16 %v472, %v468
  %v725 = vpack.c.b16 %v473, %v469
  %v726 = vpack.c.b16 %v474, %v470
  %v727 = vpack.c.b16 %v479, %v475
  %v728 = vpack.c.b16 %v480, %v476
  %v729 = vpack.c.b16 %v481, %v477
  %v730 = vpack.c.b16 %v482, %v478
  %v731 = vpack.c.b16 %v487, %v483
  %v732 = vpack.c.b16 %v488, %v484
  %v733 = vpack.c.b16 %v489, %v485
  %v734 = vpack.c.b16 %v490, %v486
  %v735 = vpack.c.b16 %v495, %v491
  %v736 = vpack.c.b16 %v496, %v492
  %v737 = vpack.c.b16 %v497, %v493
  %v738 = vpack.c.b16 %v498, %v494
  %v739 = vpack.c.b16 %v503, %v499
  %v740 = vpack.c.b16 %v504, %v500
  %v741 = vpack.c.b16 %v505, %v501
  %v742 = vpack.c.b16 %v506, %v502
  %v743 = vpack.c.b16 %v511, %v507
  %v744 = vpack.c.b16 %v512, %v508
  %v745 = vpack.c.b16 %v513, %v509
  %v746 = vpack.c.b16 %v514, %v510
  %v747 = vpack.c.b16 %v519, %v515
  %v748 = vpack.c.b16 %v520, %v516
  %v749 = vpack.c.b16 %v521, %v517
  %v750 = vpack.c.b16 %v522, %v518
  %v751 = vpack.c.b16 %v527, %v523
  %v752 = vpack.c.b16 %v528, %v524
  %v753 = vpack.c.b16 %v529, %v525
  %v754 = vpack.c.b16 %v530, %v526
  %v755 = vpack.c.b16 %v535, %v531
  %v756 = vpack.c.b16 %v536, %v532
  %v757 = vpack.c.b16 %v537, %v533
  %v758 = vpack.c.b16 %v538, %v534
  %v759 = vpack.c.b16 %v543, %v539
  %v760 = vpack.c.b16 %v544, %v540
  %v761 = vpack.c.b16 %v545, %v541
  %v762 = vpack.c.b16 %v546, %v542
  %v763 = vpack.c.b16 %v551, %v547
  %v764 = vpack.c.b16 %v552, %v548
  %v765 = vpack.c.b16 %v553, %v549
  %v766 = vpack.c.b16 %v554, %v550
  %v767 = vpack.c.b16 %v559, %v555
  %v768 = vpack.c.b16 %v560, %v556
  %v769 = vpack.c.b16 %v561, %v557
  %v770 = vpack.c.b16 %v562, %v558
  %v771 = vpack.c.b16 %v567, %v563
  %v772 = vpack.c.b16 %v568, %v564
  %v773 = vpack.c.b16 %v569, %v565
  %v774 = vpack.c.b16 %v570, %v566
  %v775 = vpack.c.b16 %v575, %v571
  %v776 = vpack.c.b16 %v576, %v572
  %v777 = vpack.c.b16 %v577, %v573
  %v778 = vpack.c.b16 %v578, %v574
  %v779 = vpack.c.b16 %v583, %v579
  %v780 = vpack.c.b16 %v584, %v580
  %v781 = vpack.c.b16 %v585, %v581
  %v782 = vpack.c.b16 %v586, %v582
  %v783 = vpack.c.b16 %v591, %v587
  %v784 = vpack.c.b16 %v592, %v588
  %v785 = vpack.c.b16 %v593, %v589
  %v786 = vpack.c.b16 %v594, %v590
  %v787 = vpack.c.b16 %v599, %v595
  %v788 = vpack.c.b16 %v600, %v596
  %v789 = vpack.c.b16 %v601, %v597
  %v790 = vpack.c.b16 %v602, %v598
  %v791 = vpack.c.b16 %v607, %v603
  %v792 = vpack.c.b16 %v608, %v604
  %v793 = vpack.c.b16 %v609, %v605
  %v794 = vpack.c.b16 %v610, %v606
  %v795 = vpack.c.b16 %v615, %v611
  %v796 = vpack.c.b16 %v616, %v612
  %v797 = vpack.c.b16 %v617, %v613
  %v798 = vpack.c.b16 %v618, %v614
  %v799 = vpack.c.b16 %v623, %v619
  %v800 = vpack.c.b16 %v624, %v620
  %v801 = vpack.c.b16 %v625, %v621
  %v802 = vpack.c.b16 %v626, %v622
  %v803 = vpack.c.b16 %v631, %v627
  %v804 = vpack.c.b16 %v632, %v628
  %v805 = vpack.c.b16 %v633, %v629
  %v806 = vpack.c.b16 %v634, %v630
  %v807 = vpack.c.b16 %v639, %v635
  %v808 = vpack.c.b16 %v640, %v636
  %v809 = vpack.c.b16 %v641, %v637
  %v810 = vpack.c.b16 %v642, %v638
  %v811 = vpack.c.b16 %v647, %v643
  %v812 = vpack.c.b16 %v648, %v644
  %v813 = vpack.c.b16 %v649, %v645
  %v814 = vpack.c.b16 %v650, %v646
  %v815 = vpack.c.b16 %v655, %v651
  %v816 = vpack.c.b16 %v656, %v652
  %v817 = vpack.c.b16 %v657, %v653
  %v818 = vpack.c.b16 %v658, %v654
  %v819 = vpack.c.b16 %v663, %v659
  %v820 = vpack.c.b16 %v664, %v660
  %v821 = vpack.c.b16 %v665, %v661
  %v822 = vpack.c.b16 %v666, %v662
  %v823 = vpack.c.b16 %v671, %v667
  %v824 = vpack.c.b16 %v672, %v668
  %v825 = vpack.c.b16 %v673, %v669
  %v826 = vpack.c.b16 %v674, %v670
  %v827 = vpack.c.b16 %v679, %v675
  %v828 = vpack.c.b16 %v680, %v676
  %v829 = vpack.c.b16 %v681, %v677
  %v830 = vpack.c.b16 %v682, %v678
  %v831 = vpack.c.b16 %v687, %v683
  %v832 = vpack.c.b16 %v688, %v684
  %v833 = vpack.c.b16 %v689, %v685
  %v834 = vpack.c.b16 %v690, %v686
  %v835 = vpack.c.b16 %v695, %v691
  %v836 = vpack.c.b16 %v696, %v692
  %v837 = vpack.c.b16 %v697, %v693
  %v838 = vpack.c.b16 %v698, %v694
  %v839 = vpack.c.b16 %v703, %v699
  %v840 = vpack.c.b16 %v704, %v700
  %v841 = vpack.c.b16 %v705, %v701
  %v842 = vpack.c.b16 %v706, %v702
  %v843 = vpack.c.b16 %v711, %v707
  %v844 = vpack.c.b16 %v712, %v708
  %v845 = vpack.c.b16 %v713, %v709
  %v846 = vpack.c.b16 %v714, %v710
  %v847 = vpack.c.b16 %v719, %v715
  %v848 = vpack.c.b16 %v720, %v716
  %v849 = vpack.c.b16 %v721, %v717
  %v850 = vpack.c.b16 %v722, %v718
  %v1043 = vunpack.c.l.b16 %v275
  %v1044 = vunpack.c.l.b16 %v276
  %v1045 = vunpack.c.l.b16 %v277
  %v1046 = vunpack.c.l.b16 %v278
  %v1047 = vunpack.c.l.b16 %v279
  %v1048 = vunpack.c.l.b16 %v280
  %v1049 = vunpack.c.l.b16 %v281
  %v1050 = vunpack.c.l.b16 %v282
  %v1051 = vunpack.c.l.b16 %v283
  %v1052 = vunpack.c.l.b16 %v284
  %v1053 = vunpack.c.l.b16 %v285
  %v1054 = vunpack.c.l.b16 %v286
  %v1055 = vunpack.c.l.b16 %v287
  %v1056 = vunpack.c.l.b16 %v288
  %v1057 = vunpack.c.l.b16 %v289
  %v1058 = vunpack.c.l.b16 %v290
  %v1059 = vunpack.c.l.b16 %v291
  %v1060 = vunpack.c.l.b16 %v292
  %v1061 = vunpack.c.l.b16 %v293
  %v1062 = vunpack.c.l.b16 %v294
  %v1063 = vunpack.c.l.b16 %v295
  %v1064 = vunpack.c.l.b16 %v296
  %v1065 = vunpack.c.l.b16 %v297
  %v1066 = vunpack.c.l.b16 %v298
  %v1067 = vunpack.c.l.b16 %v299
  %v1068 = vunpack.c.l.b16 %v300
  %v1069 = vunpack.c.l.b16 %v301
  %v1070 = vunpack.c.l.b16 %v302
  %v1071 = vunpack.c.l.b16 %v303
  %v1072 = vunpack.c.l.b16 %v304
  %v1073 = vunpack.c.l.b16 %v305
  %v1074 = vunpack.c.l.b16 %v306
  %v1075 = vunpack.c.l.b16 %v307
  %v1076 = vunpack.c.l.b16 %v308
  %v1077 = vunpack.c.l.b16 %v309
  %v1078 = vunpack.c.l.b16 %v310
  %v1079 = vunpack.c.l.b16 %v311
  %v1080 = vunpack.c.l.b16 %v312
  %v1081 = vunpack.c.l.b16 %v313
  %v1082 = vunpack.c.l.b16 %v314
  %v1083 = vunpack.c.l.b16 %v315
  %v1084 = vunpack.c.l.b16 %v316
  %v1085 = vunpack.c.l.b16 %v317
  %v1086 = vunpack.c.l.b16 %v318
  %v1087 = vunpack.c.l.b16 %v319
  %v1088 = vunpack.c.l.b16 %v320
  %v1089 = vunpack.c.l.b16 %v321
  %v1090 = vunpack.c.l.b16 %v322
  %v1091 = vunpack.c.l.b16 %v323
  %v1092 = vunpack.c.l.b16 %v324
  %v1093 = vunpack.c.l.b16 %v325
  %v1094 = vunpack.c.l.b16 %v326
  %v1095 = vunpack.c.l.b16 %v327
  %v1096 = vunpack.c.l.b16 %v328
  %v1097 = vunpack.c.l.b16 %v329
  %v1098 = vunpack.c.l.b16 %v330
  %v1099 = vunpack.c.l.b16 %v331
  %v1100 = vunpack.c.l.b16 %v332
  %v1101 = vunpack.c.l.b16 %v333
  %v1102 = vunpack.c.l.b16 %v334
  %v1103 = vunpack.c.l.b16 %v335
  %v1104 = vunpack.c.l.b16 %v336
  %v1105 = vunpack.c.l.b16 %v337
  %v1106 = vunpack.c.l.b16 %v338
  %v1107 = vpack.c.b16 %v1044, %v1043
  %v1108 = vpack.c.b16 %v1046, %v1045
  %v1109 = vpack.c.b16 %v1048, %v1047
  %v1110 = vpack.c.b16 %v1050, %v1049
  %v1111 = vpack.c.b16 %v1052, %v1051
  %v1112 = vpack.c.b16 %v1054, %v1053
  %v1113 = vpack.c.b16 %v1056, %v1055
  %v1114 = vpack.c.b16 %v1058, %v1057
  %v1115 = vpack.c.b16 %v1060, %v1059
  %v1116 = vpack.c.b16 %v1062, %v1061
  %v1117 = vpack.c.b16 %v1064, %v1063
  %v1118 = vpack.c.b16 %v1066, %v1065
  %v1119 = vpack.c.b16 %v1068, %v1067
  %v1120 = vpack.c.b16 %v1070, %v1069
  %v1121 = vpack.c.b16 %v1072, %v1071
  %v1122 = vpack.c.b16 %v1074, %v1073
  %v1123 = vpack.c.b16 %v1076, %v1075
  %v1124 = vpack.c.b16 %v1078, %v1077
  %v1125 = vpack.c.b16 %v1080, %v1079
  %v1126 = vpack.c.b16 %v1082, %v1081
  %v1127 = vpack.c.b16 %v1084, %v1083
  %v1128 = vpack.c.b16 %v1086, %v1085
  %v1129 = vpack.c.b16 %v1088, %v1087
  %v1130 = vpack.c.b16 %v1090, %v1089
  %v1131 = vpack.c.b16 %v1092, %v1091
  %v1132 = vpack.c.b16 %v1094, %v1093
  %v1133 = vpack.c.b16 %v1096, %v1095
  %v1134 = vpack.c.b16 %v1098, %v1097
  %v1135 = vpack.c.b16 %v1100, %v1099
  %v1136 = vpack.c.b16 %v1102, %v1101
  %v1137 = vpack.c.b16 %v1104, %v1103
  %v1138 = vpack.c.b16 %v1106, %v1105
  %1171 = vmatprep.subr.bf16.mxu0 0
  %1172 = vmatpush1.bf16.msra.mxu0 %v1107
  %1173 = vmatprep.subr.bf16.mxu0 0
  %1174 = vmatpush1.bf16.msra.mxu0 %v1108
  %1175 = vmatprep.subr.bf16.mxu0 0
  %1176 = vmatpush1.bf16.msra.mxu0 %v1109
  %1177 = vmatprep.subr.bf16.mxu0 0
  %1178 = vmatpush1.bf16.msra.mxu0 %v1110
  %1179 = vmatprep.subr.bf16.mxu0 0
  %1180 = vmatpush1.bf16.msra.mxu0 %v1111
  %1181 = vmatprep.subr.bf16.mxu0 0
  %1182 = vmatpush1.bf16.msra.mxu0 %v1112
  %1183 = vmatprep.subr.bf16.mxu0 0
  %1184 = vmatpush1.bf16.msra.mxu0 %v1113
  %1185 = vmatprep.subr.bf16.mxu0 0
  %1186 = vmatpush1.bf16.msra.mxu0 %v1114
  %1187 = vmatprep.subr.bf16.mxu0 0
  %1188 = vmatpush1.bf16.msra.mxu0 %v1115
  %1189 = vmatprep.subr.bf16.mxu0 0
  %1190 = vmatpush1.bf16.msra.mxu0 %v1116
  %1191 = vmatprep.subr.bf16.mxu0 0
  %1192 = vmatpush1.bf16.msra.mxu0 %v1117
  %1193 = vmatprep.subr.bf16.mxu0 0
  %1194 = vmatpush1.bf16.msra.mxu0 %v1118
  %1195 = vmatprep.subr.bf16.mxu0 0
  %1196 = vmatpush1.bf16.msra.mxu0 %v1119
  %1197 = vmatprep.subr.bf16.mxu0 0
  %1198 = vmatpush1.bf16.msra.mxu0 %v1120
  %1199 = vmatprep.subr.bf16.mxu0 0
  %1200 = vmatpush1.bf16.msra.mxu0 %v1121
  %1201 = vmatprep.subr.bf16.mxu0 0
  %1202 = vmatpush1.bf16.msra.mxu0 %v1122
  %1203 = vmatprep.mubr.bf16.mxu0 %v724
  %1204 = vmatmul.mubr.bf16.gmra.mrb[0].mxu0 %v723
  %v1205 = vpop.f32.mrb[0].mxu0
  %v1206 = vadd.f32 0.0, %v1205
  %v1207 = vpop.f32.mrb[0].mxu0
  %v1208 = vpop.f32.mrb[0].mxu0
  %v1209 = vadd.f32 0.0, %v1208
  %v1210 = vpop.f32.mrb[0].mxu0
  %1211 = vmatprep.mubr.bf16.mxu0 %v728
  %1212 = vmatmul.mubr.bf16.gmra.mrb[0].mxu0 %v727
  %v1213 = vpop.f32.mrb[0].mxu0
  %v1214 = vadd.f32 0.0, %v1213
  %v1215 = vpop.f32.mrb[0].mxu0
  %v1216 = vpop.f32.mrb[0].mxu0
  %v1217 = vadd.f32 0.0, %v1216
  %v1218 = vpop.f32.mrb[0].mxu0
  %1219 = vmatprep.mubr.bf16.mxu0 %v732
  %1220 = vmatmul.mubr.bf16.gmra.mrb[0].mxu0 %v731
  %v1221 = vpop.f32.mrb[0].mxu0
  %v1222 = vadd.f32 0.0, %v1221
  %v1223 = vpop.f32.mrb[0].mxu0
  %v1224 = vpop.f32.mrb[0].mxu0
  %v1225 = vadd.f32 0.0, %v1224
  %v1226 = vpop.f32.mrb[0].mxu0
  %1227 = vmatprep.mubr.bf16.mxu0 %v736
  %1228 = vmatmul.mubr.bf16.gmra.mrb[0].mxu0 %v735
  %v1229 = vpop.f32.mrb[0].mxu0
  %v1230 = vadd.f32 0.0, %v1229
  %v1231 = vpop.f32.mrb[0].mxu0
  %v1232 = vpop.f32.mrb[0].mxu0
  %v1233 = vadd.f32 0.0, %v1232
  %v1234 = vpop.f32.mrb[0].mxu0
  %1235 = vmatprep.mubr.bf16.mxu0 %v740
  %1236 = vmatmul.mubr.bf16.gmra.mrb[0].mxu0 %v739
  %v1237 = vpop.f32.mrb[0].mxu0
  %v1238 = vadd.f32 0.0, %v1237
  %v1239 = vpop.f32.mrb[0].mxu0
  %v1240 = vpop.f32.mrb[0].mxu0
  %v1241 = vadd.f32 0.0, %v1240
  %v1242 = vpop.f32.mrb[0].mxu0
  %1243 = vmatprep.mubr.bf16.mxu0 %v744
  %1244 = vmatmul.mubr.bf16.gmra.mrb[0].mxu0 %v743
  %v1245 = vpop.f32.mrb[0].mxu0
  %v1246 = vadd.f32 0.0, %v1245
  %v1247 = vpop.f32.mrb[0].mxu0
  %v1248 = vpop.f32.mrb[0].mxu0
  %v1249 = vadd.f32 0.0, %v1248
  %v1250 = vpop.f32.mrb[0].mxu0
  %1251 = vmatprep.mubr.bf16.mxu0 %v748
  %1252 = vmatmul.mubr.bf16.gmra.mrb[0].mxu0 %v747
  %v1253 = vpop.f32.mrb[0].mxu0
  %v1254 = vadd.f32 0.0, %v1253
  %v1255 = vpop.f32.mrb[0].mxu0
  %v1256 = vpop.f32.mrb[0].mxu0
  %v1257 = vadd.f32 0.0, %v1256
  %v1258 = vpop.f32.mrb[0].mxu0
  %1259 = vmatprep.mubr.bf16.mxu0 %v752
  %1260 = vmatmul.mubr.bf16.gmra.mrb[0].mxu0 %v751
  %v1261 = vpop.f32.mrb[0].mxu0
  %v1262 = vadd.f32 0.0, %v1261
  %v1263 = vpop.f32.mrb[0].mxu0
  %v1264 = vpop.f32.mrb[0].mxu0
  %v1265 = vadd.f32 0.0, %v1264
  %v1266 = vpop.f32.mrb[0].mxu0
  %1267 = vmatprep.mubr.bf16.mxu0 %v756
  %1268 = vmatmul.mubr.bf16.gmra.mrb[0].mxu0 %v755
  %v1269 = vpop.f32.mrb[0].mxu0
  %v1270 = vadd.f32 0.0, %v1269
  %v1271 = vpop.f32.mrb[0].mxu0
  %v1272 = vpop.f32.mrb[0].mxu0
  %v1273 = vadd.f32 0.0, %v1272
  %v1274 = vpop.f32.mrb[0].mxu0
  %1275 = vmatprep.mubr.bf16.mxu0 %v760
  %1276 = vmatmul.mubr.bf16.gmra.mrb[0].mxu0 %v759
  %v1277 = vpop.f32.mrb[0].mxu0
  %v1278 = vadd.f32 0.0, %v1277
  %v1279 = vpop.f32.mrb[0].mxu0
  %v1280 = vpop.f32.mrb[0].mxu0
  %v1281 = vadd.f32 0.0, %v1280
  %v1282 = vpop.f32.mrb[0].mxu0
  %1283 = vmatprep.mubr.bf16.mxu0 %v764
  %1284 = vmatmul.mubr.bf16.gmra.mrb[0].mxu0 %v763
  %v1285 = vpop.f32.mrb[0].mxu0
  %v1286 = vadd.f32 0.0, %v1285
  %v1287 = vpop.f32.mrb[0].mxu0
  %v1288 = vpop.f32.mrb[0].mxu0
  %v1289 = vadd.f32 0.0, %v1288
  %v1290 = vpop.f32.mrb[0].mxu0
  %1291 = vmatprep.mubr.bf16.mxu0 %v768
  %1292 = vmatmul.mubr.bf16.gmra.mrb[0].mxu0 %v767
  %v1293 = vpop.f32.mrb[0].mxu0
  %v1294 = vadd.f32 0.0, %v1293
  %v1295 = vpop.f32.mrb[0].mxu0
  %v1296 = vpop.f32.mrb[0].mxu0
  %v1297 = vadd.f32 0.0, %v1296
  %v1298 = vpop.f32.mrb[0].mxu0
  %1299 = vmatprep.mubr.bf16.mxu0 %v772
  %1300 = vmatmul.mubr.bf16.gmra.mrb[0].mxu0 %v771
  %v1301 = vpop.f32.mrb[0].mxu0
  %v1302 = vadd.f32 0.0, %v1301
  %v1303 = vpop.f32.mrb[0].mxu0
  %v1304 = vpop.f32.mrb[0].mxu0
  %v1305 = vadd.f32 0.0, %v1304
  %v1306 = vpop.f32.mrb[0].mxu0
  %1307 = vmatprep.mubr.bf16.mxu0 %v776
  %1308 = vmatmul.mubr.bf16.gmra.mrb[0].mxu0 %v775
  %v1309 = vpop.f32.mrb[0].mxu0
  %v1310 = vadd.f32 0.0, %v1309
  %v1311 = vpop.f32.mrb[0].mxu0
  %v1312 = vpop.f32.mrb[0].mxu0
  %v1313 = vadd.f32 0.0, %v1312
  %v1314 = vpop.f32.mrb[0].mxu0
  %1315 = vmatprep.mubr.bf16.mxu0 %v780
  %1316 = vmatmul.mubr.bf16.gmra.mrb[0].mxu0 %v779
  %v1317 = vpop.f32.mrb[0].mxu0
  %v1318 = vadd.f32 0.0, %v1317
  %v1319 = vpop.f32.mrb[0].mxu0
  %v1320 = vpop.f32.mrb[0].mxu0
  %v1321 = vadd.f32 0.0, %v1320
  %v1322 = vpop.f32.mrb[0].mxu0
  %1323 = vmatprep.mubr.bf16.mxu0 %v784
  %1324 = vmatmul.mubr.bf16.gmra.mrb[0].mxu0 %v783
  %v1325 = vpop.f32.mrb[0].mxu0
  %v1326 = vadd.f32 0.0, %v1325
  %v1327 = vpop.f32.mrb[0].mxu0
  %v1328 = vpop.f32.mrb[0].mxu0
  %v1329 = vadd.f32 0.0, %v1328
  %v1330 = vpop.f32.mrb[0].mxu0
  %1331 = vmatprep.mubr.bf16.mxu0 %v788
  %1332 = vmatmul.mubr.bf16.gmra.mrb[0].mxu0 %v787
  %v1333 = vpop.f32.mrb[0].mxu0
  %v1334 = vadd.f32 0.0, %v1333
  %v1335 = vpop.f32.mrb[0].mxu0
  %v1336 = vpop.f32.mrb[0].mxu0
  %v1337 = vadd.f32 0.0, %v1336
  %v1338 = vpop.f32.mrb[0].mxu0
  %1339 = vmatprep.mubr.bf16.mxu0 %v792
  %1340 = vmatmul.mubr.bf16.gmra.mrb[0].mxu0 %v791
  %v1341 = vpop.f32.mrb[0].mxu0
  %v1342 = vadd.f32 0.0, %v1341
  %v1343 = vpop.f32.mrb[0].mxu0
  %v1344 = vpop.f32.mrb[0].mxu0
  %v1345 = vadd.f32 0.0, %v1344
  %v1346 = vpop.f32.mrb[0].mxu0
  %1347 = vmatprep.mubr.bf16.mxu0 %v796
  %1348 = vmatmul.mubr.bf16.gmra.mrb[0].mxu0 %v795
  %v1349 = vpop.f32.mrb[0].mxu0
  %v1350 = vadd.f32 0.0, %v1349
  %v1351 = vpop.f32.mrb[0].mxu0
  %v1352 = vpop.f32.mrb[0].mxu0
  %v1353 = vadd.f32 0.0, %v1352
  %v1354 = vpop.f32.mrb[0].mxu0
  %1355 = vmatprep.mubr.bf16.mxu0 %v800
  %1356 = vmatmul.mubr.bf16.gmra.mrb[0].mxu0 %v799
  %v1357 = vpop.f32.mrb[0].mxu0
  %v1358 = vadd.f32 0.0, %v1357
  %v1359 = vpop.f32.mrb[0].mxu0
  %v1360 = vpop.f32.mrb[0].mxu0
  %v1361 = vadd.f32 0.0, %v1360
  %v1362 = vpop.f32.mrb[0].mxu0
  %1363 = vmatprep.mubr.bf16.mxu0 %v804
  %1364 = vmatmul.mubr.bf16.gmra.mrb[0].mxu0 %v803
  %v1365 = vpop.f32.mrb[0].mxu0
  %v1366 = vadd.f32 0.0, %v1365
  %v1367 = vpop.f32.mrb[0].mxu0
  %v1368 = vpop.f32.mrb[0].mxu0
  %v1369 = vadd.f32 0.0, %v1368
  %v1370 = vpop.f32.mrb[0].mxu0
  %1371 = vmatprep.mubr.bf16.mxu0 %v808
  %1372 = vmatmul.mubr.bf16.gmra.mrb[0].mxu0 %v807
  %v1373 = vpop.f32.mrb[0].mxu0
  %v1374 = vadd.f32 0.0, %v1373
  %v1375 = vpop.f32.mrb[0].mxu0
  %v1376 = vpop.f32.mrb[0].mxu0
  %v1377 = vadd.f32 0.0, %v1376
  %v1378 = vpop.f32.mrb[0].mxu0
  %1379 = vmatprep.mubr.bf16.mxu0 %v812
  %1380 = vmatmul.mubr.bf16.gmra.mrb[0].mxu0 %v811
  %v1381 = vpop.f32.mrb[0].mxu0
  %v1382 = vadd.f32 0.0, %v1381
  %v1383 = vpop.f32.mrb[0].mxu0
  %v1384 = vpop.f32.mrb[0].mxu0
  %v1385 = vadd.f32 0.0, %v1384
  %v1386 = vpop.f32.mrb[0].mxu0
  %1387 = vmatprep.mubr.bf16.mxu0 %v816
  %1388 = vmatmul.mubr.bf16.gmra.mrb[0].mxu0 %v815
  %v1389 = vpop.f32.mrb[0].mxu0
  %v1390 = vadd.f32 0.0, %v1389
  %v1391 = vpop.f32.mrb[0].mxu0
  %v1392 = vpop.f32.mrb[0].mxu0
  %v1393 = vadd.f32 0.0, %v1392
  %v1394 = vpop.f32.mrb[0].mxu0
  %1395 = vmatprep.mubr.bf16.mxu0 %v820
  %1396 = vmatmul.mubr.bf16.gmra.mrb[0].mxu0 %v819
  %v1397 = vpop.f32.mrb[0].mxu0
  %v1398 = vadd.f32 0.0, %v1397
  %v1399 = vpop.f32.mrb[0].mxu0
  %v1400 = vpop.f32.mrb[0].mxu0
  %v1401 = vadd.f32 0.0, %v1400
  %v1402 = vpop.f32.mrb[0].mxu0
  %1403 = vmatprep.mubr.bf16.mxu0 %v824
  %1404 = vmatmul.mubr.bf16.gmra.mrb[0].mxu0 %v823
  %v1405 = vpop.f32.mrb[0].mxu0
  %v1406 = vadd.f32 0.0, %v1405
  %v1407 = vpop.f32.mrb[0].mxu0
  %v1408 = vpop.f32.mrb[0].mxu0
  %v1409 = vadd.f32 0.0, %v1408
  %v1410 = vpop.f32.mrb[0].mxu0
  %1411 = vmatprep.mubr.bf16.mxu0 %v828
  %1412 = vmatmul.mubr.bf16.gmra.mrb[0].mxu0 %v827
  %v1413 = vpop.f32.mrb[0].mxu0
  %v1414 = vadd.f32 0.0, %v1413
  %v1415 = vpop.f32.mrb[0].mxu0
  %v1416 = vpop.f32.mrb[0].mxu0
  %v1417 = vadd.f32 0.0, %v1416
  %v1418 = vpop.f32.mrb[0].mxu0
  %1419 = vmatprep.mubr.bf16.mxu0 %v832
  %1420 = vmatmul.mubr.bf16.gmra.mrb[0].mxu0 %v831
  %v1421 = vpop.f32.mrb[0].mxu0
  %v1422 = vadd.f32 0.0, %v1421
  %v1423 = vpop.f32.mrb[0].mxu0
  %v1424 = vpop.f32.mrb[0].mxu0
  %v1425 = vadd.f32 0.0, %v1424
  %v1426 = vpop.f32.mrb[0].mxu0
  %1427 = vmatprep.mubr.bf16.mxu0 %v836
  %1428 = vmatmul.mubr.bf16.gmra.mrb[0].mxu0 %v835
  %v1429 = vpop.f32.mrb[0].mxu0
  %v1430 = vadd.f32 0.0, %v1429
  %v1431 = vpop.f32.mrb[0].mxu0
  %v1432 = vpop.f32.mrb[0].mxu0
  %v1433 = vadd.f32 0.0, %v1432
  %v1434 = vpop.f32.mrb[0].mxu0
  %1435 = vmatprep.mubr.bf16.mxu0 %v840
  %1436 = vmatmul.mubr.bf16.gmra.mrb[0].mxu0 %v839
  %v1437 = vpop.f32.mrb[0].mxu0
  %v1438 = vadd.f32 0.0, %v1437
  %v1439 = vpop.f32.mrb[0].mxu0
  %v1440 = vpop.f32.mrb[0].mxu0
  %v1441 = vadd.f32 0.0, %v1440
  %v1442 = vpop.f32.mrb[0].mxu0
  %1443 = vmatprep.mubr.bf16.mxu0 %v844
  %1444 = vmatmul.mubr.bf16.gmra.mrb[0].mxu0 %v843
  %v1445 = vpop.f32.mrb[0].mxu0
  %v1446 = vadd.f32 0.0, %v1445
  %v1447 = vpop.f32.mrb[0].mxu0
  %v1448 = vpop.f32.mrb[0].mxu0
  %v1449 = vadd.f32 0.0, %v1448
  %v1450 = vpop.f32.mrb[0].mxu0
  %1451 = vmatprep.mubr.bf16.mxu0 %v848
  %1452 = vmatmul.mubr.bf16.gmra.mrb[0].mxu0 %v847
  %v1453 = vpop.f32.mrb[0].mxu0
  %v1454 = vadd.f32 0.0, %v1453
  %v1455 = vpop.f32.mrb[0].mxu0
  %v1456 = vpop.f32.mrb[0].mxu0
  %v1457 = vadd.f32 0.0, %v1456
  %v1458 = vpop.f32.mrb[0].mxu0
  %1459 = vdwg.mxu0
  %1460 = vmatprep.subr.bf16.mxu0 0
  %1461 = vmatpush1.bf16.msra.mxu0 %v1123
  %1462 = vmatprep.subr.bf16.mxu0 0
  %1463 = vmatpush1.bf16.msra.mxu0 %v1124
  %1464 = vmatprep.subr.bf16.mxu0 0
  %1465 = vmatpush1.bf16.msra.mxu0 %v1125
  %1466 = vmatprep.subr.bf16.mxu0 0
  %1467 = vmatpush1.bf16.msra.mxu0 %v1126
  %1468 = vmatprep.subr.bf16.mxu0 0
  %1469 = vmatpush1.bf16.msra.mxu0 %v1127
  %1470 = vmatprep.subr.bf16.mxu0 0
  %1471 = vmatpush1.bf16.msra.mxu0 %v1128
  %1472 = vmatprep.subr.bf16.mxu0 0
  %1473 = vmatpush1.bf16.msra.mxu0 %v1129
  %1474 = vmatprep.subr.bf16.mxu0 0
  %1475 = vmatpush1.bf16.msra.mxu0 %v1130
  %1476 = vmatprep.subr.bf16.mxu0 0
  %1477 = vmatpush1.bf16.msra.mxu0 %v1131
  %1478 = vmatprep.subr.bf16.mxu0 0
  %1479 = vmatpush1.bf16.msra.mxu0 %v1132
  %1480 = vmatprep.subr.bf16.mxu0 0
  %1481 = vmatpush1.bf16.msra.mxu0 %v1133
  %1482 = vmatprep.subr.bf16.mxu0 0
  %1483 = vmatpush1.bf16.msra.mxu0 %v1134
  %1484 = vmatprep.subr.bf16.mxu0 0
  %1485 = vmatpush1.bf16.msra.mxu0 %v1135
  %1486 = vmatprep.subr.bf16.mxu0 0
  %1487 = vmatpush1.bf16.msra.mxu0 %v1136
  %1488 = vmatprep.subr.bf16.mxu0 0
  %1489 = vmatpush1.bf16.msra.mxu0 %v1137
  %1490 = vmatprep.subr.bf16.mxu0 0
  %1491 = vmatpush1.bf16.msra.mxu0 %v1138
  %1492 = vmatprep.mubr.bf16.mxu0 %v726
  %1493 = vmatmul.mubr.bf16.gmra.mrb[0].mxu0 %v725
  %v1494 = vpop.f32.mrb[0].mxu0
  %v1495 = vadd.f32 %v1206, %v1494
  %v1496 = vpop.f32.mrb[0].mxu0
  %v1497 = vpop.f32.mrb[0].mxu0
  %v1498 = vadd.f32 %v1209, %v1497
  %v1499 = vpop.f32.mrb[0].mxu0
  %1500 = vmatprep.mubr.bf16.mxu0 %v730
  %1501 = vmatmul.mubr.bf16.gmra.mrb[0].mxu0 %v729
  %v1502 = vpop.f32.mrb[0].mxu0
  %v1503 = vadd.f32 %v1214, %v1502
  %v1504 = vpop.f32.mrb[0].mxu0
  %v1505 = vpop.f32.mrb[0].mxu0
  %v1506 = vadd.f32 %v1217, %v1505
  %v1507 = vpop.f32.mrb[0].mxu0
  %1508 = vmatprep.mubr.bf16.mxu0 %v734
  %1509 = vmatmul.mubr.bf16.gmra.mrb[0].mxu0 %v733
  %v1510 = vpop.f32.mrb[0].mxu0
  %v1511 = vadd.f32 %v1222, %v1510
  %v1512 = vpop.f32.mrb[0].mxu0
  %v1513 = vpop.f32.mrb[0].mxu0
  %v1514 = vadd.f32 %v1225, %v1513
  %v1515 = vpop.f32.mrb[0].mxu0
  %1516 = vmatprep.mubr.bf16.mxu0 %v738
  %1517 = vmatmul.mubr.bf16.gmra.mrb[0].mxu0 %v737
  %v1518 = vpop.f32.mrb[0].mxu0
  %v1519 = vadd.f32 %v1230, %v1518
  %v1520 = vpop.f32.mrb[0].mxu0
  %v1521 = vpop.f32.mrb[0].mxu0
  %v1522 = vadd.f32 %v1233, %v1521
  %v1523 = vpop.f32.mrb[0].mxu0
  %1524 = vmatprep.mubr.bf16.mxu0 %v742
  %1525 = vmatmul.mubr.bf16.gmra.mrb[0].mxu0 %v741
  %v1526 = vpop.f32.mrb[0].mxu0
  %v1527 = vadd.f32 %v1238, %v1526
  %v1528 = vpop.f32.mrb[0].mxu0
  %v1529 = vpop.f32.mrb[0].mxu0
  %v1530 = vadd.f32 %v1241, %v1529
  %v1531 = vpop.f32.mrb[0].mxu0
  %1532 = vmatprep.mubr.bf16.mxu0 %v746
  %1533 = vmatmul.mubr.bf16.gmra.mrb[0].mxu0 %v745
  %v1534 = vpop.f32.mrb[0].mxu0
  %v1535 = vadd.f32 %v1246, %v1534
  %v1536 = vpop.f32.mrb[0].mxu0
  %v1537 = vpop.f32.mrb[0].mxu0
  %v1538 = vadd.f32 %v1249, %v1537
  %v1539 = vpop.f32.mrb[0].mxu0
  %1540 = vmatprep.mubr.bf16.mxu0 %v750
  %1541 = vmatmul.mubr.bf16.gmra.mrb[0].mxu0 %v749
  %v1542 = vpop.f32.mrb[0].mxu0
  %v1543 = vadd.f32 %v1254, %v1542
  %v1544 = vpop.f32.mrb[0].mxu0
  %v1545 = vpop.f32.mrb[0].mxu0
  %v1546 = vadd.f32 %v1257, %v1545
  %v1547 = vpop.f32.mrb[0].mxu0
  %1548 = vmatprep.mubr.bf16.mxu0 %v754
  %1549 = vmatmul.mubr.bf16.gmra.mrb[0].mxu0 %v753
  %v1550 = vpop.f32.mrb[0].mxu0
  %v1551 = vadd.f32 %v1262, %v1550
  %v1552 = vpop.f32.mrb[0].mxu0
  %v1553 = vpop.f32.mrb[0].mxu0
  %v1554 = vadd.f32 %v1265, %v1553
  %v1555 = vpop.f32.mrb[0].mxu0
  %1556 = vmatprep.mubr.bf16.mxu0 %v758
  %1557 = vmatmul.mubr.bf16.gmra.mrb[0].mxu0 %v757
  %v1558 = vpop.f32.mrb[0].mxu0
  %v1559 = vadd.f32 %v1270, %v1558
  %v1560 = vpop.f32.mrb[0].mxu0
  %v1561 = vpop.f32.mrb[0].mxu0
  %v1562 = vadd.f32 %v1273, %v1561
  %v1563 = vpop.f32.mrb[0].mxu0
  %1564 = vmatprep.mubr.bf16.mxu0 %v762
  %1565 = vmatmul.mubr.bf16.gmra.mrb[0].mxu0 %v761
  %v1566 = vpop.f32.mrb[0].mxu0
  %v1567 = vadd.f32 %v1278, %v1566
  %v1568 = vpop.f32.mrb[0].mxu0
  %v1569 = vpop.f32.mrb[0].mxu0
  %v1570 = vadd.f32 %v1281, %v1569
  %v1571 = vpop.f32.mrb[0].mxu0
  %1572 = vmatprep.mubr.bf16.mxu0 %v766
  %1573 = vmatmul.mubr.bf16.gmra.mrb[0].mxu0 %v765
  %v1574 = vpop.f32.mrb[0].mxu0
  %v1575 = vadd.f32 %v1286, %v1574
  %v1576 = vpop.f32.mrb[0].mxu0
  %v1577 = vpop.f32.mrb[0].mxu0
  %v1578 = vadd.f32 %v1289, %v1577
  %v1579 = vpop.f32.mrb[0].mxu0
  %1580 = vmatprep.mubr.bf16.mxu0 %v770
  %1581 = vmatmul.mubr.bf16.gmra.mrb[0].mxu0 %v769
  %v1582 = vpop.f32.mrb[0].mxu0
  %v1583 = vadd.f32 %v1294, %v1582
  %v1584 = vpop.f32.mrb[0].mxu0
  %v1585 = vpop.f32.mrb[0].mxu0
  %v1586 = vadd.f32 %v1297, %v1585
  %v1587 = vpop.f32.mrb[0].mxu0
  %1588 = vmatprep.mubr.bf16.mxu0 %v774
  %1589 = vmatmul.mubr.bf16.gmra.mrb[0].mxu0 %v773
  %v1590 = vpop.f32.mrb[0].mxu0
  %v1591 = vadd.f32 %v1302, %v1590
  %v1592 = vpop.f32.mrb[0].mxu0
  %v1593 = vpop.f32.mrb[0].mxu0
  %v1594 = vadd.f32 %v1305, %v1593
  %v1595 = vpop.f32.mrb[0].mxu0
  %1596 = vmatprep.mubr.bf16.mxu0 %v778
  %1597 = vmatmul.mubr.bf16.gmra.mrb[0].mxu0 %v777
  %v1598 = vpop.f32.mrb[0].mxu0
  %v1599 = vadd.f32 %v1310, %v1598
  %v1600 = vpop.f32.mrb[0].mxu0
  %v1601 = vpop.f32.mrb[0].mxu0
  %v1602 = vadd.f32 %v1313, %v1601
  %v1603 = vpop.f32.mrb[0].mxu0
  %1604 = vmatprep.mubr.bf16.mxu0 %v782
  %1605 = vmatmul.mubr.bf16.gmra.mrb[0].mxu0 %v781
  %v1606 = vpop.f32.mrb[0].mxu0
  %v1607 = vadd.f32 %v1318, %v1606
  %v1608 = vpop.f32.mrb[0].mxu0
  %v1609 = vpop.f32.mrb[0].mxu0
  %v1610 = vadd.f32 %v1321, %v1609
  %v1611 = vpop.f32.mrb[0].mxu0
  %1612 = vmatprep.mubr.bf16.mxu0 %v786
  %1613 = vmatmul.mubr.bf16.gmra.mrb[0].mxu0 %v785
  %v1614 = vpop.f32.mrb[0].mxu0
  %v1615 = vadd.f32 %v1326, %v1614
  %v1616 = vpop.f32.mrb[0].mxu0
  %v1617 = vpop.f32.mrb[0].mxu0
  %v1618 = vadd.f32 %v1329, %v1617
  %v1619 = vpop.f32.mrb[0].mxu0
  %1620 = vmatprep.mubr.bf16.mxu0 %v790
  %1621 = vmatmul.mubr.bf16.gmra.mrb[0].mxu0 %v789
  %v1622 = vpop.f32.mrb[0].mxu0
  %v1623 = vadd.f32 %v1334, %v1622
  %v1624 = vpop.f32.mrb[0].mxu0
  %v1625 = vpop.f32.mrb[0].mxu0
  %v1626 = vadd.f32 %v1337, %v1625
  %v1627 = vpop.f32.mrb[0].mxu0
  %1628 = vmatprep.mubr.bf16.mxu0 %v794
  %1629 = vmatmul.mubr.bf16.gmra.mrb[0].mxu0 %v793
  %v1630 = vpop.f32.mrb[0].mxu0
  %v1631 = vadd.f32 %v1342, %v1630
  %v1632 = vpop.f32.mrb[0].mxu0
  %v1633 = vpop.f32.mrb[0].mxu0
  %v1634 = vadd.f32 %v1345, %v1633
  %v1635 = vpop.f32.mrb[0].mxu0
  %1636 = vmatprep.mubr.bf16.mxu0 %v798
  %1637 = vmatmul.mubr.bf16.gmra.mrb[0].mxu0 %v797
  %v1638 = vpop.f32.mrb[0].mxu0
  %v1639 = vadd.f32 %v1350, %v1638
  %v1640 = vpop.f32.mrb[0].mxu0
  %v1641 = vpop.f32.mrb[0].mxu0
  %v1642 = vadd.f32 %v1353, %v1641
  %v1643 = vpop.f32.mrb[0].mxu0
  %1644 = vmatprep.mubr.bf16.mxu0 %v802
  %1645 = vmatmul.mubr.bf16.gmra.mrb[0].mxu0 %v801
  %v1646 = vpop.f32.mrb[0].mxu0
  %v1647 = vadd.f32 %v1358, %v1646
  %v1648 = vpop.f32.mrb[0].mxu0
  %v1649 = vpop.f32.mrb[0].mxu0
  %v1650 = vadd.f32 %v1361, %v1649
  %v1651 = vpop.f32.mrb[0].mxu0
  %1652 = vmatprep.mubr.bf16.mxu0 %v806
  %1653 = vmatmul.mubr.bf16.gmra.mrb[0].mxu0 %v805
  %v1654 = vpop.f32.mrb[0].mxu0
  %v1655 = vadd.f32 %v1366, %v1654
  %v1656 = vpop.f32.mrb[0].mxu0
  %v1657 = vpop.f32.mrb[0].mxu0
  %v1658 = vadd.f32 %v1369, %v1657
  %v1659 = vpop.f32.mrb[0].mxu0
  %1660 = vmatprep.mubr.bf16.mxu0 %v810
  %1661 = vmatmul.mubr.bf16.gmra.mrb[0].mxu0 %v809
  %v1662 = vpop.f32.mrb[0].mxu0
  %v1663 = vadd.f32 %v1374, %v1662
  %v1664 = vpop.f32.mrb[0].mxu0
  %v1665 = vpop.f32.mrb[0].mxu0
  %v1666 = vadd.f32 %v1377, %v1665
  %v1667 = vpop.f32.mrb[0].mxu0
  %1668 = vmatprep.mubr.bf16.mxu0 %v814
  %1669 = vmatmul.mubr.bf16.gmra.mrb[0].mxu0 %v813
  %v1670 = vpop.f32.mrb[0].mxu0
  %v1671 = vadd.f32 %v1382, %v1670
  %v1672 = vpop.f32.mrb[0].mxu0
  %v1673 = vpop.f32.mrb[0].mxu0
  %v1674 = vadd.f32 %v1385, %v1673
  %v1675 = vpop.f32.mrb[0].mxu0
  %1676 = vmatprep.mubr.bf16.mxu0 %v818
  %1677 = vmatmul.mubr.bf16.gmra.mrb[0].mxu0 %v817
  %v1678 = vpop.f32.mrb[0].mxu0
  %v1679 = vadd.f32 %v1390, %v1678
  %v1680 = vpop.f32.mrb[0].mxu0
  %v1681 = vpop.f32.mrb[0].mxu0
  %v1682 = vadd.f32 %v1393, %v1681
  %v1683 = vpop.f32.mrb[0].mxu0
  %1684 = vmatprep.mubr.bf16.mxu0 %v822
  %1685 = vmatmul.mubr.bf16.gmra.mrb[0].mxu0 %v821
  %v1686 = vpop.f32.mrb[0].mxu0
  %v1687 = vadd.f32 %v1398, %v1686
  %v1688 = vpop.f32.mrb[0].mxu0
  %v1689 = vpop.f32.mrb[0].mxu0
  %v1690 = vadd.f32 %v1401, %v1689
  %v1691 = vpop.f32.mrb[0].mxu0
  %1692 = vmatprep.mubr.bf16.mxu0 %v826
  %1693 = vmatmul.mubr.bf16.gmra.mrb[0].mxu0 %v825
  %v1694 = vpop.f32.mrb[0].mxu0
  %v1695 = vadd.f32 %v1406, %v1694
  %v1696 = vpop.f32.mrb[0].mxu0
  %v1697 = vpop.f32.mrb[0].mxu0
  %v1698 = vadd.f32 %v1409, %v1697
  %v1699 = vpop.f32.mrb[0].mxu0
  %1700 = vmatprep.mubr.bf16.mxu0 %v830
  %1701 = vmatmul.mubr.bf16.gmra.mrb[0].mxu0 %v829
  %v1702 = vpop.f32.mrb[0].mxu0
  %v1703 = vadd.f32 %v1414, %v1702
  %v1704 = vpop.f32.mrb[0].mxu0
  %v1705 = vpop.f32.mrb[0].mxu0
  %v1706 = vadd.f32 %v1417, %v1705
  %v1707 = vpop.f32.mrb[0].mxu0
  %1708 = vmatprep.mubr.bf16.mxu0 %v834
  %1709 = vmatmul.mubr.bf16.gmra.mrb[0].mxu0 %v833
  %v1710 = vpop.f32.mrb[0].mxu0
  %v1711 = vadd.f32 %v1422, %v1710
  %v1712 = vpop.f32.mrb[0].mxu0
  %v1713 = vpop.f32.mrb[0].mxu0
  %v1714 = vadd.f32 %v1425, %v1713
  %v1715 = vpop.f32.mrb[0].mxu0
  %1716 = vmatprep.mubr.bf16.mxu0 %v838
  %1717 = vmatmul.mubr.bf16.gmra.mrb[0].mxu0 %v837
  %v1718 = vpop.f32.mrb[0].mxu0
  %v1719 = vadd.f32 %v1430, %v1718
  %v1720 = vpop.f32.mrb[0].mxu0
  %v1721 = vpop.f32.mrb[0].mxu0
  %v1722 = vadd.f32 %v1433, %v1721
  %v1723 = vpop.f32.mrb[0].mxu0
  %1724 = vmatprep.mubr.bf16.mxu0 %v842
  %1725 = vmatmul.mubr.bf16.gmra.mrb[0].mxu0 %v841
  %v1726 = vpop.f32.mrb[0].mxu0
  %v1727 = vadd.f32 %v1438, %v1726
  %v1728 = vpop.f32.mrb[0].mxu0
  %v1729 = vpop.f32.mrb[0].mxu0
  %v1730 = vadd.f32 %v1441, %v1729
  %v1731 = vpop.f32.mrb[0].mxu0
  %1732 = vmatprep.mubr.bf16.mxu0 %v846
  %1733 = vmatmul.mubr.bf16.gmra.mrb[0].mxu0 %v845
  %v1734 = vpop.f32.mrb[0].mxu0
  %v1735 = vadd.f32 %v1446, %v1734
  %v1736 = vpop.f32.mrb[0].mxu0
  %v1737 = vpop.f32.mrb[0].mxu0
  %v1738 = vadd.f32 %v1449, %v1737
  %v1739 = vpop.f32.mrb[0].mxu0
  %1740 = vmatprep.mubr.bf16.mxu0 %v850
  %1741 = vmatmul.mubr.bf16.gmra.mrb[0].mxu0 %v849
  %v1742 = vpop.f32.mrb[0].mxu0
  %v1743 = vadd.f32 %v1454, %v1742
  %v1744 = vpop.f32.mrb[0].mxu0
  %v1745 = vpop.f32.mrb[0].mxu0
  %v1746 = vadd.f32 %v1457, %v1745
  %v1747 = vpop.f32.mrb[0].mxu0
  %1748 = vdwg.mxu0
  %v1749 = vadd.f32 %v83, %v1495
  %v1750 = vadd.f32 %v84, %v1498
  %v1751 = vadd.f32 %v85, %v1503
  %v1752 = vadd.f32 %v86, %v1506
  %v1753 = vadd.f32 %v87, %v1511
  %v1754 = vadd.f32 %v88, %v1514
  %v1755 = vadd.f32 %v89, %v1519
  %v1756 = vadd.f32 %v90, %v1522
  %v1757 = vadd.f32 %v91, %v1527
  %v1758 = vadd.f32 %v92, %v1530
  %v1759 = vadd.f32 %v93, %v1535
  %v1760 = vadd.f32 %v94, %v1538
  %v1761 = vadd.f32 %v95, %v1543
  %v1762 = vadd.f32 %v96, %v1546
  %v1763 = vadd.f32 %v97, %v1551
  %v1764 = vadd.f32 %v98, %v1554
  %v1765 = vadd.f32 %v99, %v1559
  %v1766 = vadd.f32 %v100, %v1562
  %v1767 = vadd.f32 %v101, %v1567
  %v1768 = vadd.f32 %v102, %v1570
  %v1769 = vadd.f32 %v103, %v1575
  %v1770 = vadd.f32 %v104, %v1578
  %v1771 = vadd.f32 %v105, %v1583
  %v1772 = vadd.f32 %v106, %v1586
  %v1773 = vadd.f32 %v107, %v1591
  %v1774 = vadd.f32 %v108, %v1594
  %v1775 = vadd.f32 %v109, %v1599
  %v1776 = vadd.f32 %v110, %v1602
  %v1777 = vadd.f32 %v111, %v1607
  %v1778 = vadd.f32 %v112, %v1610
  %v1779 = vadd.f32 %v113, %v1615
  %v1780 = vadd.f32 %v114, %v1618
  %v1781 = vadd.f32 %v115, %v1623
  %v1782 = vadd.f32 %v116, %v1626
  %v1783 = vadd.f32 %v117, %v1631
  %v1784 = vadd.f32 %v118, %v1634
  %v1785 = vadd.f32 %v119, %v1639
  %v1786 = vadd.f32 %v120, %v1642
  %v1787 = vadd.f32 %v121, %v1647
  %v1788 = vadd.f32 %v122, %v1650
  %v1789 = vadd.f32 %v123, %v1655
  %v1790 = vadd.f32 %v124, %v1658
  %v1791 = vadd.f32 %v125, %v1663
  %v1792 = vadd.f32 %v126, %v1666
  %v1793 = vadd.f32 %v127, %v1671
  %v1794 = vadd.f32 %v128, %v1674
  %v1795 = vadd.f32 %v129, %v1679
  %v1796 = vadd.f32 %v130, %v1682
  %v1797 = vadd.f32 %v131, %v1687
  %v1798 = vadd.f32 %v132, %v1690
  %v1799 = vadd.f32 %v133, %v1695
  %v1800 = vadd.f32 %v134, %v1698
  %v1801 = vadd.f32 %v135, %v1703
  %v1802 = vadd.f32 %v136, %v1706
  %v1803 = vadd.f32 %v137, %v1711
  %v1804 = vadd.f32 %v138, %v1714
  %v1805 = vadd.f32 %v139, %v1719
  %v1806 = vadd.f32 %v140, %v1722
  %v1807 = vadd.f32 %v141, %v1727
  %v1808 = vadd.f32 %v142, %v1730
  %v1809 = vadd.f32 %v143, %v1735
  %v1810 = vadd.f32 %v144, %v1738
  %v1811 = vadd.f32 %v145, %v1743
  %v1812 = vadd.f32 %v146, %v1746
  %1813 = vst [vmem:[#allocation2] sm:$0xff] %v1749
  %1814 = vst [vmem:[#allocation2 + $0x8] sm:$0xff] %v1750
  %1815 = vst [vmem:[#allocation2 + $0x10] sm:$0xff] %v1751
  %1816 = vst [vmem:[#allocation2 + $0x18] sm:$0xff] %v1752
  %1817 = vst [vmem:[#allocation2 + $0x20] sm:$0xff] %v1753
  %1818 = vst [vmem:[#allocation2 + $0x28] sm:$0xff] %v1754
  %1819 = vst [vmem:[#allocation2 + $0x30] sm:$0xff] %v1755
  %1820 = vst [vmem:[#allocation2 + $0x38] sm:$0xff] %v1756
  %1821 = vst [vmem:[#allocation2 + $0x40] sm:$0xff] %v1757
  %1822 = vst [vmem:[#allocation2 + $0x48] sm:$0xff] %v1758
  %1823 = vst [vmem:[#allocation2 + $0x50] sm:$0xff] %v1759
  %1824 = vst [vmem:[#allocation2 + $0x58] sm:$0xff] %v1760
  %1825 = vst [vmem:[#allocation2 + $0x60] sm:$0xff] %v1761
  %1826 = vst [vmem:[#allocation2 + $0x68] sm:$0xff] %v1762
  %1827 = vst [vmem:[#allocation2 + $0x70] sm:$0xff] %v1763
  %1828 = vst [vmem:[#allocation2 + $0x78] sm:$0xff] %v1764
  %1829 = vst [vmem:[#allocation2 + $0x80] sm:$0xff] %v1765
  %1830 = vst [vmem:[#allocation2 + $0x88] sm:$0xff] %v1766
  %1831 = vst [vmem:[#allocation2 + $0x90] sm:$0xff] %v1767
  %1832 = vst [vmem:[#allocation2 + $0x98] sm:$0xff] %v1768
  %1833 = vst [vmem:[#allocation2 + $0xa0] sm:$0xff] %v1769
  %1834 = vst [vmem:[#allocation2 + $0xa8] sm:$0xff] %v1770
  %1835 = vst [vmem:[#allocation2 + $0xb0] sm:$0xff] %v1771
  %1836 = vst [vmem:[#allocation2 + $0xb8] sm:$0xff] %v1772
  %1837 = vst [vmem:[#allocation2 + $0xc0] sm:$0xff] %v1773
  %1838 = vst [vmem:[#allocation2 + $0xc8] sm:$0xff] %v1774
  %1839 = vst [vmem:[#allocation2 + $0xd0] sm:$0xff] %v1775
  %1840 = vst [vmem:[#allocation2 + $0xd8] sm:$0xff] %v1776
  %1841 = vst [vmem:[#allocation2 + $0xe0] sm:$0xff] %v1777
  %1842 = vst [vmem:[#allocation2 + $0xe8] sm:$0xff] %v1778
  %1843 = vst [vmem:[#allocation2 + $0xf0] sm:$0xff] %v1779
  %1844 = vst [vmem:[#allocation2 + $0xf8] sm:$0xff] %v1780
  %1845 = vst [vmem:[#allocation2 + $0x100] sm:$0xff] %v1781
  %1846 = vst [vmem:[#allocation2 + $0x108] sm:$0xff] %v1782
  %1847 = vst [vmem:[#allocation2 + $0x110] sm:$0xff] %v1783
  %1848 = vst [vmem:[#allocation2 + $0x118] sm:$0xff] %v1784
  %1849 = vst [vmem:[#allocation2 + $0x120] sm:$0xff] %v1785
  %1850 = vst [vmem:[#allocation2 + $0x128] sm:$0xff] %v1786
  %1851 = vst [vmem:[#allocation2 + $0x130] sm:$0xff] %v1787
  %1852 = vst [vmem:[#allocation2 + $0x138] sm:$0xff] %v1788
  %1853 = vst [vmem:[#allocation2 + $0x140] sm:$0xff] %v1789
  %1854 = vst [vmem:[#allocation2 + $0x148] sm:$0xff] %v1790
  %1855 = vst [vmem:[#allocation2 + $0x150] sm:$0xff] %v1791
  %1856 = vst [vmem:[#allocation2 + $0x158] sm:$0xff] %v1792
  %1857 = vst [vmem:[#allocation2 + $0x160] sm:$0xff] %v1793
  %1858 = vst [vmem:[#allocation2 + $0x168] sm:$0xff] %v1794
  %1859 = vst [vmem:[#allocation2 + $0x170] sm:$0xff] %v1795
  %1860 = vst [vmem:[#allocation2 + $0x178] sm:$0xff] %v1796
  %1861 = vst [vmem:[#allocation2 + $0x180] sm:$0xff] %v1797
  %1862 = vst [vmem:[#allocation2 + $0x188] sm:$0xff] %v1798
  %1863 = vst [vmem:[#allocation2 + $0x190] sm:$0xff] %v1799
  %1864 = vst [vmem:[#allocation2 + $0x198] sm:$0xff] %v1800
  %1865 = vst [vmem:[#allocation2 + $0x1a0] sm:$0xff] %v1801
  %1866 = vst [vmem:[#allocation2 + $0x1a8] sm:$0xff] %v1802
  %1867 = vst [vmem:[#allocation2 + $0x1b0] sm:$0xff] %v1803
  %1868 = vst [vmem:[#allocation2 + $0x1b8] sm:$0xff] %v1804
  %1869 = vst [vmem:[#allocation2 + $0x1c0] sm:$0xff] %v1805
  %1870 = vst [vmem:[#allocation2 + $0x1c8] sm:$0xff] %v1806
  %1871 = vst [vmem:[#allocation2 + $0x1d0] sm:$0xff] %v1807
  %1872 = vst [vmem:[#allocation2 + $0x1d8] sm:$0xff] %v1808
  %1873 = vst [vmem:[#allocation2 + $0x1e0] sm:$0xff] %v1809
  %1874 = vst [vmem:[#allocation2 + $0x1e8] sm:$0xff] %v1810
  %1875 = vst [vmem:[#allocation2 + $0x1f0] sm:$0xff] %v1811
  %1876 = vst [vmem:[#allocation2 + $0x1f8] sm:$0xff] %v1812
  // Predicated region
  $region18: #{encoder_forward.7} parent=0 // pred_check
    %p1877 = pneg %p15
  $region19: #{encoder_forward.7} parent=0 // pred_check_branch
    %1879 = sbr.rel (%p1877) target = $region21
  $region20: #{encoder_forward.7} parent=0 // pred_region
    %v1880 = vld [vmem:[#allocation2] sm:$0xff]
    %v1881 = vld [vmem:[#allocation2 + $0x8] sm:$0xff]
    %v1882 = vld [vmem:[#allocation2 + $0x10] sm:$0xff]
    %v1883 = vld [vmem:[#allocation2 + $0x18] sm:$0xff]
    %v1884 = vld [vmem:[#allocation2 + $0x20] sm:$0xff]
    %v1885 = vld [vmem:[#allocation2 + $0x28] sm:$0xff]
    %v1886 = vld [vmem:[#allocation2 + $0x30] sm:$0xff]
    %v1887 = vld [vmem:[#allocation2 + $0x38] sm:$0xff]
    %v1888 = vld [vmem:[#allocation2 + $0x40] sm:$0xff]
    %v1889 = vld [vmem:[#allocation2 + $0x48] sm:$0xff]
    %v1890 = vld [vmem:[#allocation2 + $0x50] sm:$0xff]
    %v1891 = vld [vmem:[#allocation2 + $0x58] sm:$0xff]
    %v1892 = vld [vmem:[#allocation2 + $0x60] sm:$0xff]
    %v1893 = vld [vmem:[#allocation2 + $0x68] sm:$0xff]
    %v1894 = vld [vmem:[#allocation2 + $0x70] sm:$0xff]
    %v1895 = vld [vmem:[#allocation2 + $0x78] sm:$0xff]
    %v1896 = vld [vmem:[#allocation2 + $0x80] sm:$0xff]
    %v1897 = vld [vmem:[#allocation2 + $0x88] sm:$0xff]
    %v1898 = vld [vmem:[#allocation2 + $0x90] sm:$0xff]
    %v1899 = vld [vmem:[#allocation2 + $0x98] sm:$0xff]
    %v1900 = vld [vmem:[#allocation2 + $0xa0] sm:$0xff]
    %v1901 = vld [vmem:[#allocation2 + $0xa8] sm:$0xff]
    %v1902 = vld [vmem:[#allocation2 + $0xb0] sm:$0xff]
    %v1903 = vld [vmem:[#allocation2 + $0xb8] sm:$0xff]
    %v1904 = vld [vmem:[#allocation2 + $0xc0] sm:$0xff]
    %v1905 = vld [vmem:[#allocation2 + $0xc8] sm:$0xff]
    %v1906 = vld [vmem:[#allocation2 + $0xd0] sm:$0xff]
    %v1907 = vld [vmem:[#allocation2 + $0xd8] sm:$0xff]
    %v1908 = vld [vmem:[#allocation2 + $0xe0] sm:$0xff]
    %v1909 = vld [vmem:[#allocation2 + $0xe8] sm:$0xff]
    %v1910 = vld [vmem:[#allocation2 + $0xf0] sm:$0xff]
    %v1911 = vld [vmem:[#allocation2 + $0xf8] sm:$0xff]
    %v1912 = vld [vmem:[#allocation2 + $0x100] sm:$0xff]
    %v1913 = vld [vmem:[#allocation2 + $0x108] sm:$0xff]
    %v1914 = vld [vmem:[#allocation2 + $0x110] sm:$0xff]
    %v1915 = vld [vmem:[#allocation2 + $0x118] sm:$0xff]
    %v1916 = vld [vmem:[#allocation2 + $0x120] sm:$0xff]
    %v1917 = vld [vmem:[#allocation2 + $0x128] sm:$0xff]
    %v1918 = vld [vmem:[#allocation2 + $0x130] sm:$0xff]
    %v1919 = vld [vmem:[#allocation2 + $0x138] sm:$0xff]
    %v1920 = vld [vmem:[#allocation2 + $0x140] sm:$0xff]
    %v1921 = vld [vmem:[#allocation2 + $0x148] sm:$0xff]
    %v1922 = vld [vmem:[#allocation2 + $0x150] sm:$0xff]
    %v1923 = vld [vmem:[#allocation2 + $0x158] sm:$0xff]
    %v1924 = vld [vmem:[#allocation2 + $0x160] sm:$0xff]
    %v1925 = vld [vmem:[#allocation2 + $0x168] sm:$0xff]
    %v1926 = vld [vmem:[#allocation2 + $0x170] sm:$0xff]
    %v1927 = vld [vmem:[#allocation2 + $0x178] sm:$0xff]
    %v1928 = vld [vmem:[#allocation2 + $0x180] sm:$0xff]
    %v1929 = vld [vmem:[#allocation2 + $0x188] sm:$0xff]
    %v1930 = vld [vmem:[#allocation2 + $0x190] sm:$0xff]
    %v1931 = vld [vmem:[#allocation2 + $0x198] sm:$0xff]
    %v1932 = vld [vmem:[#allocation2 + $0x1a0] sm:$0xff]
    %v1933 = vld [vmem:[#allocation2 + $0x1a8] sm:$0xff]
    %v1934 = vld [vmem:[#allocation2 + $0x1b0] sm:$0xff]
    %v1935 = vld [vmem:[#allocation2 + $0x1b8] sm:$0xff]
    %v1936 = vld [vmem:[#allocation2 + $0x1c0] sm:$0xff]
    %v1937 = vld [vmem:[#allocation2 + $0x1c8] sm:$0xff]
    %v1938 = vld [vmem:[#allocation2 + $0x1d0] sm:$0xff]
    %v1939 = vld [vmem:[#allocation2 + $0x1d8] sm:$0xff]
    %v1940 = vld [vmem:[#allocation2 + $0x1e0] sm:$0xff]
    %v1941 = vld [vmem:[#allocation2 + $0x1e8] sm:$0xff]
    %v1942 = vld [vmem:[#allocation2 + $0x1f0] sm:$0xff]
    %v1943 = vld [vmem:[#allocation2 + $0x1f8] sm:$0xff]
    %v1944 = vld [vmem:[%s2] sm:$0x1]
    %v1946 = vlaneseq
    %v1947 = vshrl.u32 %v1946, 7
    %v1948 = vsub.s32 0, %v1947
    %v1949 = vrot.slane %v1944, %v1948
    %v1951 = vadd.f32 %v1880, %v1949
    %v1952 = vadd.f32 %v1881, %v1949
    %v1953 = vadd.f32 %v1882, %v1949
    %v1954 = vadd.f32 %v1883, %v1949
    %v1955 = vadd.f32 %v1884, %v1949
    %v1956 = vadd.f32 %v1885, %v1949
    %v1957 = vadd.f32 %v1886, %v1949
    %v1958 = vadd.f32 %v1887, %v1949
    %v1959 = vadd.f32 %v1888, %v1949
    %v1960 = vadd.f32 %v1889, %v1949
    %v1961 = vadd.f32 %v1890, %v1949
    %v1962 = vadd.f32 %v1891, %v1949
    %v1963 = vadd.f32 %v1892, %v1949
    %v1964 = vadd.f32 %v1893, %v1949
    %v1965 = vadd.f32 %v1894, %v1949
    %v1966 = vadd.f32 %v1895, %v1949
    %v1967 = vadd.f32 %v1896, %v1949
    %v1968 = vadd.f32 %v1897, %v1949
    %v1969 = vadd.f32 %v1898, %v1949
    %v1970 = vadd.f32 %v1899, %v1949
    %v1971 = vadd.f32 %v1900, %v1949
    %v1972 = vadd.f32 %v1901, %v1949
    %v1973 = vadd.f32 %v1902, %v1949
    %v1974 = vadd.f32 %v1903, %v1949
    %v1975 = vadd.f32 %v1904, %v1949
    %v1976 = vadd.f32 %v1905, %v1949
    %v1977 = vadd.f32 %v1906, %v1949
    %v1978 = vadd.f32 %v1907, %v1949
    %v1979 = vadd.f32 %v1908, %v1949
    %v1980 = vadd.f32 %v1909, %v1949
    %v1981 = vadd.f32 %v1910, %v1949
    %v1982 = vadd.f32 %v1911, %v1949
    %v1983 = vadd.f32 %v1912, %v1949
    %v1984 = vadd.f32 %v1913, %v1949
    %v1985 = vadd.f32 %v1914, %v1949
    %v1986 = vadd.f32 %v1915, %v1949
    %v1987 = vadd.f32 %v1916, %v1949
    %v1988 = vadd.f32 %v1917, %v1949
    %v1989 = vadd.f32 %v1918, %v1949
    %v1990 = vadd.f32 %v1919, %v1949
    %v1991 = vadd.f32 %v1920, %v1949
    %v1992 = vadd.f32 %v1921, %v1949
    %v1993 = vadd.f32 %v1922, %v1949
    %v1994 = vadd.f32 %v1923, %v1949
    %v1995 = vadd.f32 %v1924, %v1949
    %v1996 = vadd.f32 %v1925, %v1949
    %v1997 = vadd.f32 %v1926, %v1949
    %v1998 = vadd.f32 %v1927, %v1949
    %v1999 = vadd.f32 %v1928, %v1949
    %v2000 = vadd.f32 %v1929, %v1949
    %v2001 = vadd.f32 %v1930, %v1949
    %v2002 = vadd.f32 %v1931, %v1949
    %v2003 = vadd.f32 %v1932, %v1949
    %v2004 = vadd.f32 %v1933, %v1949
    %v2005 = vadd.f32 %v1934, %v1949
    %v2006 = vadd.f32 %v1935, %v1949
    %v2007 = vadd.f32 %v1936, %v1949
    %v2008 = vadd.f32 %v1937, %v1949
    %v2009 = vadd.f32 %v1938, %v1949
    %v2010 = vadd.f32 %v1939, %v1949
    %v2011 = vadd.f32 %v1940, %v1949
    %v2012 = vadd.f32 %v1941, %v1949
    %v2013 = vadd.f32 %v1942, %v1949
    %v2014 = vadd.f32 %v1943, %v1949
    %2015 = vst [vmem:[%s3] sm:$0xff] %v1951
    %2016 = vst [vmem:[%s3 + $0x8] sm:$0xff] %v1952
    %2017 = vst [vmem:[%s3 + $0x10] sm:$0xff] %v1953
    %2018 = vst [vmem:[%s3 + $0x18] sm:$0xff] %v1954
    %2019 = vst [vmem:[%s3 + $0x20] sm:$0xff] %v1955
    %2020 = vst [vmem:[%s3 + $0x28] sm:$0xff] %v1956
    %2021 = vst [vmem:[%s3 + $0x30] sm:$0xff] %v1957
    %2022 = vst [vmem:[%s3 + $0x38] sm:$0xff] %v1958
    %2023 = vst [vmem:[%s3 + $0x40] sm:$0xff] %v1959
    %2024 = vst [vmem:[%s3 + $0x48] sm:$0xff] %v1960
    %2025 = vst [vmem:[%s3 + $0x50] sm:$0xff] %v1961
    %2026 = vst [vmem:[%s3 + $0x58] sm:$0xff] %v1962
    %2027 = vst [vmem:[%s3 + $0x60] sm:$0xff] %v1963
    %2028 = vst [vmem:[%s3 + $0x68] sm:$0xff] %v1964
    %2029 = vst [vmem:[%s3 + $0x70] sm:$0xff] %v1965
    %2030 = vst [vmem:[%s3 + $0x78] sm:$0xff] %v1966
    %2031 = vst [vmem:[%s3 + $0x80] sm:$0xff] %v1967
    %2032 = vst [vmem:[%s3 + $0x88] sm:$0xff] %v1968
    %2033 = vst [vmem:[%s3 + $0x90] sm:$0xff] %v1969
    %2034 = vst [vmem:[%s3 + $0x98] sm:$0xff] %v1970
    %2035 = vst [vmem:[%s3 + $0xa0] sm:$0xff] %v1971
    %2036 = vst [vmem:[%s3 + $0xa8] sm:$0xff] %v1972
    %2037 = vst [vmem:[%s3 + $0xb0] sm:$0xff] %v1973
    %2038 = vst [vmem:[%s3 + $0xb8] sm:$0xff] %v1974
    %2039 = vst [vmem:[%s3 + $0xc0] sm:$0xff] %v1975
    %2040 = vst [vmem:[%s3 + $0xc8] sm:$0xff] %v1976
    %2041 = vst [vmem:[%s3 + $0xd0] sm:$0xff] %v1977
    %2042 = vst [vmem:[%s3 + $0xd8] sm:$0xff] %v1978
    %2043 = vst [vmem:[%s3 + $0xe0] sm:$0xff] %v1979
    %2044 = vst [vmem:[%s3 + $0xe8] sm:$0xff] %v1980
    %2045 = vst [vmem:[%s3 + $0xf0] sm:$0xff] %v1981
    %2046 = vst [vmem:[%s3 + $0xf8] sm:$0xff] %v1982
    %2047 = vst [vmem:[%s3 + $0x100] sm:$0xff] %v1983
    %2048 = vst [vmem:[%s3 + $0x108] sm:$0xff] %v1984
    %2049 = vst [vmem:[%s3 + $0x110] sm:$0xff] %v1985
    %2050 = vst [vmem:[%s3 + $0x118] sm:$0xff] %v1986
    %2051 = vst [vmem:[%s3 + $0x120] sm:$0xff] %v1987
    %2052 = vst [vmem:[%s3 + $0x128] sm:$0xff] %v1988
    %2053 = vst [vmem:[%s3 + $0x130] sm:$0xff] %v1989
    %2054 = vst [vmem:[%s3 + $0x138] sm:$0xff] %v1990
    %2055 = vst [vmem:[%s3 + $0x140] sm:$0xff] %v1991
    %2056 = vst [vmem:[%s3 + $0x148] sm:$0xff] %v1992
    %2057 = vst [vmem:[%s3 + $0x150] sm:$0xff] %v1993
    %2058 = vst [vmem:[%s3 + $0x158] sm:$0xff] %v1994
    %2059 = vst [vmem:[%s3 + $0x160] sm:$0xff] %v1995
    %2060 = vst [vmem:[%s3 + $0x168] sm:$0xff] %v1996
    %2061 = vst [vmem:[%s3 + $0x170] sm:$0xff] %v1997
    %2062 = vst [vmem:[%s3 + $0x178] sm:$0xff] %v1998
    %2063 = vst [vmem:[%s3 + $0x180] sm:$0xff] %v1999
    %2064 = vst [vmem:[%s3 + $0x188] sm:$0xff] %v2000
    %2065 = vst [vmem:[%s3 + $0x190] sm:$0xff] %v2001
    %2066 = vst [vmem:[%s3 + $0x198] sm:$0xff] %v2002
    %2067 = vst [vmem:[%s3 + $0x1a0] sm:$0xff] %v2003
    %2068 = vst [vmem:[%s3 + $0x1a8] sm:$0xff] %v2004
    %2069 = vst [vmem:[%s3 + $0x1b0] sm:$0xff] %v2005
    %2070 = vst [vmem:[%s3 + $0x1b8] sm:$0xff] %v2006
    %2071 = vst [vmem:[%s3 + $0x1c0] sm:$0xff] %v2007
    %2072 = vst [vmem:[%s3 + $0x1c8] sm:$0xff] %v2008
    %2073 = vst [vmem:[%s3 + $0x1d0] sm:$0xff] %v2009
    %2074 = vst [vmem:[%s3 + $0x1d8] sm:$0xff] %v2010
    %2075 = vst [vmem:[%s3 + $0x1e0] sm:$0xff] %v2011
    %2076 = vst [vmem:[%s3 + $0x1e8] sm:$0xff] %v2012
    %2077 = vst [vmem:[%s3 + $0x1f0] sm:$0xff] %v2013
    %2078 = vst [vmem:[%s3 + $0x1f8] sm:$0xff] %v2014
  $region21: #{encoder_forward.7} parent=0 // pred_fallthru
    _
  // Predicated region
  $region22: #{encoder_forward.7} parent=0 // pred_check
    _
  $region23: #{encoder_forward.7} parent=0 // pred_check_branch
    %2080 = sbr.rel (0) target = $region25
  $region24: #{encoder_forward.7} parent=0 // pred_region
    _
  $region25: #{encoder_forward.7} parent=0 // pred_fallthru
    _
  // Predicated region
  $region26: #{encoder_forward.7} parent=0 // pred_check
    _
  $region27: #{encoder_forward.7} parent=0 // pred_check_branch
    %2082 = sbr.rel (0) target = $region29
  $region28: #{encoder_forward.7} parent=0 // pred_region
    _
  $region29: #{encoder_forward.7} parent=0 // pred_fallthru
    _

// kernel: encoder_forward.5
$region0: #{encoder_forward.5}
  #allocation0 [shape = 'u32[]', space=smem, size = 0x4, offset = 0x4, fixed_abs, tag = 'smem constant byte address 0x4 - core index']
  #allocation1 [shape = 'u32[144,128]{1,0:T(1,128)}', space=vmem, size = 0x12000, scoped, tag = 'internal scratch']
  #allocation2 [shape = 'f32[512,128]{1,0:T(8,128)}', space=vmem, size = 0x40000, scoped, tag = 'scratch operand']
  %s0 = inlined_call_operand.vmem [shape: bf16[512,512], index: 0, kind: input, shape index: {}]
  %s1 = inlined_call_operand.vmem [shape: bf16[512,128], index: 1, kind: input, shape index: {}]
  %s2 = inlined_call_operand.vmem [shape: f32[1,128], index: 2, kind: input, shape index: {}]
  %s3 = inlined_call_operand.vmem [shape: bf16[512,128], index: 3, kind: output, shape index: {}]
  %s4 = sld [smem:[#allocation0]]
  $region30: #{encoder_forward.5} parent=0
    _
  %s6 = ssub.s32 1, %s4
  %s7 = scalar_select 0, %s6, %s4
  // Predicated region
  $region2: #{encoder_forward.5} parent=0 // pred_check
    _
  $region3: #{encoder_forward.5} parent=0 // pred_check_branch
    %9 = sbr.rel (0) target = $region5
  $region4: #{encoder_forward.5} parent=0 // pred_region
    _
  $region5: #{encoder_forward.5} parent=0 // pred_fallthru
    _
  // Predicated region
  $region6: #{encoder_forward.5} parent=0 // pred_check
    _
  $region7: #{encoder_forward.5} parent=0 // pred_check_branch
    %11 = sbr.rel (0) target = $region9
  $region8: #{encoder_forward.5} parent=0 // pred_region
    _
  $region9: #{encoder_forward.5} parent=0 // pred_fallthru
    _
  // Predicated region
  $region10: #{encoder_forward.5} parent=0 // pred_check
    _
  $region11: #{encoder_forward.5} parent=0 // pred_check_branch
    %13 = sbr.rel (0) target = $region13
  $region12: #{encoder_forward.5} parent=0 // pred_region
    _
  $region13: #{encoder_forward.5} parent=0 // pred_fallthru
    _
  %p15 = scmp.eq.s32.totalorder 0, 0
  // Predicated region
  $region14: #{encoder_forward.5} parent=0 // pred_check
    %p16 = pneg %p15
  $region15: #{encoder_forward.5} parent=0 // pred_check_branch
    %18 = sbr.rel (%p16) target = $region17
  $region16: #{encoder_forward.5} parent=0 // pred_region
    %19 = vst [vmem:[#allocation2] sm:$0xff] 0.0
    %20 = vst [vmem:[#allocation2 + $0x8] sm:$0xff] 0.0
    %21 = vst [vmem:[#allocation2 + $0x10] sm:$0xff] 0.0
    %22 = vst [vmem:[#allocation2 + $0x18] sm:$0xff] 0.0
    %23 = vst [vmem:[#allocation2 + $0x20] sm:$0xff] 0.0
    %24 = vst [vmem:[#allocation2 + $0x28] sm:$0xff] 0.0
    %25 = vst [vmem:[#allocation2 + $0x30] sm:$0xff] 0.0
    %26 = vst [vmem:[#allocation2 + $0x38] sm:$0xff] 0.0
    %27 = vst [vmem:[#allocation2 + $0x40] sm:$0xff] 0.0
    %28 = vst [vmem:[#allocation2 + $0x48] sm:$0xff] 0.0
    %29 = vst [vmem:[#allocation2 + $0x50] sm:$0xff] 0.0
    %30 = vst [vmem:[#allocation2 + $0x58] sm:$0xff] 0.0
    %31 = vst [vmem:[#allocation2 + $0x60] sm:$0xff] 0.0
    %32 = vst [vmem:[#allocation2 + $0x68] sm:$0xff] 0.0
    %33 = vst [vmem:[#allocation2 + $0x70] sm:$0xff] 0.0
    %34 = vst [vmem:[#allocation2 + $0x78] sm:$0xff] 0.0
    %35 = vst [vmem:[#allocation2 + $0x80] sm:$0xff] 0.0
    %36 = vst [vmem:[#allocation2 + $0x88] sm:$0xff] 0.0
    %37 = vst [vmem:[#allocation2 + $0x90] sm:$0xff] 0.0
    %38 = vst [vmem:[#allocation2 + $0x98] sm:$0xff] 0.0
    %39 = vst [vmem:[#allocation2 + $0xa0] sm:$0xff] 0.0
    %40 = vst [vmem:[#allocation2 + $0xa8] sm:$0xff] 0.0
    %41 = vst [vmem:[#allocation2 + $0xb0] sm:$0xff] 0.0
    %42 = vst [vmem:[#allocation2 + $0xb8] sm:$0xff] 0.0
    %43 = vst [vmem:[#allocation2 + $0xc0] sm:$0xff] 0.0
    %44 = vst [vmem:[#allocation2 + $0xc8] sm:$0xff] 0.0
    %45 = vst [vmem:[#allocation2 + $0xd0] sm:$0xff] 0.0
    %46 = vst [vmem:[#allocation2 + $0xd8] sm:$0xff] 0.0
    %47 = vst [vmem:[#allocation2 + $0xe0] sm:$0xff] 0.0
    %48 = vst [vmem:[#allocation2 + $0xe8] sm:$0xff] 0.0
    %49 = vst [vmem:[#allocation2 + $0xf0] sm:$0xff] 0.0
    %50 = vst [vmem:[#allocation2 + $0xf8] sm:$0xff] 0.0
    %51 = vst [vmem:[#allocation2 + $0x100] sm:$0xff] 0.0
    %52 = vst [vmem:[#allocation2 + $0x108] sm:$0xff] 0.0
    %53 = vst [vmem:[#allocation2 + $0x110] sm:$0xff] 0.0
    %54 = vst [vmem:[#allocation2 + $0x118] sm:$0xff] 0.0
    %55 = vst [vmem:[#allocation2 + $0x120] sm:$0xff] 0.0
    %56 = vst [vmem:[#allocation2 + $0x128] sm:$0xff] 0.0
    %57 = vst [vmem:[#allocation2 + $0x130] sm:$0xff] 0.0
    %58 = vst [vmem:[#allocation2 + $0x138] sm:$0xff] 0.0
    %59 = vst [vmem:[#allocation2 + $0x140] sm:$0xff] 0.0
    %60 = vst [vmem:[#allocation2 + $0x148] sm:$0xff] 0.0
    %61 = vst [vmem:[#allocation2 + $0x150] sm:$0xff] 0.0
    %62 = vst [vmem:[#allocation2 + $0x158] sm:$0xff] 0.0
    %63 = vst [vmem:[#allocation2 + $0x160] sm:$0xff] 0.0
    %64 = vst [vmem:[#allocation2 + $0x168] sm:$0xff] 0.0
    %65 = vst [vmem:[#allocation2 + $0x170] sm:$0xff] 0.0
    %66 = vst [vmem:[#allocation2 + $0x178] sm:$0xff] 0.0
    %67 = vst [vmem:[#allocation2 + $0x180] sm:$0xff] 0.0
    %68 = vst [vmem:[#allocation2 + $0x188] sm:$0xff] 0.0
    %69 = vst [vmem:[#allocation2 + $0x190] sm:$0xff] 0.0
    %70 = vst [vmem:[#allocation2 + $0x198] sm:$0xff] 0.0
    %71 = vst [vmem:[#allocation2 + $0x1a0] sm:$0xff] 0.0
    %72 = vst [vmem:[#allocation2 + $0x1a8] sm:$0xff] 0.0
    %73 = vst [vmem:[#allocation2 + $0x1b0] sm:$0xff] 0.0
    %74 = vst [vmem:[#allocation2 + $0x1b8] sm:$0xff] 0.0
    %75 = vst [vmem:[#allocation2 + $0x1c0] sm:$0xff] 0.0
    %76 = vst [vmem:[#allocation2 + $0x1c8] sm:$0xff] 0.0
    %77 = vst [vmem:[#allocation2 + $0x1d0] sm:$0xff] 0.0
    %78 = vst [vmem:[#allocation2 + $0x1d8] sm:$0xff] 0.0
    %79 = vst [vmem:[#allocation2 + $0x1e0] sm:$0xff] 0.0
    %80 = vst [vmem:[#allocation2 + $0x1e8] sm:$0xff] 0.0
    %81 = vst [vmem:[#allocation2 + $0x1f0] sm:$0xff] 0.0
    %82 = vst [vmem:[#allocation2 + $0x1f8] sm:$0xff] 0.0
  $region17: #{encoder_forward.5} parent=0 // pred_fallthru
    _
  %v83 = vld [vmem:[#allocation2] sm:$0xff]
  %v84 = vld [vmem:[#allocation2 + $0x8] sm:$0xff]
  %v85 = vld [vmem:[#allocation2 + $0x10] sm:$0xff]
  %v86 = vld [vmem:[#allocation2 + $0x18] sm:$0xff]
  %v87 = vld [vmem:[#allocation2 + $0x20] sm:$0xff]
  %v88 = vld [vmem:[#allocation2 + $0x28] sm:$0xff]
  %v89 = vld [vmem:[#allocation2 + $0x30] sm:$0xff]
  %v90 = vld [vmem:[#allocation2 + $0x38] sm:$0xff]
  %v91 = vld [vmem:[#allocation2 + $0x40] sm:$0xff]
  %v92 = vld [vmem:[#allocation2 + $0x48] sm:$0xff]
  %v93 = vld [vmem:[#allocation2 + $0x50] sm:$0xff]
  %v94 = vld [vmem:[#allocation2 + $0x58] sm:$0xff]
  %v95 = vld [vmem:[#allocation2 + $0x60] sm:$0xff]
  %v96 = vld [vmem:[#allocation2 + $0x68] sm:$0xff]
  %v97 = vld [vmem:[#allocation2 + $0x70] sm:$0xff]
  %v98 = vld [vmem:[#allocation2 + $0x78] sm:$0xff]
  %v99 = vld [vmem:[#allocation2 + $0x80] sm:$0xff]
  %v100 = vld [vmem:[#allocation2 + $0x88] sm:$0xff]
  %v101 = vld [vmem:[#allocation2 + $0x90] sm:$0xff]
  %v102 = vld [vmem:[#allocation2 + $0x98] sm:$0xff]
  %v103 = vld [vmem:[#allocation2 + $0xa0] sm:$0xff]
  %v104 = vld [vmem:[#allocation2 + $0xa8] sm:$0xff]
  %v105 = vld [vmem:[#allocation2 + $0xb0] sm:$0xff]
  %v106 = vld [vmem:[#allocation2 + $0xb8] sm:$0xff]
  %v107 = vld [vmem:[#allocation2 + $0xc0] sm:$0xff]
  %v108 = vld [vmem:[#allocation2 + $0xc8] sm:$0xff]
  %v109 = vld [vmem:[#allocation2 + $0xd0] sm:$0xff]
  %v110 = vld [vmem:[#allocation2 + $0xd8] sm:$0xff]
  %v111 = vld [vmem:[#allocation2 + $0xe0] sm:$0xff]
  %v112 = vld [vmem:[#allocation2 + $0xe8] sm:$0xff]
  %v113 = vld [vmem:[#allocation2 + $0xf0] sm:$0xff]
  %v114 = vld [vmem:[#allocation2 + $0xf8] sm:$0xff]
  %v115 = vld [vmem:[#allocation2 + $0x100] sm:$0xff]
  %v116 = vld [vmem:[#allocation2 + $0x108] sm:$0xff]
  %v117 = vld [vmem:[#allocation2 + $0x110] sm:$0xff]
  %v118 = vld [vmem:[#allocation2 + $0x118] sm:$0xff]
  %v119 = vld [vmem:[#allocation2 + $0x120] sm:$0xff]
  %v120 = vld [vmem:[#allocation2 + $0x128] sm:$0xff]
  %v121 = vld [vmem:[#allocation2 + $0x130] sm:$0xff]
  %v122 = vld [vmem:[#allocation2 + $0x138] sm:$0xff]
  %v123 = vld [vmem:[#allocation2 + $0x140] sm:$0xff]
  %v124 = vld [vmem:[#allocation2 + $0x148] sm:$0xff]
  %v125 = vld [vmem:[#allocation2 + $0x150] sm:$0xff]
  %v126 = vld [vmem:[#allocation2 + $0x158] sm:$0xff]
  %v127 = vld [vmem:[#allocation2 + $0x160] sm:$0xff]
  %v128 = vld [vmem:[#allocation2 + $0x168] sm:$0xff]
  %v129 = vld [vmem:[#allocation2 + $0x170] sm:$0xff]
  %v130 = vld [vmem:[#allocation2 + $0x178] sm:$0xff]
  %v131 = vld [vmem:[#allocation2 + $0x180] sm:$0xff]
  %v132 = vld [vmem:[#allocation2 + $0x188] sm:$0xff]
  %v133 = vld [vmem:[#allocation2 + $0x190] sm:$0xff]
  %v134 = vld [vmem:[#allocation2 + $0x198] sm:$0xff]
  %v135 = vld [vmem:[#allocation2 + $0x1a0] sm:$0xff]
  %v136 = vld [vmem:[#allocation2 + $0x1a8] sm:$0xff]
  %v137 = vld [vmem:[#allocation2 + $0x1b0] sm:$0xff]
  %v138 = vld [vmem:[#allocation2 + $0x1b8] sm:$0xff]
  %v139 = vld [vmem:[#allocation2 + $0x1c0] sm:$0xff]
  %v140 = vld [vmem:[#allocation2 + $0x1c8] sm:$0xff]
  %v141 = vld [vmem:[#allocation2 + $0x1d0] sm:$0xff]
  %v142 = vld [vmem:[#allocation2 + $0x1d8] sm:$0xff]
  %v143 = vld [vmem:[#allocation2 + $0x1e0] sm:$0xff]
  %v144 = vld [vmem:[#allocation2 + $0x1e8] sm:$0xff]
  %v145 = vld [vmem:[#allocation2 + $0x1f0] sm:$0xff]
  %v146 = vld [vmem:[#allocation2 + $0x1f8] sm:$0xff]
  %v147 = vld [vmem:[%s0] sm:$0xff]
  %v148 = vld [vmem:[%s0 + $0x8] sm:$0xff]
  %v149 = vld [vmem:[%s0 + $0x10] sm:$0xff]
  %v150 = vld [vmem:[%s0 + $0x18] sm:$0xff]
  %v151 = vld [vmem:[%s0 + $0x20] sm:$0xff]
  %v152 = vld [vmem:[%s0 + $0x28] sm:$0xff]
  %v153 = vld [vmem:[%s0 + $0x30] sm:$0xff]
  %v154 = vld [vmem:[%s0 + $0x38] sm:$0xff]
  %v155 = vld [vmem:[%s0 + $0x40] sm:$0xff]
  %v156 = vld [vmem:[%s0 + $0x48] sm:$0xff]
  %v157 = vld [vmem:[%s0 + $0x50] sm:$0xff]
  %v158 = vld [vmem:[%s0 + $0x58] sm:$0xff]
  %v159 = vld [vmem:[%s0 + $0x60] sm:$0xff]
  %v160 = vld [vmem:[%s0 + $0x68] sm:$0xff]
  %v161 = vld [vmem:[%s0 + $0x70] sm:$0xff]
  %v162 = vld [vmem:[%s0 + $0x78] sm:$0xff]
  %v163 = vld [vmem:[%s0 + $0x80] sm:$0xff]
  %v164 = vld [vmem:[%s0 + $0x88] sm:$0xff]
  %v165 = vld [vmem:[%s0 + $0x90] sm:$0xff]
  %v166 = vld [vmem:[%s0 + $0x98] sm:$0xff]
  %v167 = vld [vmem:[%s0 + $0xa0] sm:$0xff]
  %v168 = vld [vmem:[%s0 + $0xa8] sm:$0xff]
  %v169 = vld [vmem:[%s0 + $0xb0] sm:$0xff]
  %v170 = vld [vmem:[%s0 + $0xb8] sm:$0xff]
  %v171 = vld [vmem:[%s0 + $0xc0] sm:$0xff]
  %v172 = vld [vmem:[%s0 + $0xc8] sm:$0xff]
  %v173 = vld [vmem:[%s0 + $0xd0] sm:$0xff]
  %v174 = vld [vmem:[%s0 + $0xd8] sm:$0xff]
  %v175 = vld [vmem:[%s0 + $0xe0] sm:$0xff]
  %v176 = vld [vmem:[%s0 + $0xe8] sm:$0xff]
  %v177 = vld [vmem:[%s0 + $0xf0] sm:$0xff]
  %v178 = vld [vmem:[%s0 + $0xf8] sm:$0xff]
  %v179 = vld [vmem:[%s0 + $0x100] sm:$0xff]
  %v180 = vld [vmem:[%s0 + $0x108] sm:$0xff]
  %v181 = vld [vmem:[%s0 + $0x110] sm:$0xff]
  %v182 = vld [vmem:[%s0 + $0x118] sm:$0xff]
  %v183 = vld [vmem:[%s0 + $0x120] sm:$0xff]
  %v184 = vld [vmem:[%s0 + $0x128] sm:$0xff]
  %v185 = vld [vmem:[%s0 + $0x130] sm:$0xff]
  %v186 = vld [vmem:[%s0 + $0x138] sm:$0xff]
  %v187 = vld [vmem:[%s0 + $0x140] sm:$0xff]
  %v188 = vld [vmem:[%s0 + $0x148] sm:$0xff]
  %v189 = vld [vmem:[%s0 + $0x150] sm:$0xff]
  %v190 = vld [vmem:[%s0 + $0x158] sm:$0xff]
  %v191 = vld [vmem:[%s0 + $0x160] sm:$0xff]
  %v192 = vld [vmem:[%s0 + $0x168] sm:$0xff]
  %v193 = vld [vmem:[%s0 + $0x170] sm:$0xff]
  %v194 = vld [vmem:[%s0 + $0x178] sm:$0xff]
  %v195 = vld [vmem:[%s0 + $0x180] sm:$0xff]
  %v196 = vld [vmem:[%s0 + $0x188] sm:$0xff]
  %v197 = vld [vmem:[%s0 + $0x190] sm:$0xff]
  %v198 = vld [vmem:[%s0 + $0x198] sm:$0xff]
  %v199 = vld [vmem:[%s0 + $0x1a0] sm:$0xff]
  %v200 = vld [vmem:[%s0 + $0x1a8] sm:$0xff]
  %v201 = vld [vmem:[%s0 + $0x1b0] sm:$0xff]
  %v202 = vld [vmem:[%s0 + $0x1b8] sm:$0xff]
  %v203 = vld [vmem:[%s0 + $0x1c0] sm:$0xff]
  %v204 = vld [vmem:[%s0 + $0x1c8] sm:$0xff]
  %v205 = vld [vmem:[%s0 + $0x1d0] sm:$0xff]
  %v206 = vld [vmem:[%s0 + $0x1d8] sm:$0xff]
  %v207 = vld [vmem:[%s0 + $0x1e0] sm:$0xff]
  %v208 = vld [vmem:[%s0 + $0x1e8] sm:$0xff]
  %v209 = vld [vmem:[%s0 + $0x1f0] sm:$0xff]
  %v210 = vld [vmem:[%s0 + $0x1f8] sm:$0xff]
  %v211 = vld [vmem:[%s0 + $0x200] sm:$0xff]
  %v212 = vld [vmem:[%s0 + $0x208] sm:$0xff]
  %v213 = vld [vmem:[%s0 + $0x210] sm:$0xff]
  %v214 = vld [vmem:[%s0 + $0x218] sm:$0xff]
  %v215 = vld [vmem:[%s0 + $0x220] sm:$0xff]
  %v216 = vld [vmem:[%s0 + $0x228] sm:$0xff]
  %v217 = vld [vmem:[%s0 + $0x230] sm:$0xff]
  %v218 = vld [vmem:[%s0 + $0x238] sm:$0xff]
  %v219 = vld [vmem:[%s0 + $0x240] sm:$0xff]
  %v220 = vld [vmem:[%s0 + $0x248] sm:$0xff]
  %v221 = vld [vmem:[%s0 + $0x250] sm:$0xff]
  %v222 = vld [vmem:[%s0 + $0x258] sm:$0xff]
  %v223 = vld [vmem:[%s0 + $0x260] sm:$0xff]
  %v224 = vld [vmem:[%s0 + $0x268] sm:$0xff]
  %v225 = vld [vmem:[%s0 + $0x270] sm:$0xff]
  %v226 = vld [vmem:[%s0 + $0x278] sm:$0xff]
  %v227 = vld [vmem:[%s0 + $0x280] sm:$0xff]
  %v228 = vld [vmem:[%s0 + $0x288] sm:$0xff]
  %v229 = vld [vmem:[%s0 + $0x290] sm:$0xff]
  %v230 = vld [vmem:[%s0 + $0x298] sm:$0xff]
  %v231 = vld [vmem:[%s0 + $0x2a0] sm:$0xff]
  %v232 = vld [vmem:[%s0 + $0x2a8] sm:$0xff]
  %v233 = vld [vmem:[%s0 + $0x2b0] sm:$0xff]
  %v234 = vld [vmem:[%s0 + $0x2b8] sm:$0xff]
  %v235 = vld [vmem:[%s0 + $0x2c0] sm:$0xff]
  %v236 = vld [vmem:[%s0 + $0x2c8] sm:$0xff]
  %v237 = vld [vmem:[%s0 + $0x2d0] sm:$0xff]
  %v238 = vld [vmem:[%s0 + $0x2d8] sm:$0xff]
  %v239 = vld [vmem:[%s0 + $0x2e0] sm:$0xff]
  %v240 = vld [vmem:[%s0 + $0x2e8] sm:$0xff]
  %v241 = vld [vmem:[%s0 + $0x2f0] sm:$0xff]
  %v242 = vld [vmem:[%s0 + $0x2f8] sm:$0xff]
  %v243 = vld [vmem:[%s0 + $0x300] sm:$0xff]
  %v244 = vld [vmem:[%s0 + $0x308] sm:$0xff]
  %v245 = vld [vmem:[%s0 + $0x310] sm:$0xff]
  %v246 = vld [vmem:[%s0 + $0x318] sm:$0xff]
  %v247 = vld [vmem:[%s0 + $0x320] sm:$0xff]
  %v248 = vld [vmem:[%s0 + $0x328] sm:$0xff]
  %v249 = vld [vmem:[%s0 + $0x330] sm:$0xff]
  %v250 = vld [vmem:[%s0 + $0x338] sm:$0xff]
  %v251 = vld [vmem:[%s0 + $0x340] sm:$0xff]
  %v252 = vld [vmem:[%s0 + $0x348] sm:$0xff]
  %v253 = vld [vmem:[%s0 + $0x350] sm:$0xff]
  %v254 = vld [vmem:[%s0 + $0x358] sm:$0xff]
  %v255 = vld [vmem:[%s0 + $0x360] sm:$0xff]
  %v256 = vld [vmem:[%s0 + $0x368] sm:$0xff]
  %v257 = vld [vmem:[%s0 + $0x370] sm:$0xff]
  %v258 = vld [vmem:[%s0 + $0x378] sm:$0xff]
  %v259 = vld [vmem:[%s0 + $0x380] sm:$0xff]
  %v260 = vld [vmem:[%s0 + $0x388] sm:$0xff]
  %v261 = vld [vmem:[%s0 + $0x390] sm:$0xff]
  %v262 = vld [vmem:[%s0 + $0x398] sm:$0xff]
  %v263 = vld [vmem:[%s0 + $0x3a0] sm:$0xff]
  %v264 = vld [vmem:[%s0 + $0x3a8] sm:$0xff]
  %v265 = vld [vmem:[%s0 + $0x3b0] sm:$0xff]
  %v266 = vld [vmem:[%s0 + $0x3b8] sm:$0xff]
  %v267 = vld [vmem:[%s0 + $0x3c0] sm:$0xff]
  %v268 = vld [vmem:[%s0 + $0x3c8] sm:$0xff]
  %v269 = vld [vmem:[%s0 + $0x3d0] sm:$0xff]
  %v270 = vld [vmem:[%s0 + $0x3d8] sm:$0xff]
  %v271 = vld [vmem:[%s0 + $0x3e0] sm:$0xff]
  %v272 = vld [vmem:[%s0 + $0x3e8] sm:$0xff]
  %v273 = vld [vmem:[%s0 + $0x3f0] sm:$0xff]
  %v274 = vld [vmem:[%s0 + $0x3f8] sm:$0xff]
  %v275 = vld [vmem:[%s1] sm:$0xf]
  %v276 = vld [vmem:[%s1 + $0x4] sm:$0xf]
  %v277 = vld [vmem:[%s1 + $0x8] sm:$0xf]
  %v278 = vld [vmem:[%s1 + $0xc] sm:$0xf]
  %v279 = vld [vmem:[%s1 + $0x10] sm:$0xf]
  %v280 = vld [vmem:[%s1 + $0x14] sm:$0xf]
  %v281 = vld [vmem:[%s1 + $0x18] sm:$0xf]
  %v282 = vld [vmem:[%s1 + $0x1c] sm:$0xf]
  %v283 = vld [vmem:[%s1 + $0x20] sm:$0xf]
  %v284 = vld [vmem:[%s1 + $0x24] sm:$0xf]
  %v285 = vld [vmem:[%s1 + $0x28] sm:$0xf]
  %v286 = vld [vmem:[%s1 + $0x2c] sm:$0xf]
  %v287 = vld [vmem:[%s1 + $0x30] sm:$0xf]
  %v288 = vld [vmem:[%s1 + $0x34] sm:$0xf]
  %v289 = vld [vmem:[%s1 + $0x38] sm:$0xf]
  %v290 = vld [vmem:[%s1 + $0x3c] sm:$0xf]
  %v291 = vld [vmem:[%s1 + $0x40] sm:$0xf]
  %v292 = vld [vmem:[%s1 + $0x44] sm:$0xf]
  %v293 = vld [vmem:[%s1 + $0x48] sm:$0xf]
  %v294 = vld [vmem:[%s1 + $0x4c] sm:$0xf]
  %v295 = vld [vmem:[%s1 + $0x50] sm:$0xf]
  %v296 = vld [vmem:[%s1 + $0x54] sm:$0xf]
  %v297 = vld [vmem:[%s1 + $0x58] sm:$0xf]
  %v298 = vld [vmem:[%s1 + $0x5c] sm:$0xf]
  %v299 = vld [vmem:[%s1 + $0x60] sm:$0xf]
  %v300 = vld [vmem:[%s1 + $0x64] sm:$0xf]
  %v301 = vld [vmem:[%s1 + $0x68] sm:$0xf]
  %v302 = vld [vmem:[%s1 + $0x6c] sm:$0xf]
  %v303 = vld [vmem:[%s1 + $0x70] sm:$0xf]
  %v304 = vld [vmem:[%s1 + $0x74] sm:$0xf]
  %v305 = vld [vmem:[%s1 + $0x78] sm:$0xf]
  %v306 = vld [vmem:[%s1 + $0x7c] sm:$0xf]
  %v307 = vld [vmem:[%s1 + $0x80] sm:$0xf]
  %v308 = vld [vmem:[%s1 + $0x84] sm:$0xf]
  %v309 = vld [vmem:[%s1 + $0x88] sm:$0xf]
  %v310 = vld [vmem:[%s1 + $0x8c] sm:$0xf]
  %v311 = vld [vmem:[%s1 + $0x90] sm:$0xf]
  %v312 = vld [vmem:[%s1 + $0x94] sm:$0xf]
  %v313 = vld [vmem:[%s1 + $0x98] sm:$0xf]
  %v314 = vld [vmem:[%s1 + $0x9c] sm:$0xf]
  %v315 = vld [vmem:[%s1 + $0xa0] sm:$0xf]
  %v316 = vld [vmem:[%s1 + $0xa4] sm:$0xf]
  %v317 = vld [vmem:[%s1 + $0xa8] sm:$0xf]
  %v318 = vld [vmem:[%s1 + $0xac] sm:$0xf]
  %v319 = vld [vmem:[%s1 + $0xb0] sm:$0xf]
  %v320 = vld [vmem:[%s1 + $0xb4] sm:$0xf]
  %v321 = vld [vmem:[%s1 + $0xb8] sm:$0xf]
  %v322 = vld [vmem:[%s1 + $0xbc] sm:$0xf]
  %v323 = vld [vmem:[%s1 + $0xc0] sm:$0xf]
  %v324 = vld [vmem:[%s1 + $0xc4] sm:$0xf]
  %v325 = vld [vmem:[%s1 + $0xc8] sm:$0xf]
  %v326 = vld [vmem:[%s1 + $0xcc] sm:$0xf]
  %v327 = vld [vmem:[%s1 + $0xd0] sm:$0xf]
  %v328 = vld [vmem:[%s1 + $0xd4] sm:$0xf]
  %v329 = vld [vmem:[%s1 + $0xd8] sm:$0xf]
  %v330 = vld [vmem:[%s1 + $0xdc] sm:$0xf]
  %v331 = vld [vmem:[%s1 + $0xe0] sm:$0xf]
  %v332 = vld [vmem:[%s1 + $0xe4] sm:$0xf]
  %v333 = vld [vmem:[%s1 + $0xe8] sm:$0xf]
  %v334 = vld [vmem:[%s1 + $0xec] sm:$0xf]
  %v335 = vld [vmem:[%s1 + $0xf0] sm:$0xf]
  %v336 = vld [vmem:[%s1 + $0xf4] sm:$0xf]
  %v337 = vld [vmem:[%s1 + $0xf8] sm:$0xf]
  %v338 = vld [vmem:[%s1 + $0xfc] sm:$0xf]
  %v467 = vunpack.c.l.b16 %v147
  %v468 = vunpack.c.h.b16 %v147
  %v469 = vunpack.c.l.b16 %v148
  %v470 = vunpack.c.h.b16 %v148
  %v471 = vunpack.c.l.b16 %v149
  %v472 = vunpack.c.h.b16 %v149
  %v473 = vunpack.c.l.b16 %v150
  %v474 = vunpack.c.h.b16 %v150
  %v475 = vunpack.c.l.b16 %v151
  %v476 = vunpack.c.h.b16 %v151
  %v477 = vunpack.c.l.b16 %v152
  %v478 = vunpack.c.h.b16 %v152
  %v479 = vunpack.c.l.b16 %v153
  %v480 = vunpack.c.h.b16 %v153
  %v481 = vunpack.c.l.b16 %v154
  %v482 = vunpack.c.h.b16 %v154
  %v483 = vunpack.c.l.b16 %v155
  %v484 = vunpack.c.h.b16 %v155
  %v485 = vunpack.c.l.b16 %v156
  %v486 = vunpack.c.h.b16 %v156
  %v487 = vunpack.c.l.b16 %v157
  %v488 = vunpack.c.h.b16 %v157
  %v489 = vunpack.c.l.b16 %v158
  %v490 = vunpack.c.h.b16 %v158
  %v491 = vunpack.c.l.b16 %v159
  %v492 = vunpack.c.h.b16 %v159
  %v493 = vunpack.c.l.b16 %v160
  %v494 = vunpack.c.h.b16 %v160
  %v495 = vunpack.c.l.b16 %v161
  %v496 = vunpack.c.h.b16 %v161
  %v497 = vunpack.c.l.b16 %v162
  %v498 = vunpack.c.h.b16 %v162
  %v499 = vunpack.c.l.b16 %v163
  %v500 = vunpack.c.h.b16 %v163
  %v501 = vunpack.c.l.b16 %v164
  %v502 = vunpack.c.h.b16 %v164
  %v503 = vunpack.c.l.b16 %v165
  %v504 = vunpack.c.h.b16 %v165
  %v505 = vunpack.c.l.b16 %v166
  %v506 = vunpack.c.h.b16 %v166
  %v507 = vunpack.c.l.b16 %v167
  %v508 = vunpack.c.h.b16 %v167
  %v509 = vunpack.c.l.b16 %v168
  %v510 = vunpack.c.h.b16 %v168
  %v511 = vunpack.c.l.b16 %v169
  %v512 = vunpack.c.h.b16 %v169
  %v513 = vunpack.c.l.b16 %v170
  %v514 = vunpack.c.h.b16 %v170
  %v515 = vunpack.c.l.b16 %v171
  %v516 = vunpack.c.h.b16 %v171
  %v517 = vunpack.c.l.b16 %v172
  %v518 = vunpack.c.h.b16 %v172
  %v519 = vunpack.c.l.b16 %v173
  %v520 = vunpack.c.h.b16 %v173
  %v521 = vunpack.c.l.b16 %v174
  %v522 = vunpack.c.h.b16 %v174
  %v523 = vunpack.c.l.b16 %v175
  %v524 = vunpack.c.h.b16 %v175
  %v525 = vunpack.c.l.b16 %v176
  %v526 = vunpack.c.h.b16 %v176
  %v527 = vunpack.c.l.b16 %v177
  %v528 = vunpack.c.h.b16 %v177
  %v529 = vunpack.c.l.b16 %v178
  %v530 = vunpack.c.h.b16 %v178
  %v531 = vunpack.c.l.b16 %v179
  %v532 = vunpack.c.h.b16 %v179
  %v533 = vunpack.c.l.b16 %v180
  %v534 = vunpack.c.h.b16 %v180
  %v535 = vunpack.c.l.b16 %v181
  %v536 = vunpack.c.h.b16 %v181
  %v537 = vunpack.c.l.b16 %v182
  %v538 = vunpack.c.h.b16 %v182
  %v539 = vunpack.c.l.b16 %v183
  %v540 = vunpack.c.h.b16 %v183
  %v541 = vunpack.c.l.b16 %v184
  %v542 = vunpack.c.h.b16 %v184
  %v543 = vunpack.c.l.b16 %v185
  %v544 = vunpack.c.h.b16 %v185
  %v545 = vunpack.c.l.b16 %v186
  %v546 = vunpack.c.h.b16 %v186
  %v547 = vunpack.c.l.b16 %v187
  %v548 = vunpack.c.h.b16 %v187
  %v549 = vunpack.c.l.b16 %v188
  %v550 = vunpack.c.h.b16 %v188
  %v551 = vunpack.c.l.b16 %v189
  %v552 = vunpack.c.h.b16 %v189
  %v553 = vunpack.c.l.b16 %v190
  %v554 = vunpack.c.h.b16 %v190
  %v555 = vunpack.c.l.b16 %v191
  %v556 = vunpack.c.h.b16 %v191
  %v557 = vunpack.c.l.b16 %v192
  %v558 = vunpack.c.h.b16 %v192
  %v559 = vunpack.c.l.b16 %v193
  %v560 = vunpack.c.h.b16 %v193
  %v561 = vunpack.c.l.b16 %v194
  %v562 = vunpack.c.h.b16 %v194
  %v563 = vunpack.c.l.b16 %v195
  %v564 = vunpack.c.h.b16 %v195
  %v565 = vunpack.c.l.b16 %v196
  %v566 = vunpack.c.h.b16 %v196
  %v567 = vunpack.c.l.b16 %v197
  %v568 = vunpack.c.h.b16 %v197
  %v569 = vunpack.c.l.b16 %v198
  %v570 = vunpack.c.h.b16 %v198
  %v571 = vunpack.c.l.b16 %v199
  %v572 = vunpack.c.h.b16 %v199
  %v573 = vunpack.c.l.b16 %v200
  %v574 = vunpack.c.h.b16 %v200
  %v575 = vunpack.c.l.b16 %v201
  %v576 = vunpack.c.h.b16 %v201
  %v577 = vunpack.c.l.b16 %v202
  %v578 = vunpack.c.h.b16 %v202
  %v579 = vunpack.c.l.b16 %v203
  %v580 = vunpack.c.h.b16 %v203
  %v581 = vunpack.c.l.b16 %v204
  %v582 = vunpack.c.h.b16 %v204
  %v583 = vunpack.c.l.b16 %v205
  %v584 = vunpack.c.h.b16 %v205
  %v585 = vunpack.c.l.b16 %v206
  %v586 = vunpack.c.h.b16 %v206
  %v587 = vunpack.c.l.b16 %v207
  %v588 = vunpack.c.h.b16 %v207
  %v589 = vunpack.c.l.b16 %v208
  %v590 = vunpack.c.h.b16 %v208
  %v591 = vunpack.c.l.b16 %v209
  %v592 = vunpack.c.h.b16 %v209
  %v593 = vunpack.c.l.b16 %v210
  %v594 = vunpack.c.h.b16 %v210
  %v595 = vunpack.c.l.b16 %v211
  %v596 = vunpack.c.h.b16 %v211
  %v597 = vunpack.c.l.b16 %v212
  %v598 = vunpack.c.h.b16 %v212
  %v599 = vunpack.c.l.b16 %v213
  %v600 = vunpack.c.h.b16 %v213
  %v601 = vunpack.c.l.b16 %v214
  %v602 = vunpack.c.h.b16 %v214
  %v603 = vunpack.c.l.b16 %v215
  %v604 = vunpack.c.h.b16 %v215
  %v605 = vunpack.c.l.b16 %v216
  %v606 = vunpack.c.h.b16 %v216
  %v607 = vunpack.c.l.b16 %v217
  %v608 = vunpack.c.h.b16 %v217
  %v609 = vunpack.c.l.b16 %v218
  %v610 = vunpack.c.h.b16 %v218
  %v611 = vunpack.c.l.b16 %v219
  %v612 = vunpack.c.h.b16 %v219
  %v613 = vunpack.c.l.b16 %v220
  %v614 = vunpack.c.h.b16 %v220
  %v615 = vunpack.c.l.b16 %v221
  %v616 = vunpack.c.h.b16 %v221
  %v617 = vunpack.c.l.b16 %v222
  %v618 = vunpack.c.h.b16 %v222
  %v619 = vunpack.c.l.b16 %v223
  %v620 = vunpack.c.h.b16 %v223
  %v621 = vunpack.c.l.b16 %v224
  %v622 = vunpack.c.h.b16 %v224
  %v623 = vunpack.c.l.b16 %v225
  %v624 = vunpack.c.h.b16 %v225
  %v625 = vunpack.c.l.b16 %v226
  %v626 = vunpack.c.h.b16 %v226
  %v627 = vunpack.c.l.b16 %v227
  %v628 = vunpack.c.h.b16 %v227
  %v629 = vunpack.c.l.b16 %v228
  %v630 = vunpack.c.h.b16 %v228
  %v631 = vunpack.c.l.b16 %v229
  %v632 = vunpack.c.h.b16 %v229
  %v633 = vunpack.c.l.b16 %v230
  %v634 = vunpack.c.h.b16 %v230
  %v635 = vunpack.c.l.b16 %v231
  %v636 = vunpack.c.h.b16 %v231
  %v637 = vunpack.c.l.b16 %v232
  %v638 = vunpack.c.h.b16 %v232
  %v639 = vunpack.c.l.b16 %v233
  %v640 = vunpack.c.h.b16 %v233
  %v641 = vunpack.c.l.b16 %v234
  %v642 = vunpack.c.h.b16 %v234
  %v643 = vunpack.c.l.b16 %v235
  %v644 = vunpack.c.h.b16 %v235
  %v645 = vunpack.c.l.b16 %v236
  %v646 = vunpack.c.h.b16 %v236
  %v647 = vunpack.c.l.b16 %v237
  %v648 = vunpack.c.h.b16 %v237
  %v649 = vunpack.c.l.b16 %v238
  %v650 = vunpack.c.h.b16 %v238
  %v651 = vunpack.c.l.b16 %v239
  %v652 = vunpack.c.h.b16 %v239
  %v653 = vunpack.c.l.b16 %v240
  %v654 = vunpack.c.h.b16 %v240
  %v655 = vunpack.c.l.b16 %v241
  %v656 = vunpack.c.h.b16 %v241
  %v657 = vunpack.c.l.b16 %v242
  %v658 = vunpack.c.h.b16 %v242
  %v659 = vunpack.c.l.b16 %v243
  %v660 = vunpack.c.h.b16 %v243
  %v661 = vunpack.c.l.b16 %v244
  %v662 = vunpack.c.h.b16 %v244
  %v663 = vunpack.c.l.b16 %v245
  %v664 = vunpack.c.h.b16 %v245
  %v665 = vunpack.c.l.b16 %v246
  %v666 = vunpack.c.h.b16 %v246
  %v667 = vunpack.c.l.b16 %v247
  %v668 = vunpack.c.h.b16 %v247
  %v669 = vunpack.c.l.b16 %v248
  %v670 = vunpack.c.h.b16 %v248
  %v671 = vunpack.c.l.b16 %v249
  %v672 = vunpack.c.h.b16 %v249
  %v673 = vunpack.c.l.b16 %v250
  %v674 = vunpack.c.h.b16 %v250
  %v675 = vunpack.c.l.b16 %v251
  %v676 = vunpack.c.h.b16 %v251
  %v677 = vunpack.c.l.b16 %v252
  %v678 = vunpack.c.h.b16 %v252
  %v679 = vunpack.c.l.b16 %v253
  %v680 = vunpack.c.h.b16 %v253
  %v681 = vunpack.c.l.b16 %v254
  %v682 = vunpack.c.h.b16 %v254
  %v683 = vunpack.c.l.b16 %v255
  %v684 = vunpack.c.h.b16 %v255
  %v685 = vunpack.c.l.b16 %v256
  %v686 = vunpack.c.h.b16 %v256
  %v687 = vunpack.c.l.b16 %v257
  %v688 = vunpack.c.h.b16 %v257
  %v689 = vunpack.c.l.b16 %v258
  %v690 = vunpack.c.h.b16 %v258
  %v691 = vunpack.c.l.b16 %v259
  %v692 = vunpack.c.h.b16 %v259
  %v693 = vunpack.c.l.b16 %v260
  %v694 = vunpack.c.h.b16 %v260
  %v695 = vunpack.c.l.b16 %v261
  %v696 = vunpack.c.h.b16 %v261
  %v697 = vunpack.c.l.b16 %v262
  %v698 = vunpack.c.h.b16 %v262
  %v699 = vunpack.c.l.b16 %v263
  %v700 = vunpack.c.h.b16 %v263
  %v701 = vunpack.c.l.b16 %v264
  %v702 = vunpack.c.h.b16 %v264
  %v703 = vunpack.c.l.b16 %v265
  %v704 = vunpack.c.h.b16 %v265
  %v705 = vunpack.c.l.b16 %v266
  %v706 = vunpack.c.h.b16 %v266
  %v707 = vunpack.c.l.b16 %v267
  %v708 = vunpack.c.h.b16 %v267
  %v709 = vunpack.c.l.b16 %v268
  %v710 = vunpack.c.h.b16 %v268
  %v711 = vunpack.c.l.b16 %v269
  %v712 = vunpack.c.h.b16 %v269
  %v713 = vunpack.c.l.b16 %v270
  %v714 = vunpack.c.h.b16 %v270
  %v715 = vunpack.c.l.b16 %v271
  %v716 = vunpack.c.h.b16 %v271
  %v717 = vunpack.c.l.b16 %v272
  %v718 = vunpack.c.h.b16 %v272
  %v719 = vunpack.c.l.b16 %v273
  %v720 = vunpack.c.h.b16 %v273
  %v721 = vunpack.c.l.b16 %v274
  %v722 = vunpack.c.h.b16 %v274
  %v723 = vpack.c.b16 %v471, %v467
  %v724 = vpack.c.b16 %v472, %v468
  %v725 = vpack.c.b16 %v473, %v469
  %v726 = vpack.c.b16 %v474, %v470
  %v727 = vpack.c.b16 %v479, %v475
  %v728 = vpack.c.b16 %v480, %v476
  %v729 = vpack.c.b16 %v481, %v477
  %v730 = vpack.c.b16 %v482, %v478
  %v731 = vpack.c.b16 %v487, %v483
  %v732 = vpack.c.b16 %v488, %v484
  %v733 = vpack.c.b16 %v489, %v485
  %v734 = vpack.c.b16 %v490, %v486
  %v735 = vpack.c.b16 %v495, %v491
  %v736 = vpack.c.b16 %v496, %v492
  %v737 = vpack.c.b16 %v497, %v493
  %v738 = vpack.c.b16 %v498, %v494
  %v739 = vpack.c.b16 %v503, %v499
  %v740 = vpack.c.b16 %v504, %v500
  %v741 = vpack.c.b16 %v505, %v501
  %v742 = vpack.c.b16 %v506, %v502
  %v743 = vpack.c.b16 %v511, %v507
  %v744 = vpack.c.b16 %v512, %v508
  %v745 = vpack.c.b16 %v513, %v509
  %v746 = vpack.c.b16 %v514, %v510
  %v747 = vpack.c.b16 %v519, %v515
  %v748 = vpack.c.b16 %v520, %v516
  %v749 = vpack.c.b16 %v521, %v517
  %v750 = vpack.c.b16 %v522, %v518
  %v751 = vpack.c.b16 %v527, %v523
  %v752 = vpack.c.b16 %v528, %v524
  %v753 = vpack.c.b16 %v529, %v525
  %v754 = vpack.c.b16 %v530, %v526
  %v755 = vpack.c.b16 %v535, %v531
  %v756 = vpack.c.b16 %v536, %v532
  %v757 = vpack.c.b16 %v537, %v533
  %v758 = vpack.c.b16 %v538, %v534
  %v759 = vpack.c.b16 %v543, %v539
  %v760 = vpack.c.b16 %v544, %v540
  %v761 = vpack.c.b16 %v545, %v541
  %v762 = vpack.c.b16 %v546, %v542
  %v763 = vpack.c.b16 %v551, %v547
  %v764 = vpack.c.b16 %v552, %v548
  %v765 = vpack.c.b16 %v553, %v549
  %v766 = vpack.c.b16 %v554, %v550
  %v767 = vpack.c.b16 %v559, %v555
  %v768 = vpack.c.b16 %v560, %v556
  %v769 = vpack.c.b16 %v561, %v557
  %v770 = vpack.c.b16 %v562, %v558
  %v771 = vpack.c.b16 %v567, %v563
  %v772 = vpack.c.b16 %v568, %v564
  %v773 = vpack.c.b16 %v569, %v565
  %v774 = vpack.c.b16 %v570, %v566
  %v775 = vpack.c.b16 %v575, %v571
  %v776 = vpack.c.b16 %v576, %v572
  %v777 = vpack.c.b16 %v577, %v573
  %v778 = vpack.c.b16 %v578, %v574
  %v779 = vpack.c.b16 %v583, %v579
  %v780 = vpack.c.b16 %v584, %v580
  %v781 = vpack.c.b16 %v585, %v581
  %v782 = vpack.c.b16 %v586, %v582
  %v783 = vpack.c.b16 %v591, %v587
  %v784 = vpack.c.b16 %v592, %v588
  %v785 = vpack.c.b16 %v593, %v589
  %v786 = vpack.c.b16 %v594, %v590
  %v787 = vpack.c.b16 %v599, %v595
  %v788 = vpack.c.b16 %v600, %v596
  %v789 = vpack.c.b16 %v601, %v597
  %v790 = vpack.c.b16 %v602, %v598
  %v791 = vpack.c.b16 %v607, %v603
  %v792 = vpack.c.b16 %v608, %v604
  %v793 = vpack.c.b16 %v609, %v605
  %v794 = vpack.c.b16 %v610, %v606
  %v795 = vpack.c.b16 %v615, %v611
  %v796 = vpack.c.b16 %v616, %v612
  %v797 = vpack.c.b16 %v617, %v613
  %v798 = vpack.c.b16 %v618, %v614
  %v799 = vpack.c.b16 %v623, %v619
  %v800 = vpack.c.b16 %v624, %v620
  %v801 = vpack.c.b16 %v625, %v621
  %v802 = vpack.c.b16 %v626, %v622
  %v803 = vpack.c.b16 %v631, %v627
  %v804 = vpack.c.b16 %v632, %v628
  %v805 = vpack.c.b16 %v633, %v629
  %v806 = vpack.c.b16 %v634, %v630
  %v807 = vpack.c.b16 %v639, %v635
  %v808 = vpack.c.b16 %v640, %v636
  %v809 = vpack.c.b16 %v641, %v637
  %v810 = vpack.c.b16 %v642, %v638
  %v811 = vpack.c.b16 %v647, %v643
  %v812 = vpack.c.b16 %v648, %v644
  %v813 = vpack.c.b16 %v649, %v645
  %v814 = vpack.c.b16 %v650, %v646
  %v815 = vpack.c.b16 %v655, %v651
  %v816 = vpack.c.b16 %v656, %v652
  %v817 = vpack.c.b16 %v657, %v653
  %v818 = vpack.c.b16 %v658, %v654
  %v819 = vpack.c.b16 %v663, %v659
  %v820 = vpack.c.b16 %v664, %v660
  %v821 = vpack.c.b16 %v665, %v661
  %v822 = vpack.c.b16 %v666, %v662
  %v823 = vpack.c.b16 %v671, %v667
  %v824 = vpack.c.b16 %v672, %v668
  %v825 = vpack.c.b16 %v673, %v669
  %v826 = vpack.c.b16 %v674, %v670
  %v827 = vpack.c.b16 %v679, %v675
  %v828 = vpack.c.b16 %v680, %v676
  %v829 = vpack.c.b16 %v681, %v677
  %v830 = vpack.c.b16 %v682, %v678
  %v831 = vpack.c.b16 %v687, %v683
  %v832 = vpack.c.b16 %v688, %v684
  %v833 = vpack.c.b16 %v689, %v685
  %v834 = vpack.c.b16 %v690, %v686
  %v835 = vpack.c.b16 %v695, %v691
  %v836 = vpack.c.b16 %v696, %v692
  %v837 = vpack.c.b16 %v697, %v693
  %v838 = vpack.c.b16 %v698, %v694
  %v839 = vpack.c.b16 %v703, %v699
  %v840 = vpack.c.b16 %v704, %v700
  %v841 = vpack.c.b16 %v705, %v701
  %v842 = vpack.c.b16 %v706, %v702
  %v843 = vpack.c.b16 %v711, %v707
  %v844 = vpack.c.b16 %v712, %v708
  %v845 = vpack.c.b16 %v713, %v709
  %v846 = vpack.c.b16 %v714, %v710
  %v847 = vpack.c.b16 %v719, %v715
  %v848 = vpack.c.b16 %v720, %v716
  %v849 = vpack.c.b16 %v721, %v717
  %v850 = vpack.c.b16 %v722, %v718
  %v1043 = vunpack.c.l.b16 %v275
  %v1044 = vunpack.c.l.b16 %v276
  %v1045 = vunpack.c.l.b16 %v277
  %v1046 = vunpack.c.l.b16 %v278
  %v1047 = vunpack.c.l.b16 %v279
  %v1048 = vunpack.c.l.b16 %v280
  %v1049 = vunpack.c.l.b16 %v281
  %v1050 = vunpack.c.l.b16 %v282
  %v1051 = vunpack.c.l.b16 %v283
  %v1052 = vunpack.c.l.b16 %v284
  %v1053 = vunpack.c.l.b16 %v285
  %v1054 = vunpack.c.l.b16 %v286
  %v1055 = vunpack.c.l.b16 %v287
  %v1056 = vunpack.c.l.b16 %v288
  %v1057 = vunpack.c.l.b16 %v289
  %v1058 = vunpack.c.l.b16 %v290
  %v1059 = vunpack.c.l.b16 %v291
  %v1060 = vunpack.c.l.b16 %v292
  %v1061 = vunpack.c.l.b16 %v293
  %v1062 = vunpack.c.l.b16 %v294
  %v1063 = vunpack.c.l.b16 %v295
  %v1064 = vunpack.c.l.b16 %v296
  %v1065 = vunpack.c.l.b16 %v297
  %v1066 = vunpack.c.l.b16 %v298
  %v1067 = vunpack.c.l.b16 %v299
  %v1068 = vunpack.c.l.b16 %v300
  %v1069 = vunpack.c.l.b16 %v301
  %v1070 = vunpack.c.l.b16 %v302
  %v1071 = vunpack.c.l.b16 %v303
  %v1072 = vunpack.c.l.b16 %v304
  %v1073 = vunpack.c.l.b16 %v305
  %v1074 = vunpack.c.l.b16 %v306
  %v1075 = vunpack.c.l.b16 %v307
  %v1076 = vunpack.c.l.b16 %v308
  %v1077 = vunpack.c.l.b16 %v309
  %v1078 = vunpack.c.l.b16 %v310
  %v1079 = vunpack.c.l.b16 %v311
  %v1080 = vunpack.c.l.b16 %v312
  %v1081 = vunpack.c.l.b16 %v313
  %v1082 = vunpack.c.l.b16 %v314
  %v1083 = vunpack.c.l.b16 %v315
  %v1084 = vunpack.c.l.b16 %v316
  %v1085 = vunpack.c.l.b16 %v317
  %v1086 = vunpack.c.l.b16 %v318
  %v1087 = vunpack.c.l.b16 %v319
  %v1088 = vunpack.c.l.b16 %v320
  %v1089 = vunpack.c.l.b16 %v321
  %v1090 = vunpack.c.l.b16 %v322
  %v1091 = vunpack.c.l.b16 %v323
  %v1092 = vunpack.c.l.b16 %v324
  %v1093 = vunpack.c.l.b16 %v325
  %v1094 = vunpack.c.l.b16 %v326
  %v1095 = vunpack.c.l.b16 %v327
  %v1096 = vunpack.c.l.b16 %v328
  %v1097 = vunpack.c.l.b16 %v329
  %v1098 = vunpack.c.l.b16 %v330
  %v1099 = vunpack.c.l.b16 %v331
  %v1100 = vunpack.c.l.b16 %v332
  %v1101 = vunpack.c.l.b16 %v333
  %v1102 = vunpack.c.l.b16 %v334
  %v1103 = vunpack.c.l.b16 %v335
  %v1104 = vunpack.c.l.b16 %v336
  %v1105 = vunpack.c.l.b16 %v337
  %v1106 = vunpack.c.l.b16 %v338
  %v1107 = vpack.c.b16 %v1044, %v1043
  %v1108 = vpack.c.b16 %v1046, %v1045
  %v1109 = vpack.c.b16 %v1048, %v1047
  %v1110 = vpack.c.b16 %v1050, %v1049
  %v1111 = vpack.c.b16 %v1052, %v1051
  %v1112 = vpack.c.b16 %v1054, %v1053
  %v1113 = vpack.c.b16 %v1056, %v1055
  %v1114 = vpack.c.b16 %v1058, %v1057
  %v1115 = vpack.c.b16 %v1060, %v1059
  %v1116 = vpack.c.b16 %v1062, %v1061
  %v1117 = vpack.c.b16 %v1064, %v1063
  %v1118 = vpack.c.b16 %v1066, %v1065
  %v1119 = vpack.c.b16 %v1068, %v1067
  %v1120 = vpack.c.b16 %v1070, %v1069
  %v1121 = vpack.c.b16 %v1072, %v1071
  %v1122 = vpack.c.b16 %v1074, %v1073
  %v1123 = vpack.c.b16 %v1076, %v1075
  %v1124 = vpack.c.b16 %v1078, %v1077
  %v1125 = vpack.c.b16 %v1080, %v1079
  %v1126 = vpack.c.b16 %v1082, %v1081
  %v1127 = vpack.c.b16 %v1084, %v1083
  %v1128 = vpack.c.b16 %v1086, %v1085
  %v1129 = vpack.c.b16 %v1088, %v1087
  %v1130 = vpack.c.b16 %v1090, %v1089
  %v1131 = vpack.c.b16 %v1092, %v1091
  %v1132 = vpack.c.b16 %v1094, %v1093
  %v1133 = vpack.c.b16 %v1096, %v1095
  %v1134 = vpack.c.b16 %v1098, %v1097
  %v1135 = vpack.c.b16 %v1100, %v1099
  %v1136 = vpack.c.b16 %v1102, %v1101
  %v1137 = vpack.c.b16 %v1104, %v1103
  %v1138 = vpack.c.b16 %v1106, %v1105
  %1171 = vmatprep.subr.bf16.mxu0 0
  %1172 = vmatpush1.bf16.msra.mxu0 %v1107
  %1173 = vmatprep.subr.bf16.mxu0 0
  %1174 = vmatpush1.bf16.msra.mxu0 %v1108
  %1175 = vmatprep.subr.bf16.mxu0 0
  %1176 = vmatpush1.bf16.msra.mxu0 %v1109
  %1177 = vmatprep.subr.bf16.mxu0 0
  %1178 = vmatpush1.bf16.msra.mxu0 %v1110
  %1179 = vmatprep.subr.bf16.mxu0 0
  %1180 = vmatpush1.bf16.msra.mxu0 %v1111
  %1181 = vmatprep.subr.bf16.mxu0 0
  %1182 = vmatpush1.bf16.msra.mxu0 %v1112
  %1183 = vmatprep.subr.bf16.mxu0 0
  %1184 = vmatpush1.bf16.msra.mxu0 %v1113
  %1185 = vmatprep.subr.bf16.mxu0 0
  %1186 = vmatpush1.bf16.msra.mxu0 %v1114
  %1187 = vmatprep.subr.bf16.mxu0 0
  %1188 = vmatpush1.bf16.msra.mxu0 %v1115
  %1189 = vmatprep.subr.bf16.mxu0 0
  %1190 = vmatpush1.bf16.msra.mxu0 %v1116
  %1191 = vmatprep.subr.bf16.mxu0 0
  %1192 = vmatpush1.bf16.msra.mxu0 %v1117
  %1193 = vmatprep.subr.bf16.mxu0 0
  %1194 = vmatpush1.bf16.msra.mxu0 %v1118
  %1195 = vmatprep.subr.bf16.mxu0 0
  %1196 = vmatpush1.bf16.msra.mxu0 %v1119
  %1197 = vmatprep.subr.bf16.mxu0 0
  %1198 = vmatpush1.bf16.msra.mxu0 %v1120
  %1199 = vmatprep.subr.bf16.mxu0 0
  %1200 = vmatpush1.bf16.msra.mxu0 %v1121
  %1201 = vmatprep.subr.bf16.mxu0 0
  %1202 = vmatpush1.bf16.msra.mxu0 %v1122
  %1203 = vmatprep.mubr.bf16.mxu0 %v724
  %1204 = vmatmul.mubr.bf16.gmra.mrb[0].mxu0 %v723
  %v1205 = vpop.f32.mrb[0].mxu0
  %v1206 = vadd.f32 0.0, %v1205
  %v1207 = vpop.f32.mrb[0].mxu0
  %v1208 = vpop.f32.mrb[0].mxu0
  %v1209 = vadd.f32 0.0, %v1208
  %v1210 = vpop.f32.mrb[0].mxu0
  %1211 = vmatprep.mubr.bf16.mxu0 %v728
  %1212 = vmatmul.mubr.bf16.gmra.mrb[0].mxu0 %v727
  %v1213 = vpop.f32.mrb[0].mxu0
  %v1214 = vadd.f32 0.0, %v1213
  %v1215 = vpop.f32.mrb[0].mxu0
  %v1216 = vpop.f32.mrb[0].mxu0
  %v1217 = vadd.f32 0.0, %v1216
  %v1218 = vpop.f32.mrb[0].mxu0
  %1219 = vmatprep.mubr.bf16.mxu0 %v732
  %1220 = vmatmul.mubr.bf16.gmra.mrb[0].mxu0 %v731
  %v1221 = vpop.f32.mrb[0].mxu0
  %v1222 = vadd.f32 0.0, %v1221
  %v1223 = vpop.f32.mrb[0].mxu0
  %v1224 = vpop.f32.mrb[0].mxu0
  %v1225 = vadd.f32 0.0, %v1224
  %v1226 = vpop.f32.mrb[0].mxu0
  %1227 = vmatprep.mubr.bf16.mxu0 %v736
  %1228 = vmatmul.mubr.bf16.gmra.mrb[0].mxu0 %v735
  %v1229 = vpop.f32.mrb[0].mxu0
  %v1230 = vadd.f32 0.0, %v1229
  %v1231 = vpop.f32.mrb[0].mxu0
  %v1232 = vpop.f32.mrb[0].mxu0
  %v1233 = vadd.f32 0.0, %v1232
  %v1234 = vpop.f32.mrb[0].mxu0
  %1235 = vmatprep.mubr.bf16.mxu0 %v740
  %1236 = vmatmul.mubr.bf16.gmra.mrb[0].mxu0 %v739
  %v1237 = vpop.f32.mrb[0].mxu0
  %v1238 = vadd.f32 0.0, %v1237
  %v1239 = vpop.f32.mrb[0].mxu0
  %v1240 = vpop.f32.mrb[0].mxu0
  %v1241 = vadd.f32 0.0, %v1240
  %v1242 = vpop.f32.mrb[0].mxu0
  %1243 = vmatprep.mubr.bf16.mxu0 %v744
  %1244 = vmatmul.mubr.bf16.gmra.mrb[0].mxu0 %v743
  %v1245 = vpop.f32.mrb[0].mxu0
  %v1246 = vadd.f32 0.0, %v1245
  %v1247 = vpop.f32.mrb[0].mxu0
  %v1248 = vpop.f32.mrb[0].mxu0
  %v1249 = vadd.f32 0.0, %v1248
  %v1250 = vpop.f32.mrb[0].mxu0
  %1251 = vmatprep.mubr.bf16.mxu0 %v748
  %1252 = vmatmul.mubr.bf16.gmra.mrb[0].mxu0 %v747
  %v1253 = vpop.f32.mrb[0].mxu0
  %v1254 = vadd.f32 0.0, %v1253
  %v1255 = vpop.f32.mrb[0].mxu0
  %v1256 = vpop.f32.mrb[0].mxu0
  %v1257 = vadd.f32 0.0, %v1256
  %v1258 = vpop.f32.mrb[0].mxu0
  %1259 = vmatprep.mubr.bf16.mxu0 %v752
  %1260 = vmatmul.mubr.bf16.gmra.mrb[0].mxu0 %v751
  %v1261 = vpop.f32.mrb[0].mxu0
  %v1262 = vadd.f32 0.0, %v1261
  %v1263 = vpop.f32.mrb[0].mxu0
  %v1264 = vpop.f32.mrb[0].mxu0
  %v1265 = vadd.f32 0.0, %v1264
  %v1266 = vpop.f32.mrb[0].mxu0
  %1267 = vmatprep.mubr.bf16.mxu0 %v756
  %1268 = vmatmul.mubr.bf16.gmra.mrb[0].mxu0 %v755
  %v1269 = vpop.f32.mrb[0].mxu0
  %v1270 = vadd.f32 0.0, %v1269
  %v1271 = vpop.f32.mrb[0].mxu0
  %v1272 = vpop.f32.mrb[0].mxu0
  %v1273 = vadd.f32 0.0, %v1272
  %v1274 = vpop.f32.mrb[0].mxu0
  %1275 = vmatprep.mubr.bf16.mxu0 %v760
  %1276 = vmatmul.mubr.bf16.gmra.mrb[0].mxu0 %v759
  %v1277 = vpop.f32.mrb[0].mxu0
  %v1278 = vadd.f32 0.0, %v1277
  %v1279 = vpop.f32.mrb[0].mxu0
  %v1280 = vpop.f32.mrb[0].mxu0
  %v1281 = vadd.f32 0.0, %v1280
  %v1282 = vpop.f32.mrb[0].mxu0
  %1283 = vmatprep.mubr.bf16.mxu0 %v764
  %1284 = vmatmul.mubr.bf16.gmra.mrb[0].mxu0 %v763
  %v1285 = vpop.f32.mrb[0].mxu0
  %v1286 = vadd.f32 0.0, %v1285
  %v1287 = vpop.f32.mrb[0].mxu0
  %v1288 = vpop.f32.mrb[0].mxu0
  %v1289 = vadd.f32 0.0, %v1288
  %v1290 = vpop.f32.mrb[0].mxu0
  %1291 = vmatprep.mubr.bf16.mxu0 %v768
  %1292 = vmatmul.mubr.bf16.gmra.mrb[0].mxu0 %v767
  %v1293 = vpop.f32.mrb[0].mxu0
  %v1294 = vadd.f32 0.0, %v1293
  %v1295 = vpop.f32.mrb[0].mxu0
  %v1296 = vpop.f32.mrb[0].mxu0
  %v1297 = vadd.f32 0.0, %v1296
  %v1298 = vpop.f32.mrb[0].mxu0
  %1299 = vmatprep.mubr.bf16.mxu0 %v772
  %1300 = vmatmul.mubr.bf16.gmra.mrb[0].mxu0 %v771
  %v1301 = vpop.f32.mrb[0].mxu0
  %v1302 = vadd.f32 0.0, %v1301
  %v1303 = vpop.f32.mrb[0].mxu0
  %v1304 = vpop.f32.mrb[0].mxu0
  %v1305 = vadd.f32 0.0, %v1304
  %v1306 = vpop.f32.mrb[0].mxu0
  %1307 = vmatprep.mubr.bf16.mxu0 %v776
  %1308 = vmatmul.mubr.bf16.gmra.mrb[0].mxu0 %v775
  %v1309 = vpop.f32.mrb[0].mxu0
  %v1310 = vadd.f32 0.0, %v1309
  %v1311 = vpop.f32.mrb[0].mxu0
  %v1312 = vpop.f32.mrb[0].mxu0
  %v1313 = vadd.f32 0.0, %v1312
  %v1314 = vpop.f32.mrb[0].mxu0
  %1315 = vmatprep.mubr.bf16.mxu0 %v780
  %1316 = vmatmul.mubr.bf16.gmra.mrb[0].mxu0 %v779
  %v1317 = vpop.f32.mrb[0].mxu0
  %v1318 = vadd.f32 0.0, %v1317
  %v1319 = vpop.f32.mrb[0].mxu0
  %v1320 = vpop.f32.mrb[0].mxu0
  %v1321 = vadd.f32 0.0, %v1320
  %v1322 = vpop.f32.mrb[0].mxu0
  %1323 = vmatprep.mubr.bf16.mxu0 %v784
  %1324 = vmatmul.mubr.bf16.gmra.mrb[0].mxu0 %v783
  %v1325 = vpop.f32.mrb[0].mxu0
  %v1326 = vadd.f32 0.0, %v1325
  %v1327 = vpop.f32.mrb[0].mxu0
  %v1328 = vpop.f32.mrb[0].mxu0
  %v1329 = vadd.f32 0.0, %v1328
  %v1330 = vpop.f32.mrb[0].mxu0
  %1331 = vmatprep.mubr.bf16.mxu0 %v788
  %1332 = vmatmul.mubr.bf16.gmra.mrb[0].mxu0 %v787
  %v1333 = vpop.f32.mrb[0].mxu0
  %v1334 = vadd.f32 0.0, %v1333
  %v1335 = vpop.f32.mrb[0].mxu0
  %v1336 = vpop.f32.mrb[0].mxu0
  %v1337 = vadd.f32 0.0, %v1336
  %v1338 = vpop.f32.mrb[0].mxu0
  %1339 = vmatprep.mubr.bf16.mxu0 %v792
  %1340 = vmatmul.mubr.bf16.gmra.mrb[0].mxu0 %v791
  %v1341 = vpop.f32.mrb[0].mxu0
  %v1342 = vadd.f32 0.0, %v1341
  %v1343 = vpop.f32.mrb[0].mxu0
  %v1344 = vpop.f32.mrb[0].mxu0
  %v1345 = vadd.f32 0.0, %v1344
  %v1346 = vpop.f32.mrb[0].mxu0
  %1347 = vmatprep.mubr.bf16.mxu0 %v796
  %1348 = vmatmul.mubr.bf16.gmra.mrb[0].mxu0 %v795
  %v1349 = vpop.f32.mrb[0].mxu0
  %v1350 = vadd.f32 0.0, %v1349
  %v1351 = vpop.f32.mrb[0].mxu0
  %v1352 = vpop.f32.mrb[0].mxu0
  %v1353 = vadd.f32 0.0, %v1352
  %v1354 = vpop.f32.mrb[0].mxu0
  %1355 = vmatprep.mubr.bf16.mxu0 %v800
  %1356 = vmatmul.mubr.bf16.gmra.mrb[0].mxu0 %v799
  %v1357 = vpop.f32.mrb[0].mxu0
  %v1358 = vadd.f32 0.0, %v1357
  %v1359 = vpop.f32.mrb[0].mxu0
  %v1360 = vpop.f32.mrb[0].mxu0
  %v1361 = vadd.f32 0.0, %v1360
  %v1362 = vpop.f32.mrb[0].mxu0
  %1363 = vmatprep.mubr.bf16.mxu0 %v804
  %1364 = vmatmul.mubr.bf16.gmra.mrb[0].mxu0 %v803
  %v1365 = vpop.f32.mrb[0].mxu0
  %v1366 = vadd.f32 0.0, %v1365
  %v1367 = vpop.f32.mrb[0].mxu0
  %v1368 = vpop.f32.mrb[0].mxu0
  %v1369 = vadd.f32 0.0, %v1368
  %v1370 = vpop.f32.mrb[0].mxu0
  %1371 = vmatprep.mubr.bf16.mxu0 %v808
  %1372 = vmatmul.mubr.bf16.gmra.mrb[0].mxu0 %v807
  %v1373 = vpop.f32.mrb[0].mxu0
  %v1374 = vadd.f32 0.0, %v1373
  %v1375 = vpop.f32.mrb[0].mxu0
  %v1376 = vpop.f32.mrb[0].mxu0
  %v1377 = vadd.f32 0.0, %v1376
  %v1378 = vpop.f32.mrb[0].mxu0
  %1379 = vmatprep.mubr.bf16.mxu0 %v812
  %1380 = vmatmul.mubr.bf16.gmra.mrb[0].mxu0 %v811
  %v1381 = vpop.f32.mrb[0].mxu0
  %v1382 = vadd.f32 0.0, %v1381
  %v1383 = vpop.f32.mrb[0].mxu0
  %v1384 = vpop.f32.mrb[0].mxu0
  %v1385 = vadd.f32 0.0, %v1384
  %v1386 = vpop.f32.mrb[0].mxu0
  %1387 = vmatprep.mubr.bf16.mxu0 %v816
  %1388 = vmatmul.mubr.bf16.gmra.mrb[0].mxu0 %v815
  %v1389 = vpop.f32.mrb[0].mxu0
  %v1390 = vadd.f32 0.0, %v1389
  %v1391 = vpop.f32.mrb[0].mxu0
  %v1392 = vpop.f32.mrb[0].mxu0
  %v1393 = vadd.f32 0.0, %v1392
  %v1394 = vpop.f32.mrb[0].mxu0
  %1395 = vmatprep.mubr.bf16.mxu0 %v820
  %1396 = vmatmul.mubr.bf16.gmra.mrb[0].mxu0 %v819
  %v1397 = vpop.f32.mrb[0].mxu0
  %v1398 = vadd.f32 0.0, %v1397
  %v1399 = vpop.f32.mrb[0].mxu0
  %v1400 = vpop.f32.mrb[0].mxu0
  %v1401 = vadd.f32 0.0, %v1400
  %v1402 = vpop.f32.mrb[0].mxu0
  %1403 = vmatprep.mubr.bf16.mxu0 %v824
  %1404 = vmatmul.mubr.bf16.gmra.mrb[0].mxu0 %v823
  %v1405 = vpop.f32.mrb[0].mxu0
  %v1406 = vadd.f32 0.0, %v1405
  %v1407 = vpop.f32.mrb[0].mxu0
  %v1408 = vpop.f32.mrb[0].mxu0
  %v1409 = vadd.f32 0.0, %v1408
  %v1410 = vpop.f32.mrb[0].mxu0
  %1411 = vmatprep.mubr.bf16.mxu0 %v828
  %1412 = vmatmul.mubr.bf16.gmra.mrb[0].mxu0 %v827
  %v1413 = vpop.f32.mrb[0].mxu0
  %v1414 = vadd.f32 0.0, %v1413
  %v1415 = vpop.f32.mrb[0].mxu0
  %v1416 = vpop.f32.mrb[0].mxu0
  %v1417 = vadd.f32 0.0, %v1416
  %v1418 = vpop.f32.mrb[0].mxu0
  %1419 = vmatprep.mubr.bf16.mxu0 %v832
  %1420 = vmatmul.mubr.bf16.gmra.mrb[0].mxu0 %v831
  %v1421 = vpop.f32.mrb[0].mxu0
  %v1422 = vadd.f32 0.0, %v1421
  %v1423 = vpop.f32.mrb[0].mxu0
  %v1424 = vpop.f32.mrb[0].mxu0
  %v1425 = vadd.f32 0.0, %v1424
  %v1426 = vpop.f32.mrb[0].mxu0
  %1427 = vmatprep.mubr.bf16.mxu0 %v836
  %1428 = vmatmul.mubr.bf16.gmra.mrb[0].mxu0 %v835
  %v1429 = vpop.f32.mrb[0].mxu0
  %v1430 = vadd.f32 0.0, %v1429
  %v1431 = vpop.f32.mrb[0].mxu0
  %v1432 = vpop.f32.mrb[0].mxu0
  %v1433 = vadd.f32 0.0, %v1432
  %v1434 = vpop.f32.mrb[0].mxu0
  %1435 = vmatprep.mubr.bf16.mxu0 %v840
  %1436 = vmatmul.mubr.bf16.gmra.mrb[0].mxu0 %v839
  %v1437 = vpop.f32.mrb[0].mxu0
  %v1438 = vadd.f32 0.0, %v1437
  %v1439 = vpop.f32.mrb[0].mxu0
  %v1440 = vpop.f32.mrb[0].mxu0
  %v1441 = vadd.f32 0.0, %v1440
  %v1442 = vpop.f32.mrb[0].mxu0
  %1443 = vmatprep.mubr.bf16.mxu0 %v844
  %1444 = vmatmul.mubr.bf16.gmra.mrb[0].mxu0 %v843
  %v1445 = vpop.f32.mrb[0].mxu0
  %v1446 = vadd.f32 0.0, %v1445
  %v1447 = vpop.f32.mrb[0].mxu0
  %v1448 = vpop.f32.mrb[0].mxu0
  %v1449 = vadd.f32 0.0, %v1448
  %v1450 = vpop.f32.mrb[0].mxu0
  %1451 = vmatprep.mubr.bf16.mxu0 %v848
  %1452 = vmatmul.mubr.bf16.gmra.mrb[0].mxu0 %v847
  %v1453 = vpop.f32.mrb[0].mxu0
  %v1454 = vadd.f32 0.0, %v1453
  %v1455 = vpop.f32.mrb[0].mxu0
  %v1456 = vpop.f32.mrb[0].mxu0
  %v1457 = vadd.f32 0.0, %v1456
  %v1458 = vpop.f32.mrb[0].mxu0
  %1459 = vdwg.mxu0
  %1460 = vmatprep.subr.bf16.mxu0 0
  %1461 = vmatpush1.bf16.msra.mxu0 %v1123
  %1462 = vmatprep.subr.bf16.mxu0 0
  %1463 = vmatpush1.bf16.msra.mxu0 %v1124
  %1464 = vmatprep.subr.bf16.mxu0 0
  %1465 = vmatpush1.bf16.msra.mxu0 %v1125
  %1466 = vmatprep.subr.bf16.mxu0 0
  %1467 = vmatpush1.bf16.msra.mxu0 %v1126
  %1468 = vmatprep.subr.bf16.mxu0 0
  %1469 = vmatpush1.bf16.msra.mxu0 %v1127
  %1470 = vmatprep.subr.bf16.mxu0 0
  %1471 = vmatpush1.bf16.msra.mxu0 %v1128
  %1472 = vmatprep.subr.bf16.mxu0 0
  %1473 = vmatpush1.bf16.msra.mxu0 %v1129
  %1474 = vmatprep.subr.bf16.mxu0 0
  %1475 = vmatpush1.bf16.msra.mxu0 %v1130
  %1476 = vmatprep.subr.bf16.mxu0 0
  %1477 = vmatpush1.bf16.msra.mxu0 %v1131
  %1478 = vmatprep.subr.bf16.mxu0 0
  %1479 = vmatpush1.bf16.msra.mxu0 %v1132
  %1480 = vmatprep.subr.bf16.mxu0 0
  %1481 = vmatpush1.bf16.msra.mxu0 %v1133
  %1482 = vmatprep.subr.bf16.mxu0 0
  %1483 = vmatpush1.bf16.msra.mxu0 %v1134
  %1484 = vmatprep.subr.bf16.mxu0 0
  %1485 = vmatpush1.bf16.msra.mxu0 %v1135
  %1486 = vmatprep.subr.bf16.mxu0 0
  %1487 = vmatpush1.bf16.msra.mxu0 %v1136
  %1488 = vmatprep.subr.bf16.mxu0 0
  %1489 = vmatpush1.bf16.msra.mxu0 %v1137
  %1490 = vmatprep.subr.bf16.mxu0 0
  %1491 = vmatpush1.bf16.msra.mxu0 %v1138
  %1492 = vmatprep.mubr.bf16.mxu0 %v726
  %1493 = vmatmul.mubr.bf16.gmra.mrb[0].mxu0 %v725
  %v1494 = vpop.f32.mrb[0].mxu0
  %v1495 = vadd.f32 %v1206, %v1494
  %v1496 = vpop.f32.mrb[0].mxu0
  %v1497 = vpop.f32.mrb[0].mxu0
  %v1498 = vadd.f32 %v1209, %v1497
  %v1499 = vpop.f32.mrb[0].mxu0
  %1500 = vmatprep.mubr.bf16.mxu0 %v730
  %1501 = vmatmul.mubr.bf16.gmra.mrb[0].mxu0 %v729
  %v1502 = vpop.f32.mrb[0].mxu0
  %v1503 = vadd.f32 %v1214, %v1502
  %v1504 = vpop.f32.mrb[0].mxu0
  %v1505 = vpop.f32.mrb[0].mxu0
  %v1506 = vadd.f32 %v1217, %v1505
  %v1507 = vpop.f32.mrb[0].mxu0
  %1508 = vmatprep.mubr.bf16.mxu0 %v734
  %1509 = vmatmul.mubr.bf16.gmra.mrb[0].mxu0 %v733
  %v1510 = vpop.f32.mrb[0].mxu0
  %v1511 = vadd.f32 %v1222, %v1510
  %v1512 = vpop.f32.mrb[0].mxu0
  %v1513 = vpop.f32.mrb[0].mxu0
  %v1514 = vadd.f32 %v1225, %v1513
  %v1515 = vpop.f32.mrb[0].mxu0
  %1516 = vmatprep.mubr.bf16.mxu0 %v738
  %1517 = vmatmul.mubr.bf16.gmra.mrb[0].mxu0 %v737
  %v1518 = vpop.f32.mrb[0].mxu0
  %v1519 = vadd.f32 %v1230, %v1518
  %v1520 = vpop.f32.mrb[0].mxu0
  %v1521 = vpop.f32.mrb[0].mxu0
  %v1522 = vadd.f32 %v1233, %v1521
  %v1523 = vpop.f32.mrb[0].mxu0
  %1524 = vmatprep.mubr.bf16.mxu0 %v742
  %1525 = vmatmul.mubr.bf16.gmra.mrb[0].mxu0 %v741
  %v1526 = vpop.f32.mrb[0].mxu0
  %v1527 = vadd.f32 %v1238, %v1526
  %v1528 = vpop.f32.mrb[0].mxu0
  %v1529 = vpop.f32.mrb[0].mxu0
  %v1530 = vadd.f32 %v1241, %v1529
  %v1531 = vpop.f32.mrb[0].mxu0
  %1532 = vmatprep.mubr.bf16.mxu0 %v746
  %1533 = vmatmul.mubr.bf16.gmra.mrb[0].mxu0 %v745
  %v1534 = vpop.f32.mrb[0].mxu0
  %v1535 = vadd.f32 %v1246, %v1534
  %v1536 = vpop.f32.mrb[0].mxu0
  %v1537 = vpop.f32.mrb[0].mxu0
  %v1538 = vadd.f32 %v1249, %v1537
  %v1539 = vpop.f32.mrb[0].mxu0
  %1540 = vmatprep.mubr.bf16.mxu0 %v750
  %1541 = vmatmul.mubr.bf16.gmra.mrb[0].mxu0 %v749
  %v1542 = vpop.f32.mrb[0].mxu0
  %v1543 = vadd.f32 %v1254, %v1542
  %v1544 = vpop.f32.mrb[0].mxu0
  %v1545 = vpop.f32.mrb[0].mxu0
  %v1546 = vadd.f32 %v1257, %v1545
  %v1547 = vpop.f32.mrb[0].mxu0
  %1548 = vmatprep.mubr.bf16.mxu0 %v754
  %1549 = vmatmul.mubr.bf16.gmra.mrb[0].mxu0 %v753
  %v1550 = vpop.f32.mrb[0].mxu0
  %v1551 = vadd.f32 %v1262, %v1550
  %v1552 = vpop.f32.mrb[0].mxu0
  %v1553 = vpop.f32.mrb[0].mxu0
  %v1554 = vadd.f32 %v1265, %v1553
  %v1555 = vpop.f32.mrb[0].mxu0
  %1556 = vmatprep.mubr.bf16.mxu0 %v758
  %1557 = vmatmul.mubr.bf16.gmra.mrb[0].mxu0 %v757
  %v1558 = vpop.f32.mrb[0].mxu0
  %v1559 = vadd.f32 %v1270, %v1558
  %v1560 = vpop.f32.mrb[0].mxu0
  %v1561 = vpop.f32.mrb[0].mxu0
  %v1562 = vadd.f32 %v1273, %v1561
  %v1563 = vpop.f32.mrb[0].mxu0
  %1564 = vmatprep.mubr.bf16.mxu0 %v762
  %1565 = vmatmul.mubr.bf16.gmra.mrb[0].mxu0 %v761
  %v1566 = vpop.f32.mrb[0].mxu0
  %v1567 = vadd.f32 %v1278, %v1566
  %v1568 = vpop.f32.mrb[0].mxu0
  %v1569 = vpop.f32.mrb[0].mxu0
  %v1570 = vadd.f32 %v1281, %v1569
  %v1571 = vpop.f32.mrb[0].mxu0
  %1572 = vmatprep.mubr.bf16.mxu0 %v766
  %1573 = vmatmul.mubr.bf16.gmra.mrb[0].mxu0 %v765
  %v1574 = vpop.f32.mrb[0].mxu0
  %v1575 = vadd.f32 %v1286, %v1574
  %v1576 = vpop.f32.mrb[0].mxu0
  %v1577 = vpop.f32.mrb[0].mxu0
  %v1578 = vadd.f32 %v1289, %v1577
  %v1579 = vpop.f32.mrb[0].mxu0
  %1580 = vmatprep.mubr.bf16.mxu0 %v770
  %1581 = vmatmul.mubr.bf16.gmra.mrb[0].mxu0 %v769
  %v1582 = vpop.f32.mrb[0].mxu0
  %v1583 = vadd.f32 %v1294, %v1582
  %v1584 = vpop.f32.mrb[0].mxu0
  %v1585 = vpop.f32.mrb[0].mxu0
  %v1586 = vadd.f32 %v1297, %v1585
  %v1587 = vpop.f32.mrb[0].mxu0
  %1588 = vmatprep.mubr.bf16.mxu0 %v774
  %1589 = vmatmul.mubr.bf16.gmra.mrb[0].mxu0 %v773
  %v1590 = vpop.f32.mrb[0].mxu0
  %v1591 = vadd.f32 %v1302, %v1590
  %v1592 = vpop.f32.mrb[0].mxu0
  %v1593 = vpop.f32.mrb[0].mxu0
  %v1594 = vadd.f32 %v1305, %v1593
  %v1595 = vpop.f32.mrb[0].mxu0
  %1596 = vmatprep.mubr.bf16.mxu0 %v778
  %1597 = vmatmul.mubr.bf16.gmra.mrb[0].mxu0 %v777
  %v1598 = vpop.f32.mrb[0].mxu0
  %v1599 = vadd.f32 %v1310, %v1598
  %v1600 = vpop.f32.mrb[0].mxu0
  %v1601 = vpop.f32.mrb[0].mxu0
  %v1602 = vadd.f32 %v1313, %v1601
  %v1603 = vpop.f32.mrb[0].mxu0
  %1604 = vmatprep.mubr.bf16.mxu0 %v782
  %1605 = vmatmul.mubr.bf16.gmra.mrb[0].mxu0 %v781
  %v1606 = vpop.f32.mrb[0].mxu0
  %v1607 = vadd.f32 %v1318, %v1606
  %v1608 = vpop.f32.mrb[0].mxu0
  %v1609 = vpop.f32.mrb[0].mxu0
  %v1610 = vadd.f32 %v1321, %v1609
  %v1611 = vpop.f32.mrb[0].mxu0
  %1612 = vmatprep.mubr.bf16.mxu0 %v786
  %1613 = vmatmul.mubr.bf16.gmra.mrb[0].mxu0 %v785
  %v1614 = vpop.f32.mrb[0].mxu0
  %v1615 = vadd.f32 %v1326, %v1614
  %v1616 = vpop.f32.mrb[0].mxu0
  %v1617 = vpop.f32.mrb[0].mxu0
  %v1618 = vadd.f32 %v1329, %v1617
  %v1619 = vpop.f32.mrb[0].mxu0
  %1620 = vmatprep.mubr.bf16.mxu0 %v790
  %1621 = vmatmul.mubr.bf16.gmra.mrb[0].mxu0 %v789
  %v1622 = vpop.f32.mrb[0].mxu0
  %v1623 = vadd.f32 %v1334, %v1622
  %v1624 = vpop.f32.mrb[0].mxu0
  %v1625 = vpop.f32.mrb[0].mxu0
  %v1626 = vadd.f32 %v1337, %v1625
  %v1627 = vpop.f32.mrb[0].mxu0
  %1628 = vmatprep.mubr.bf16.mxu0 %v794
  %1629 = vmatmul.mubr.bf16.gmra.mrb[0].mxu0 %v793
  %v1630 = vpop.f32.mrb[0].mxu0
  %v1631 = vadd.f32 %v1342, %v1630
  %v1632 = vpop.f32.mrb[0].mxu0
  %v1633 = vpop.f32.mrb[0].mxu0
  %v1634 = vadd.f32 %v1345, %v1633
  %v1635 = vpop.f32.mrb[0].mxu0
  %1636 = vmatprep.mubr.bf16.mxu0 %v798
  %1637 = vmatmul.mubr.bf16.gmra.mrb[0].mxu0 %v797
  %v1638 = vpop.f32.mrb[0].mxu0
  %v1639 = vadd.f32 %v1350, %v1638
  %v1640 = vpop.f32.mrb[0].mxu0
  %v1641 = vpop.f32.mrb[0].mxu0
  %v1642 = vadd.f32 %v1353, %v1641
  %v1643 = vpop.f32.mrb[0].mxu0
  %1644 = vmatprep.mubr.bf16.mxu0 %v802
  %1645 = vmatmul.mubr.bf16.gmra.mrb[0].mxu0 %v801
  %v1646 = vpop.f32.mrb[0].mxu0
  %v1647 = vadd.f32 %v1358, %v1646
  %v1648 = vpop.f32.mrb[0].mxu0
  %v1649 = vpop.f32.mrb[0].mxu0
  %v1650 = vadd.f32 %v1361, %v1649
  %v1651 = vpop.f32.mrb[0].mxu0
  %1652 = vmatprep.mubr.bf16.mxu0 %v806
  %1653 = vmatmul.mubr.bf16.gmra.mrb[0].mxu0 %v805
  %v1654 = vpop.f32.mrb[0].mxu0
  %v1655 = vadd.f32 %v1366, %v1654
  %v1656 = vpop.f32.mrb[0].mxu0
  %v1657 = vpop.f32.mrb[0].mxu0
  %v1658 = vadd.f32 %v1369, %v1657
  %v1659 = vpop.f32.mrb[0].mxu0
  %1660 = vmatprep.mubr.bf16.mxu0 %v810
  %1661 = vmatmul.mubr.bf16.gmra.mrb[0].mxu0 %v809
  %v1662 = vpop.f32.mrb[0].mxu0
  %v1663 = vadd.f32 %v1374, %v1662
  %v1664 = vpop.f32.mrb[0].mxu0
  %v1665 = vpop.f32.mrb[0].mxu0
  %v1666 = vadd.f32 %v1377, %v1665
  %v1667 = vpop.f32.mrb[0].mxu0
  %1668 = vmatprep.mubr.bf16.mxu0 %v814
  %1669 = vmatmul.mubr.bf16.gmra.mrb[0].mxu0 %v813
  %v1670 = vpop.f32.mrb[0].mxu0
  %v1671 = vadd.f32 %v1382, %v1670
  %v1672 = vpop.f32.mrb[0].mxu0
  %v1673 = vpop.f32.mrb[0].mxu0
  %v1674 = vadd.f32 %v1385, %v1673
  %v1675 = vpop.f32.mrb[0].mxu0
  %1676 = vmatprep.mubr.bf16.mxu0 %v818
  %1677 = vmatmul.mubr.bf16.gmra.mrb[0].mxu0 %v817
  %v1678 = vpop.f32.mrb[0].mxu0
  %v1679 = vadd.f32 %v1390, %v1678
  %v1680 = vpop.f32.mrb[0].mxu0
  %v1681 = vpop.f32.mrb[0].mxu0
  %v1682 = vadd.f32 %v1393, %v1681
  %v1683 = vpop.f32.mrb[0].mxu0
  %1684 = vmatprep.mubr.bf16.mxu0 %v822
  %1685 = vmatmul.mubr.bf16.gmra.mrb[0].mxu0 %v821
  %v1686 = vpop.f32.mrb[0].mxu0
  %v1687 = vadd.f32 %v1398, %v1686
  %v1688 = vpop.f32.mrb[0].mxu0
  %v1689 = vpop.f32.mrb[0].mxu0
  %v1690 = vadd.f32 %v1401, %v1689
  %v1691 = vpop.f32.mrb[0].mxu0
  %1692 = vmatprep.mubr.bf16.mxu0 %v826
  %1693 = vmatmul.mubr.bf16.gmra.mrb[0].mxu0 %v825
  %v1694 = vpop.f32.mrb[0].mxu0
  %v1695 = vadd.f32 %v1406, %v1694
  %v1696 = vpop.f32.mrb[0].mxu0
  %v1697 = vpop.f32.mrb[0].mxu0
  %v1698 = vadd.f32 %v1409, %v1697
  %v1699 = vpop.f32.mrb[0].mxu0
  %1700 = vmatprep.mubr.bf16.mxu0 %v830
  %1701 = vmatmul.mubr.bf16.gmra.mrb[0].mxu0 %v829
  %v1702 = vpop.f32.mrb[0].mxu0
  %v1703 = vadd.f32 %v1414, %v1702
  %v1704 = vpop.f32.mrb[0].mxu0
  %v1705 = vpop.f32.mrb[0].mxu0
  %v1706 = vadd.f32 %v1417, %v1705
  %v1707 = vpop.f32.mrb[0].mxu0
  %1708 = vmatprep.mubr.bf16.mxu0 %v834
  %1709 = vmatmul.mubr.bf16.gmra.mrb[0].mxu0 %v833
  %v1710 = vpop.f32.mrb[0].mxu0
  %v1711 = vadd.f32 %v1422, %v1710
  %v1712 = vpop.f32.mrb[0].mxu0
  %v1713 = vpop.f32.mrb[0].mxu0
  %v1714 = vadd.f32 %v1425, %v1713
  %v1715 = vpop.f32.mrb[0].mxu0
  %1716 = vmatprep.mubr.bf16.mxu0 %v838
  %1717 = vmatmul.mubr.bf16.gmra.mrb[0].mxu0 %v837
  %v1718 = vpop.f32.mrb[0].mxu0
  %v1719 = vadd.f32 %v1430, %v1718
  %v1720 = vpop.f32.mrb[0].mxu0
  %v1721 = vpop.f32.mrb[0].mxu0
  %v1722 = vadd.f32 %v1433, %v1721
  %v1723 = vpop.f32.mrb[0].mxu0
  %1724 = vmatprep.mubr.bf16.mxu0 %v842
  %1725 = vmatmul.mubr.bf16.gmra.mrb[0].mxu0 %v841
  %v1726 = vpop.f32.mrb[0].mxu0
  %v1727 = vadd.f32 %v1438, %v1726
  %v1728 = vpop.f32.mrb[0].mxu0
  %v1729 = vpop.f32.mrb[0].mxu0
  %v1730 = vadd.f32 %v1441, %v1729
  %v1731 = vpop.f32.mrb[0].mxu0
  %1732 = vmatprep.mubr.bf16.mxu0 %v846
  %1733 = vmatmul.mubr.bf16.gmra.mrb[0].mxu0 %v845
  %v1734 = vpop.f32.mrb[0].mxu0
  %v1735 = vadd.f32 %v1446, %v1734
  %v1736 = vpop.f32.mrb[0].mxu0
  %v1737 = vpop.f32.mrb[0].mxu0
  %v1738 = vadd.f32 %v1449, %v1737
  %v1739 = vpop.f32.mrb[0].mxu0
  %1740 = vmatprep.mubr.bf16.mxu0 %v850
  %1741 = vmatmul.mubr.bf16.gmra.mrb[0].mxu0 %v849
  %v1742 = vpop.f32.mrb[0].mxu0
  %v1743 = vadd.f32 %v1454, %v1742
  %v1744 = vpop.f32.mrb[0].mxu0
  %v1745 = vpop.f32.mrb[0].mxu0
  %v1746 = vadd.f32 %v1457, %v1745
  %v1747 = vpop.f32.mrb[0].mxu0
  %1748 = vdwg.mxu0
  %v1749 = vadd.f32 %v83, %v1495
  %v1750 = vadd.f32 %v84, %v1498
  %v1751 = vadd.f32 %v85, %v1503
  %v1752 = vadd.f32 %v86, %v1506
  %v1753 = vadd.f32 %v87, %v1511
  %v1754 = vadd.f32 %v88, %v1514
  %v1755 = vadd.f32 %v89, %v1519
  %v1756 = vadd.f32 %v90, %v1522
  %v1757 = vadd.f32 %v91, %v1527
  %v1758 = vadd.f32 %v92, %v1530
  %v1759 = vadd.f32 %v93, %v1535
  %v1760 = vadd.f32 %v94, %v1538
  %v1761 = vadd.f32 %v95, %v1543
  %v1762 = vadd.f32 %v96, %v1546
  %v1763 = vadd.f32 %v97, %v1551
  %v1764 = vadd.f32 %v98, %v1554
  %v1765 = vadd.f32 %v99, %v1559
  %v1766 = vadd.f32 %v100, %v1562
  %v1767 = vadd.f32 %v101, %v1567
  %v1768 = vadd.f32 %v102, %v1570
  %v1769 = vadd.f32 %v103, %v1575
  %v1770 = vadd.f32 %v104, %v1578
  %v1771 = vadd.f32 %v105, %v1583
  %v1772 = vadd.f32 %v106, %v1586
  %v1773 = vadd.f32 %v107, %v1591
  %v1774 = vadd.f32 %v108, %v1594
  %v1775 = vadd.f32 %v109, %v1599
  %v1776 = vadd.f32 %v110, %v1602
  %v1777 = vadd.f32 %v111, %v1607
  %v1778 = vadd.f32 %v112, %v1610
  %v1779 = vadd.f32 %v113, %v1615
  %v1780 = vadd.f32 %v114, %v1618
  %v1781 = vadd.f32 %v115, %v1623
  %v1782 = vadd.f32 %v116, %v1626
  %v1783 = vadd.f32 %v117, %v1631
  %v1784 = vadd.f32 %v118, %v1634
  %v1785 = vadd.f32 %v119, %v1639
  %v1786 = vadd.f32 %v120, %v1642
  %v1787 = vadd.f32 %v121, %v1647
  %v1788 = vadd.f32 %v122, %v1650
  %v1789 = vadd.f32 %v123, %v1655
  %v1790 = vadd.f32 %v124, %v1658
  %v1791 = vadd.f32 %v125, %v1663
  %v1792 = vadd.f32 %v126, %v1666
  %v1793 = vadd.f32 %v127, %v1671
  %v1794 = vadd.f32 %v128, %v1674
  %v1795 = vadd.f32 %v129, %v1679
  %v1796 = vadd.f32 %v130, %v1682
  %v1797 = vadd.f32 %v131, %v1687
  %v1798 = vadd.f32 %v132, %v1690
  %v1799 = vadd.f32 %v133, %v1695
  %v1800 = vadd.f32 %v134, %v1698
  %v1801 = vadd.f32 %v135, %v1703
  %v1802 = vadd.f32 %v136, %v1706
  %v1803 = vadd.f32 %v137, %v1711
  %v1804 = vadd.f32 %v138, %v1714
  %v1805 = vadd.f32 %v139, %v1719
  %v1806 = vadd.f32 %v140, %v1722
  %v1807 = vadd.f32 %v141, %v1727
  %v1808 = vadd.f32 %v142, %v1730
  %v1809 = vadd.f32 %v143, %v1735
  %v1810 = vadd.f32 %v144, %v1738
  %v1811 = vadd.f32 %v145, %v1743
  %v1812 = vadd.f32 %v146, %v1746
  %1813 = vst [vmem:[#allocation2] sm:$0xff] %v1749
  %1814 = vst [vmem:[#allocation2 + $0x8] sm:$0xff] %v1750
  %1815 = vst [vmem:[#allocation2 + $0x10] sm:$0xff] %v1751
  %1816 = vst [vmem:[#allocation2 + $0x18] sm:$0xff] %v1752
  %1817 = vst [vmem:[#allocation2 + $0x20] sm:$0xff] %v1753
  %1818 = vst [vmem:[#allocation2 + $0x28] sm:$0xff] %v1754
  %1819 = vst [vmem:[#allocation2 + $0x30] sm:$0xff] %v1755
  %1820 = vst [vmem:[#allocation2 + $0x38] sm:$0xff] %v1756
  %1821 = vst [vmem:[#allocation2 + $0x40] sm:$0xff] %v1757
  %1822 = vst [vmem:[#allocation2 + $0x48] sm:$0xff] %v1758
  %1823 = vst [vmem:[#allocation2 + $0x50] sm:$0xff] %v1759
  %1824 = vst [vmem:[#allocation2 + $0x58] sm:$0xff] %v1760
  %1825 = vst [vmem:[#allocation2 + $0x60] sm:$0xff] %v1761
  %1826 = vst [vmem:[#allocation2 + $0x68] sm:$0xff] %v1762
  %1827 = vst [vmem:[#allocation2 + $0x70] sm:$0xff] %v1763
  %1828 = vst [vmem:[#allocation2 + $0x78] sm:$0xff] %v1764
  %1829 = vst [vmem:[#allocation2 + $0x80] sm:$0xff] %v1765
  %1830 = vst [vmem:[#allocation2 + $0x88] sm:$0xff] %v1766
  %1831 = vst [vmem:[#allocation2 + $0x90] sm:$0xff] %v1767
  %1832 = vst [vmem:[#allocation2 + $0x98] sm:$0xff] %v1768
  %1833 = vst [vmem:[#allocation2 + $0xa0] sm:$0xff] %v1769
  %1834 = vst [vmem:[#allocation2 + $0xa8] sm:$0xff] %v1770
  %1835 = vst [vmem:[#allocation2 + $0xb0] sm:$0xff] %v1771
  %1836 = vst [vmem:[#allocation2 + $0xb8] sm:$0xff] %v1772
  %1837 = vst [vmem:[#allocation2 + $0xc0] sm:$0xff] %v1773
  %1838 = vst [vmem:[#allocation2 + $0xc8] sm:$0xff] %v1774
  %1839 = vst [vmem:[#allocation2 + $0xd0] sm:$0xff] %v1775
  %1840 = vst [vmem:[#allocation2 + $0xd8] sm:$0xff] %v1776
  %1841 = vst [vmem:[#allocation2 + $0xe0] sm:$0xff] %v1777
  %1842 = vst [vmem:[#allocation2 + $0xe8] sm:$0xff] %v1778
  %1843 = vst [vmem:[#allocation2 + $0xf0] sm:$0xff] %v1779
  %1844 = vst [vmem:[#allocation2 + $0xf8] sm:$0xff] %v1780
  %1845 = vst [vmem:[#allocation2 + $0x100] sm:$0xff] %v1781
  %1846 = vst [vmem:[#allocation2 + $0x108] sm:$0xff] %v1782
  %1847 = vst [vmem:[#allocation2 + $0x110] sm:$0xff] %v1783
  %1848 = vst [vmem:[#allocation2 + $0x118] sm:$0xff] %v1784
  %1849 = vst [vmem:[#allocation2 + $0x120] sm:$0xff] %v1785
  %1850 = vst [vmem:[#allocation2 + $0x128] sm:$0xff] %v1786
  %1851 = vst [vmem:[#allocation2 + $0x130] sm:$0xff] %v1787
  %1852 = vst [vmem:[#allocation2 + $0x138] sm:$0xff] %v1788
  %1853 = vst [vmem:[#allocation2 + $0x140] sm:$0xff] %v1789
  %1854 = vst [vmem:[#allocation2 + $0x148] sm:$0xff] %v1790
  %1855 = vst [vmem:[#allocation2 + $0x150] sm:$0xff] %v1791
  %1856 = vst [vmem:[#allocation2 + $0x158] sm:$0xff] %v1792
  %1857 = vst [vmem:[#allocation2 + $0x160] sm:$0xff] %v1793
  %1858 = vst [vmem:[#allocation2 + $0x168] sm:$0xff] %v1794
  %1859 = vst [vmem:[#allocation2 + $0x170] sm:$0xff] %v1795
  %1860 = vst [vmem:[#allocation2 + $0x178] sm:$0xff] %v1796
  %1861 = vst [vmem:[#allocation2 + $0x180] sm:$0xff] %v1797
  %1862 = vst [vmem:[#allocation2 + $0x188] sm:$0xff] %v1798
  %1863 = vst [vmem:[#allocation2 + $0x190] sm:$0xff] %v1799
  %1864 = vst [vmem:[#allocation2 + $0x198] sm:$0xff] %v1800
  %1865 = vst [vmem:[#allocation2 + $0x1a0] sm:$0xff] %v1801
  %1866 = vst [vmem:[#allocation2 + $0x1a8] sm:$0xff] %v1802
  %1867 = vst [vmem:[#allocation2 + $0x1b0] sm:$0xff] %v1803
  %1868 = vst [vmem:[#allocation2 + $0x1b8] sm:$0xff] %v1804
  %1869 = vst [vmem:[#allocation2 + $0x1c0] sm:$0xff] %v1805
  %1870 = vst [vmem:[#allocation2 + $0x1c8] sm:$0xff] %v1806
  %1871 = vst [vmem:[#allocation2 + $0x1d0] sm:$0xff] %v1807
  %1872 = vst [vmem:[#allocation2 + $0x1d8] sm:$0xff] %v1808
  %1873 = vst [vmem:[#allocation2 + $0x1e0] sm:$0xff] %v1809
  %1874 = vst [vmem:[#allocation2 + $0x1e8] sm:$0xff] %v1810
  %1875 = vst [vmem:[#allocation2 + $0x1f0] sm:$0xff] %v1811
  %1876 = vst [vmem:[#allocation2 + $0x1f8] sm:$0xff] %v1812
  // Predicated region
  $region18: #{encoder_forward.5} parent=0 // pred_check
    %p1877 = pneg %p15
  $region19: #{encoder_forward.5} parent=0 // pred_check_branch
    %1879 = sbr.rel (%p1877) target = $region21
  $region20: #{encoder_forward.5} parent=0 // pred_region
    %v1880 = vld [vmem:[#allocation2] sm:$0xff]
    %v1881 = vld [vmem:[#allocation2 + $0x8] sm:$0xff]
    %v1882 = vld [vmem:[#allocation2 + $0x10] sm:$0xff]
    %v1883 = vld [vmem:[#allocation2 + $0x18] sm:$0xff]
    %v1884 = vld [vmem:[#allocation2 + $0x20] sm:$0xff]
    %v1885 = vld [vmem:[#allocation2 + $0x28] sm:$0xff]
    %v1886 = vld [vmem:[#allocation2 + $0x30] sm:$0xff]
    %v1887 = vld [vmem:[#allocation2 + $0x38] sm:$0xff]
    %v1888 = vld [vmem:[#allocation2 + $0x40] sm:$0xff]
    %v1889 = vld [vmem:[#allocation2 + $0x48] sm:$0xff]
    %v1890 = vld [vmem:[#allocation2 + $0x50] sm:$0xff]
    %v1891 = vld [vmem:[#allocation2 + $0x58] sm:$0xff]
    %v1892 = vld [vmem:[#allocation2 + $0x60] sm:$0xff]
    %v1893 = vld [vmem:[#allocation2 + $0x68] sm:$0xff]
    %v1894 = vld [vmem:[#allocation2 + $0x70] sm:$0xff]
    %v1895 = vld [vmem:[#allocation2 + $0x78] sm:$0xff]
    %v1896 = vld [vmem:[#allocation2 + $0x80] sm:$0xff]
    %v1897 = vld [vmem:[#allocation2 + $0x88] sm:$0xff]
    %v1898 = vld [vmem:[#allocation2 + $0x90] sm:$0xff]
    %v1899 = vld [vmem:[#allocation2 + $0x98] sm:$0xff]
    %v1900 = vld [vmem:[#allocation2 + $0xa0] sm:$0xff]
    %v1901 = vld [vmem:[#allocation2 + $0xa8] sm:$0xff]
    %v1902 = vld [vmem:[#allocation2 + $0xb0] sm:$0xff]
    %v1903 = vld [vmem:[#allocation2 + $0xb8] sm:$0xff]
    %v1904 = vld [vmem:[#allocation2 + $0xc0] sm:$0xff]
    %v1905 = vld [vmem:[#allocation2 + $0xc8] sm:$0xff]
    %v1906 = vld [vmem:[#allocation2 + $0xd0] sm:$0xff]
    %v1907 = vld [vmem:[#allocation2 + $0xd8] sm:$0xff]
    %v1908 = vld [vmem:[#allocation2 + $0xe0] sm:$0xff]
    %v1909 = vld [vmem:[#allocation2 + $0xe8] sm:$0xff]
    %v1910 = vld [vmem:[#allocation2 + $0xf0] sm:$0xff]
    %v1911 = vld [vmem:[#allocation2 + $0xf8] sm:$0xff]
    %v1912 = vld [vmem:[#allocation2 + $0x100] sm:$0xff]
    %v1913 = vld [vmem:[#allocation2 + $0x108] sm:$0xff]
    %v1914 = vld [vmem:[#allocation2 + $0x110] sm:$0xff]
    %v1915 = vld [vmem:[#allocation2 + $0x118] sm:$0xff]
    %v1916 = vld [vmem:[#allocation2 + $0x120] sm:$0xff]
    %v1917 = vld [vmem:[#allocation2 + $0x128] sm:$0xff]
    %v1918 = vld [vmem:[#allocation2 + $0x130] sm:$0xff]
    %v1919 = vld [vmem:[#allocation2 + $0x138] sm:$0xff]
    %v1920 = vld [vmem:[#allocation2 + $0x140] sm:$0xff]
    %v1921 = vld [vmem:[#allocation2 + $0x148] sm:$0xff]
    %v1922 = vld [vmem:[#allocation2 + $0x150] sm:$0xff]
    %v1923 = vld [vmem:[#allocation2 + $0x158] sm:$0xff]
    %v1924 = vld [vmem:[#allocation2 + $0x160] sm:$0xff]
    %v1925 = vld [vmem:[#allocation2 + $0x168] sm:$0xff]
    %v1926 = vld [vmem:[#allocation2 + $0x170] sm:$0xff]
    %v1927 = vld [vmem:[#allocation2 + $0x178] sm:$0xff]
    %v1928 = vld [vmem:[#allocation2 + $0x180] sm:$0xff]
    %v1929 = vld [vmem:[#allocation2 + $0x188] sm:$0xff]
    %v1930 = vld [vmem:[#allocation2 + $0x190] sm:$0xff]
    %v1931 = vld [vmem:[#allocation2 + $0x198] sm:$0xff]
    %v1932 = vld [vmem:[#allocation2 + $0x1a0] sm:$0xff]
    %v1933 = vld [vmem:[#allocation2 + $0x1a8] sm:$0xff]
    %v1934 = vld [vmem:[#allocation2 + $0x1b0] sm:$0xff]
    %v1935 = vld [vmem:[#allocation2 + $0x1b8] sm:$0xff]
    %v1936 = vld [vmem:[#allocation2 + $0x1c0] sm:$0xff]
    %v1937 = vld [vmem:[#allocation2 + $0x1c8] sm:$0xff]
    %v1938 = vld [vmem:[#allocation2 + $0x1d0] sm:$0xff]
    %v1939 = vld [vmem:[#allocation2 + $0x1d8] sm:$0xff]
    %v1940 = vld [vmem:[#allocation2 + $0x1e0] sm:$0xff]
    %v1941 = vld [vmem:[#allocation2 + $0x1e8] sm:$0xff]
    %v1942 = vld [vmem:[#allocation2 + $0x1f0] sm:$0xff]
    %v1943 = vld [vmem:[#allocation2 + $0x1f8] sm:$0xff]
    %v1944 = vld [vmem:[%s2] sm:$0x1]
    %v1946 = vlaneseq
    %v1947 = vshrl.u32 %v1946, 7
    %v1948 = vsub.s32 0, %v1947
    %v1949 = vrot.slane %v1944, %v1948
    %v1951 = vadd.f32 %v1880, %v1949
    %v1952 = vadd.f32 %v1881, %v1949
    %v1953 = vadd.f32 %v1882, %v1949
    %v1954 = vadd.f32 %v1883, %v1949
    %v1955 = vadd.f32 %v1884, %v1949
    %v1956 = vadd.f32 %v1885, %v1949
    %v1957 = vadd.f32 %v1886, %v1949
    %v1958 = vadd.f32 %v1887, %v1949
    %v1959 = vadd.f32 %v1888, %v1949
    %v1960 = vadd.f32 %v1889, %v1949
    %v1961 = vadd.f32 %v1890, %v1949
    %v1962 = vadd.f32 %v1891, %v1949
    %v1963 = vadd.f32 %v1892, %v1949
    %v1964 = vadd.f32 %v1893, %v1949
    %v1965 = vadd.f32 %v1894, %v1949
    %v1966 = vadd.f32 %v1895, %v1949
    %v1967 = vadd.f32 %v1896, %v1949
    %v1968 = vadd.f32 %v1897, %v1949
    %v1969 = vadd.f32 %v1898, %v1949
    %v1970 = vadd.f32 %v1899, %v1949
    %v1971 = vadd.f32 %v1900, %v1949
    %v1972 = vadd.f32 %v1901, %v1949
    %v1973 = vadd.f32 %v1902, %v1949
    %v1974 = vadd.f32 %v1903, %v1949
    %v1975 = vadd.f32 %v1904, %v1949
    %v1976 = vadd.f32 %v1905, %v1949
    %v1977 = vadd.f32 %v1906, %v1949
    %v1978 = vadd.f32 %v1907, %v1949
    %v1979 = vadd.f32 %v1908, %v1949
    %v1980 = vadd.f32 %v1909, %v1949
    %v1981 = vadd.f32 %v1910, %v1949
    %v1982 = vadd.f32 %v1911, %v1949
    %v1983 = vadd.f32 %v1912, %v1949
    %v1984 = vadd.f32 %v1913, %v1949
    %v1985 = vadd.f32 %v1914, %v1949
    %v1986 = vadd.f32 %v1915, %v1949
    %v1987 = vadd.f32 %v1916, %v1949
    %v1988 = vadd.f32 %v1917, %v1949
    %v1989 = vadd.f32 %v1918, %v1949
    %v1990 = vadd.f32 %v1919, %v1949
    %v1991 = vadd.f32 %v1920, %v1949
    %v1992 = vadd.f32 %v1921, %v1949
    %v1993 = vadd.f32 %v1922, %v1949
    %v1994 = vadd.f32 %v1923, %v1949
    %v1995 = vadd.f32 %v1924, %v1949
    %v1996 = vadd.f32 %v1925, %v1949
    %v1997 = vadd.f32 %v1926, %v1949
    %v1998 = vadd.f32 %v1927, %v1949
    %v1999 = vadd.f32 %v1928, %v1949
    %v2000 = vadd.f32 %v1929, %v1949
    %v2001 = vadd.f32 %v1930, %v1949
    %v2002 = vadd.f32 %v1931, %v1949
    %v2003 = vadd.f32 %v1932, %v1949
    %v2004 = vadd.f32 %v1933, %v1949
    %v2005 = vadd.f32 %v1934, %v1949
    %v2006 = vadd.f32 %v1935, %v1949
    %v2007 = vadd.f32 %v1936, %v1949
    %v2008 = vadd.f32 %v1937, %v1949
    %v2009 = vadd.f32 %v1938, %v1949
    %v2010 = vadd.f32 %v1939, %v1949
    %v2011 = vadd.f32 %v1940, %v1949
    %v2012 = vadd.f32 %v1941, %v1949
    %v2013 = vadd.f32 %v1942, %v1949
    %v2014 = vadd.f32 %v1943, %v1949
    %v2015 = vmax.f32 %v1951, 0.0
    %v2016 = vmax.f32 %v1952, 0.0
    %v2017 = vmax.f32 %v1953, 0.0
    %v2018 = vmax.f32 %v1954, 0.0
    %v2019 = vmax.f32 %v1955, 0.0
    %v2020 = vmax.f32 %v1956, 0.0
    %v2021 = vmax.f32 %v1957, 0.0
    %v2022 = vmax.f32 %v1958, 0.0
    %v2023 = vmax.f32 %v1959, 0.0
    %v2024 = vmax.f32 %v1960, 0.0
    %v2025 = vmax.f32 %v1961, 0.0
    %v2026 = vmax.f32 %v1962, 0.0
    %v2027 = vmax.f32 %v1963, 0.0
    %v2028 = vmax.f32 %v1964, 0.0
    %v2029 = vmax.f32 %v1965, 0.0
    %v2030 = vmax.f32 %v1966, 0.0
    %v2031 = vmax.f32 %v1967, 0.0
    %v2032 = vmax.f32 %v1968, 0.0
    %v2033 = vmax.f32 %v1969, 0.0
    %v2034 = vmax.f32 %v1970, 0.0
    %v2035 = vmax.f32 %v1971, 0.0
    %v2036 = vmax.f32 %v1972, 0.0
    %v2037 = vmax.f32 %v1973, 0.0
    %v2038 = vmax.f32 %v1974, 0.0
    %v2039 = vmax.f32 %v1975, 0.0
    %v2040 = vmax.f32 %v1976, 0.0
    %v2041 = vmax.f32 %v1977, 0.0
    %v2042 = vmax.f32 %v1978, 0.0
    %v2043 = vmax.f32 %v1979, 0.0
    %v2044 = vmax.f32 %v1980, 0.0
    %v2045 = vmax.f32 %v1981, 0.0
    %v2046 = vmax.f32 %v1982, 0.0
    %v2047 = vmax.f32 %v1983, 0.0
    %v2048 = vmax.f32 %v1984, 0.0
    %v2049 = vmax.f32 %v1985, 0.0
    %v2050 = vmax.f32 %v1986, 0.0
    %v2051 = vmax.f32 %v1987, 0.0
    %v2052 = vmax.f32 %v1988, 0.0
    %v2053 = vmax.f32 %v1989, 0.0
    %v2054 = vmax.f32 %v1990, 0.0
    %v2055 = vmax.f32 %v1991, 0.0
    %v2056 = vmax.f32 %v1992, 0.0
    %v2057 = vmax.f32 %v1993, 0.0
    %v2058 = vmax.f32 %v1994, 0.0
    %v2059 = vmax.f32 %v1995, 0.0
    %v2060 = vmax.f32 %v1996, 0.0
    %v2061 = vmax.f32 %v1997, 0.0
    %v2062 = vmax.f32 %v1998, 0.0
    %v2063 = vmax.f32 %v1999, 0.0
    %v2064 = vmax.f32 %v2000, 0.0
    %v2065 = vmax.f32 %v2001, 0.0
    %v2066 = vmax.f32 %v2002, 0.0
    %v2067 = vmax.f32 %v2003, 0.0
    %v2068 = vmax.f32 %v2004, 0.0
    %v2069 = vmax.f32 %v2005, 0.0
    %v2070 = vmax.f32 %v2006, 0.0
    %v2071 = vmax.f32 %v2007, 0.0
    %v2072 = vmax.f32 %v2008, 0.0
    %v2073 = vmax.f32 %v2009, 0.0
    %v2074 = vmax.f32 %v2010, 0.0
    %v2075 = vmax.f32 %v2011, 0.0
    %v2076 = vmax.f32 %v2012, 0.0
    %v2077 = vmax.f32 %v2013, 0.0
    %v2078 = vmax.f32 %v2014, 0.0
    %v2079 = vpack.c.bf16 %v2016, %v2015
    %v2080 = vpack.c.bf16 %v2018, %v2017
    %v2081 = vpack.c.bf16 %v2020, %v2019
    %v2082 = vpack.c.bf16 %v2022, %v2021
    %v2083 = vpack.c.bf16 %v2024, %v2023
    %v2084 = vpack.c.bf16 %v2026, %v2025
    %v2085 = vpack.c.bf16 %v2028, %v2027
    %v2086 = vpack.c.bf16 %v2030, %v2029
    %v2087 = vpack.c.bf16 %v2032, %v2031
    %v2088 = vpack.c.bf16 %v2034, %v2033
    %v2089 = vpack.c.bf16 %v2036, %v2035
    %v2090 = vpack.c.bf16 %v2038, %v2037
    %v2091 = vpack.c.bf16 %v2040, %v2039
    %v2092 = vpack.c.bf16 %v2042, %v2041
    %v2093 = vpack.c.bf16 %v2044, %v2043
    %v2094 = vpack.c.bf16 %v2046, %v2045
    %v2095 = vpack.c.bf16 %v2048, %v2047
    %v2096 = vpack.c.bf16 %v2050, %v2049
    %v2097 = vpack.c.bf16 %v2052, %v2051
    %v2098 = vpack.c.bf16 %v2054, %v2053
    %v2099 = vpack.c.bf16 %v2056, %v2055
    %v2100 = vpack.c.bf16 %v2058, %v2057
    %v2101 = vpack.c.bf16 %v2060, %v2059
    %v2102 = vpack.c.bf16 %v2062, %v2061
    %v2103 = vpack.c.bf16 %v2064, %v2063
    %v2104 = vpack.c.bf16 %v2066, %v2065
    %v2105 = vpack.c.bf16 %v2068, %v2067
    %v2106 = vpack.c.bf16 %v2070, %v2069
    %v2107 = vpack.c.bf16 %v2072, %v2071
    %v2108 = vpack.c.bf16 %v2074, %v2073
    %v2109 = vpack.c.bf16 %v2076, %v2075
    %v2110 = vpack.c.bf16 %v2078, %v2077
    %v2143 = vunpack.c.l.b16 %v2079
    %v2144 = vunpack.c.h.b16 %v2079
    %v2145 = vunpack.c.l.b16 %v2080
    %v2146 = vunpack.c.h.b16 %v2080
    %v2147 = vunpack.c.l.b16 %v2081
    %v2148 = vunpack.c.h.b16 %v2081
    %v2149 = vunpack.c.l.b16 %v2082
    %v2150 = vunpack.c.h.b16 %v2082
    %v2151 = vunpack.c.l.b16 %v2083
    %v2152 = vunpack.c.h.b16 %v2083
    %v2153 = vunpack.c.l.b16 %v2084
    %v2154 = vunpack.c.h.b16 %v2084
    %v2155 = vunpack.c.l.b16 %v2085
    %v2156 = vunpack.c.h.b16 %v2085
    %v2157 = vunpack.c.l.b16 %v2086
    %v2158 = vunpack.c.h.b16 %v2086
    %v2159 = vunpack.c.l.b16 %v2087
    %v2160 = vunpack.c.h.b16 %v2087
    %v2161 = vunpack.c.l.b16 %v2088
    %v2162 = vunpack.c.h.b16 %v2088
    %v2163 = vunpack.c.l.b16 %v2089
    %v2164 = vunpack.c.h.b16 %v2089
    %v2165 = vunpack.c.l.b16 %v2090
    %v2166 = vunpack.c.h.b16 %v2090
    %v2167 = vunpack.c.l.b16 %v2091
    %v2168 = vunpack.c.h.b16 %v2091
    %v2169 = vunpack.c.l.b16 %v2092
    %v2170 = vunpack.c.h.b16 %v2092
    %v2171 = vunpack.c.l.b16 %v2093
    %v2172 = vunpack.c.h.b16 %v2093
    %v2173 = vunpack.c.l.b16 %v2094
    %v2174 = vunpack.c.h.b16 %v2094
    %v2175 = vunpack.c.l.b16 %v2095
    %v2176 = vunpack.c.h.b16 %v2095
    %v2177 = vunpack.c.l.b16 %v2096
    %v2178 = vunpack.c.h.b16 %v2096
    %v2179 = vunpack.c.l.b16 %v2097
    %v2180 = vunpack.c.h.b16 %v2097
    %v2181 = vunpack.c.l.b16 %v2098
    %v2182 = vunpack.c.h.b16 %v2098
    %v2183 = vunpack.c.l.b16 %v2099
    %v2184 = vunpack.c.h.b16 %v2099
    %v2185 = vunpack.c.l.b16 %v2100
    %v2186 = vunpack.c.h.b16 %v2100
    %v2187 = vunpack.c.l.b16 %v2101
    %v2188 = vunpack.c.h.b16 %v2101
    %v2189 = vunpack.c.l.b16 %v2102
    %v2190 = vunpack.c.h.b16 %v2102
    %v2191 = vunpack.c.l.b16 %v2103
    %v2192 = vunpack.c.h.b16 %v2103
    %v2193 = vunpack.c.l.b16 %v2104
    %v2194 = vunpack.c.h.b16 %v2104
    %v2195 = vunpack.c.l.b16 %v2105
    %v2196 = vunpack.c.h.b16 %v2105
    %v2197 = vunpack.c.l.b16 %v2106
    %v2198 = vunpack.c.h.b16 %v2106
    %v2199 = vunpack.c.l.b16 %v2107
    %v2200 = vunpack.c.h.b16 %v2107
    %v2201 = vunpack.c.l.b16 %v2108
    %v2202 = vunpack.c.h.b16 %v2108
    %v2203 = vunpack.c.l.b16 %v2109
    %v2204 = vunpack.c.h.b16 %v2109
    %v2205 = vunpack.c.l.b16 %v2110
    %v2206 = vunpack.c.h.b16 %v2110
    %v2207 = vpack.c.b16 %v2143, %v2143
    %v2208 = vpack.c.b16 %v2144, %v2144
    %v2209 = vpack.c.b16 %v2145, %v2145
    %v2210 = vpack.c.b16 %v2146, %v2146
    %v2211 = vpack.c.b16 %v2147, %v2147
    %v2212 = vpack.c.b16 %v2148, %v2148
    %v2213 = vpack.c.b16 %v2149, %v2149
    %v2214 = vpack.c.b16 %v2150, %v2150
    %v2215 = vpack.c.b16 %v2151, %v2151
    %v2216 = vpack.c.b16 %v2152, %v2152
    %v2217 = vpack.c.b16 %v2153, %v2153
    %v2218 = vpack.c.b16 %v2154, %v2154
    %v2219 = vpack.c.b16 %v2155, %v2155
    %v2220 = vpack.c.b16 %v2156, %v2156
    %v2221 = vpack.c.b16 %v2157, %v2157
    %v2222 = vpack.c.b16 %v2158, %v2158
    %v2223 = vpack.c.b16 %v2159, %v2159
    %v2224 = vpack.c.b16 %v2160, %v2160
    %v2225 = vpack.c.b16 %v2161, %v2161
    %v2226 = vpack.c.b16 %v2162, %v2162
    %v2227 = vpack.c.b16 %v2163, %v2163
    %v2228 = vpack.c.b16 %v2164, %v2164
    %v2229 = vpack.c.b16 %v2165, %v2165
    %v2230 = vpack.c.b16 %v2166, %v2166
    %v2231 = vpack.c.b16 %v2167, %v2167
    %v2232 = vpack.c.b16 %v2168, %v2168
    %v2233 = vpack.c.b16 %v2169, %v2169
    %v2234 = vpack.c.b16 %v2170, %v2170
    %v2235 = vpack.c.b16 %v2171, %v2171
    %v2236 = vpack.c.b16 %v2172, %v2172
    %v2237 = vpack.c.b16 %v2173, %v2173
    %v2238 = vpack.c.b16 %v2174, %v2174
    %v2239 = vpack.c.b16 %v2175, %v2175
    %v2240 = vpack.c.b16 %v2176, %v2176
    %v2241 = vpack.c.b16 %v2177, %v2177
    %v2242 = vpack.c.b16 %v2178, %v2178
    %v2243 = vpack.c.b16 %v2179, %v2179
    %v2244 = vpack.c.b16 %v2180, %v2180
    %v2245 = vpack.c.b16 %v2181, %v2181
    %v2246 = vpack.c.b16 %v2182, %v2182
    %v2247 = vpack.c.b16 %v2183, %v2183
    %v2248 = vpack.c.b16 %v2184, %v2184
    %v2249 = vpack.c.b16 %v2185, %v2185
    %v2250 = vpack.c.b16 %v2186, %v2186
    %v2251 = vpack.c.b16 %v2187, %v2187
    %v2252 = vpack.c.b16 %v2188, %v2188
    %v2253 = vpack.c.b16 %v2189, %v2189
    %v2254 = vpack.c.b16 %v2190, %v2190
    %v2255 = vpack.c.b16 %v2191, %v2191
    %v2256 = vpack.c.b16 %v2192, %v2192
    %v2257 = vpack.c.b16 %v2193, %v2193
    %v2258 = vpack.c.b16 %v2194, %v2194
    %v2259 = vpack.c.b16 %v2195, %v2195
    %v2260 = vpack.c.b16 %v2196, %v2196
    %v2261 = vpack.c.b16 %v2197, %v2197
    %v2262 = vpack.c.b16 %v2198, %v2198
    %v2263 = vpack.c.b16 %v2199, %v2199
    %v2264 = vpack.c.b16 %v2200, %v2200
    %v2265 = vpack.c.b16 %v2201, %v2201
    %v2266 = vpack.c.b16 %v2202, %v2202
    %v2267 = vpack.c.b16 %v2203, %v2203
    %v2268 = vpack.c.b16 %v2204, %v2204
    %v2269 = vpack.c.b16 %v2205, %v2205
    %v2270 = vpack.c.b16 %v2206, %v2206
    %2335 = vst [vmem:[%s3] sm:$0xf] %v2207
    %2336 = vst [vmem:[%s3 + $0x4] sm:$0xf] %v2208
    %2337 = vst [vmem:[%s3 + $0x8] sm:$0xf] %v2209
    %2338 = vst [vmem:[%s3 + $0xc] sm:$0xf] %v2210
    %2339 = vst [vmem:[%s3 + $0x10] sm:$0xf] %v2211
    %2340 = vst [vmem:[%s3 + $0x14] sm:$0xf] %v2212
    %2341 = vst [vmem:[%s3 + $0x18] sm:$0xf] %v2213
    %2342 = vst [vmem:[%s3 + $0x1c] sm:$0xf] %v2214
    %2343 = vst [vmem:[%s3 + $0x20] sm:$0xf] %v2215
    %2344 = vst [vmem:[%s3 + $0x24] sm:$0xf] %v2216
    %2345 = vst [vmem:[%s3 + $0x28] sm:$0xf] %v2217
    %2346 = vst [vmem:[%s3 + $0x2c] sm:$0xf] %v2218
    %2347 = vst [vmem:[%s3 + $0x30] sm:$0xf] %v2219
    %2348 = vst [vmem:[%s3 + $0x34] sm:$0xf] %v2220
    %2349 = vst [vmem:[%s3 + $0x38] sm:$0xf] %v2221
    %2350 = vst [vmem:[%s3 + $0x3c] sm:$0xf] %v2222
    %2351 = vst [vmem:[%s3 + $0x40] sm:$0xf] %v2223
    %2352 = vst [vmem:[%s3 + $0x44] sm:$0xf] %v2224
    %2353 = vst [vmem:[%s3 + $0x48] sm:$0xf] %v2225
    %2354 = vst [vmem:[%s3 + $0x4c] sm:$0xf] %v2226
    %2355 = vst [vmem:[%s3 + $0x50] sm:$0xf] %v2227
    %2356 = vst [vmem:[%s3 + $0x54] sm:$0xf] %v2228
    %2357 = vst [vmem:[%s3 + $0x58] sm:$0xf] %v2229
    %2358 = vst [vmem:[%s3 + $0x5c] sm:$0xf] %v2230
    %2359 = vst [vmem:[%s3 + $0x60] sm:$0xf] %v2231
    %2360 = vst [vmem:[%s3 + $0x64] sm:$0xf] %v2232
    %2361 = vst [vmem:[%s3 + $0x68] sm:$0xf] %v2233
    %2362 = vst [vmem:[%s3 + $0x6c] sm:$0xf] %v2234
    %2363 = vst [vmem:[%s3 + $0x70] sm:$0xf] %v2235
    %2364 = vst [vmem:[%s3 + $0x74] sm:$0xf] %v2236
    %2365 = vst [vmem:[%s3 + $0x78] sm:$0xf] %v2237
    %2366 = vst [vmem:[%s3 + $0x7c] sm:$0xf] %v2238
    %2367 = vst [vmem:[%s3 + $0x80] sm:$0xf] %v2239
    %2368 = vst [vmem:[%s3 + $0x84] sm:$0xf] %v2240
    %2369 = vst [vmem:[%s3 + $0x88] sm:$0xf] %v2241
    %2370 = vst [vmem:[%s3 + $0x8c] sm:$0xf] %v2242
    %2371 = vst [vmem:[%s3 + $0x90] sm:$0xf] %v2243
    %2372 = vst [vmem:[%s3 + $0x94] sm:$0xf] %v2244
    %2373 = vst [vmem:[%s3 + $0x98] sm:$0xf] %v2245
    %2374 = vst [vmem:[%s3 + $0x9c] sm:$0xf] %v2246
    %2375 = vst [vmem:[%s3 + $0xa0] sm:$0xf] %v2247
    %2376 = vst [vmem:[%s3 + $0xa4] sm:$0xf] %v2248
    %2377 = vst [vmem:[%s3 + $0xa8] sm:$0xf] %v2249
    %2378 = vst [vmem:[%s3 + $0xac] sm:$0xf] %v2250
    %2379 = vst [vmem:[%s3 + $0xb0] sm:$0xf] %v2251
    %2380 = vst [vmem:[%s3 + $0xb4] sm:$0xf] %v2252
    %2381 = vst [vmem:[%s3 + $0xb8] sm:$0xf] %v2253
    %2382 = vst [vmem:[%s3 + $0xbc] sm:$0xf] %v2254
    %2383 = vst [vmem:[%s3 + $0xc0] sm:$0xf] %v2255
    %2384 = vst [vmem:[%s3 + $0xc4] sm:$0xf] %v2256
    %2385 = vst [vmem:[%s3 + $0xc8] sm:$0xf] %v2257
    %2386 = vst [vmem:[%s3 + $0xcc] sm:$0xf] %v2258
    %2387 = vst [vmem:[%s3 + $0xd0] sm:$0xf] %v2259
    %2388 = vst [vmem:[%s3 + $0xd4] sm:$0xf] %v2260
    %2389 = vst [vmem:[%s3 + $0xd8] sm:$0xf] %v2261
    %2390 = vst [vmem:[%s3 + $0xdc] sm:$0xf] %v2262
    %2391 = vst [vmem:[%s3 + $0xe0] sm:$0xf] %v2263
    %2392 = vst [vmem:[%s3 + $0xe4] sm:$0xf] %v2264
    %2393 = vst [vmem:[%s3 + $0xe8] sm:$0xf] %v2265
    %2394 = vst [vmem:[%s3 + $0xec] sm:$0xf] %v2266
    %2395 = vst [vmem:[%s3 + $0xf0] sm:$0xf] %v2267
    %2396 = vst [vmem:[%s3 + $0xf4] sm:$0xf] %v2268
    %2397 = vst [vmem:[%s3 + $0xf8] sm:$0xf] %v2269
    %2398 = vst [vmem:[%s3 + $0xfc] sm:$0xf] %v2270
  $region21: #{encoder_forward.5} parent=0 // pred_fallthru
    _
  // Predicated region
  $region22: #{encoder_forward.5} parent=0 // pred_check
    _
  $region23: #{encoder_forward.5} parent=0 // pred_check_branch
    %2400 = sbr.rel (0) target = $region25
  $region24: #{encoder_forward.5} parent=0 // pred_region
    _
  $region25: #{encoder_forward.5} parent=0 // pred_fallthru
    _
  // Predicated region
  $region26: #{encoder_forward.5} parent=0 // pred_check
    _
  $region27: #{encoder_forward.5} parent=0 // pred_check_branch
    %2402 = sbr.rel (0) target = $region29
  $region28: #{encoder_forward.5} parent=0 // pred_region
    _
  $region29: #{encoder_forward.5} parent=0 // pred_fallthru
    _

</llo_original>
